<compile_context>
chip_gen: v5e
topology: v5e:2x2
jax: 0.10.0
libtpu: 0.0.40
codegen_flags: <defaults>
</compile_context>

<pallas_src>
import functools
import inspect

import jax
import jax.numpy as jnp
from jax import lax
from jax.experimental import pallas as pl
from jax.experimental.pallas import tpu as pltpu

EPS = 0.8   # nn.BatchNorm2d(features, 0.8) -> eps = 0.8


# ---------------------------------------------------------------------------
# Generation-dependent configuration
# ---------------------------------------------------------------------------
@functools.lru_cache(maxsize=None)
def _cfg():
    """Pick VMEM budget / row-tile cap / megacore split from the chip."""
    vmem_bytes = 128 * 1024 * 1024
    try:
        info = pltpu.get_tpu_info()
        vmem_bytes = int(getattr(info, "vmem_capacity_bytes", vmem_bytes))
    except Exception:
        pass
    if vmem_bytes >= 96 * 1024 * 1024:
        # v5e / v6e: single TensorCore, 128 MiB VMEM -> big tiles, one grid step
        return {"vmem_limit": 96 * 1024 * 1024, "tm_cap": 1024, "split_rows": False}
    # v7x: 64 MiB per TensorCore, 2 cores -> keep per-call budget tight and
    # make sure the 'parallel' row axis has >= 2 tiles to shard across cores.
    return {"vmem_limit": 28 * 1024 * 1024, "tm_cap": 512, "split_rows": True}


def _pick_tm(m, cfg):
    """Row-tile size for (M, C) matmul kernels."""
    cap = cfg["tm_cap"]
    if m <= 32:
        return m                       # one full-dim row block (always legal)
    if m <= cap:
        if cfg["split_rows"]:
            half = -(-m // 2)
            half = -(-half // 32) * 32  # keep bf16-friendly sublane multiples
            if half < m:
                return half             # two tiles -> both v7x TensorCores
        return m                        # v5e/v6e: single full-M tile
    return cap


_HAS_PIPELINE_MODE = (
    hasattr(pl, "Buffered")
    and "pipeline_mode" in inspect.signature(pl.BlockSpec).parameters)


def _invariant(shape, imap):
    """BlockSpec for a grid-invariant operand: single-buffer it (saves VMEM)."""
    if _HAS_PIPELINE_MODE:
        return pl.BlockSpec(shape, imap, pipeline_mode=pl.Buffered(1))
    return pl.BlockSpec(shape, imap)


# ---------------------------------------------------------------------------
# Pallas kernels
# ---------------------------------------------------------------------------
def _mm_stats_kernel(x_ref, w_ref, y_ref, s_ref, ss_ref, *, rows_in_last, tm):
    """y = x @ w (bf16 MXU, f32 acc); y stored bf16 + per-tile BN stat partials."""
    y = jnp.dot(x_ref[...], w_ref[...], preferred_element_type=jnp.float32)
    y_ref[...] = y.astype(y_ref.dtype)
    if rows_in_last is not None:
        # Ragged last tile: zero garbage rows so they do not pollute the stats.
        limit = jnp.where(pl.program_id(0) == pl.num_programs(0) - 1,
                          rows_in_last, tm)
        rows = lax.broadcasted_iota(jnp.int32, y.shape, 0)
        y = jnp.where(rows < limit, y, 0.0)
    n = y.shape[-1]
    s_ref[...] = jnp.sum(y, axis=0).reshape(1, 1, n)
    ss_ref[...] = jnp.sum(y * y, axis=0).reshape(1, 1, n)


def _bn_relu_mm_stats_kernel(y_ref, scale_ref, shift_ref, w_ref,
                             o_ref, s_ref, ss_ref, *, rows_in_last, tm):
    """z = relu(y*scale+shift) @ w ; BN/ReLU prologue in f32, bf16 MXU, stats."""
    a = jnp.maximum(
        y_ref[...].astype(jnp.float32) * scale_ref[...] + shift_ref[...], 0.0)
    z = jnp.dot(a.astype(jnp.bfloat16), w_ref[...],
                preferred_element_type=jnp.float32)
    o_ref[...] = z.astype(o_ref.dtype)
    if rows_in_last is not None:
        limit = jnp.where(pl.program_id(0) == pl.num_programs(0) - 1,
                          rows_in_last, tm)
        rows = lax.broadcasted_iota(jnp.int32, z.shape, 0)
        z = jnp.where(rows < limit, z, 0.0)
    n = z.shape[-1]
    s_ref[...] = jnp.sum(z, axis=0).reshape(1, 1, n)
    ss_ref[...] = jnp.sum(z * z, axis=0).reshape(1, 1, n)


def _conv3x3_bn_relu_stats_kernel(y1_ref, scale_ref, shift_ref, w2_ref,
                                  y2_ref, s_ref, ss_ref, *, H, W, C):
    """Fused per-image: relu(bn1(y1)) -> 3x3 conv (stride 1, pad 1) + BN2 stats.

    The 9 taps are accumulated in-kernel from a padded VMEM copy of the image,
    so the activation never hits HBM at 9x size.
    """
    x = y1_ref[0].astype(jnp.float32)                        # (H, W, C)
    a = jnp.maximum(x * scale_ref[...] + shift_ref[...], 0.0).astype(jnp.bfloat16)

    zrow = jnp.zeros((1, W, C), jnp.bfloat16)
    ap = jnp.concatenate([zrow, a, zrow], axis=0)            # (H+2, W, C)
    zcol = jnp.zeros((H + 2, 1, C), jnp.bfloat16)
    ap = jnp.concatenate([zcol, ap, zcol], axis=1)           # (H+2, W+2, C)

    acc = jnp.zeros((H * W, C), jnp.float32)
    for t in range(9):                                       # static unroll
        ky, kx = divmod(t, 3)
        patch = ap[ky:ky + H, kx:kx + W, :].reshape(H * W, C)
        acc = acc + jnp.dot(patch, w2_ref[t],
                            preferred_element_type=jnp.float32)

    y2_ref[0] = acc.reshape(H, W, C).astype(y2_ref.dtype)
    s_ref[...] = jnp.sum(acc, axis=0).reshape(1, 1, C)
    ss_ref[...] = jnp.sum(acc * acc, axis=0).reshape(1, 1, C)


def _skip_bn_add_relu_kernel(xd_ref, wd_ref, bd_ref, y3_ref,
                             scale_ref, shift_ref, o_ref):
    """Skip-path 1x1 conv (+bias) fused with BN3-apply, residual add, ReLU."""
    skip = jnp.dot(xd_ref[...], wd_ref[...],
                   preferred_element_type=jnp.float32) + bd_ref[...]
    o_ref[...] = jnp.maximum(
        skip + y3_ref[...].astype(jnp.float32) * scale_ref[...] + shift_ref[...],
        0.0)


# ---------------------------------------------------------------------------
# Pallas wrappers
# ---------------------------------------------------------------------------
def _matmul_stats(x, w, cfg):
    """y = x @ w (bf16 out) plus per-channel sum / sumsq of y (f32)."""
    m, k = x.shape
    n = w.shape[1]
    tm = _pick_tm(m, cfg)
    gm = pl.cdiv(m, tm)
    rows_in_last = None if m % tm == 0 else (m - (gm - 1) * tm)
    kern = functools.partial(_mm_stats_kernel, rows_in_last=rows_in_last, tm=tm)
    y, s, ss = pl.pallas_call(
        kern,
        out_shape=(jax.ShapeDtypeStruct((m, n), jnp.bfloat16),
                   jax.ShapeDtypeStruct((gm, 1, n), jnp.float32),
                   jax.ShapeDtypeStruct((gm, 1, n), jnp.float32)),
        grid=(gm,),
        in_specs=[pl.BlockSpec((tm, k), lambda i: (i, 0)),
                  _invariant((k, n), lambda i: (0, 0))],
        out_specs=(pl.BlockSpec((tm, n), lambda i: (i, 0)),
                   pl.BlockSpec((1, 1, n), lambda i: (i, 0, 0)),
                   pl.BlockSpec((1, 1, n), lambda i: (i, 0, 0))),
        compiler_params=pltpu.CompilerParams(
            dimension_semantics=("parallel",),
            vmem_limit_bytes=cfg["vmem_limit"]),
        cost_estimate=pl.CostEstimate(
            flops=2 * m * k * n, transcendentals=0,
            bytes_accessed=2 * m * k + 2 * k * n + 2 * m * n),
    )(x, w)
    return y, jnp.sum(s, axis=(0, 1)), jnp.sum(ss, axis=(0, 1))


def _bn_relu_matmul_stats(y_in, scale, shift, w, cfg):
    """z = relu(y*scale+shift) @ w (bf16 out) plus per-channel sum / sumsq."""
    m, k = y_in.shape
    n = w.shape[1]
    tm = _pick_tm(m, cfg)
    gm = pl.cdiv(m, tm)
    rows_in_last = None if m % tm == 0 else (m - (gm - 1) * tm)
    kern = functools.partial(_bn_relu_mm_stats_kernel,
                             rows_in_last=rows_in_last, tm=tm)
    z, s, ss = pl.pallas_call(
        kern,
        out_shape=(jax.ShapeDtypeStruct((m, n), jnp.bfloat16),
                   jax.ShapeDtypeStruct((gm, 1, n), jnp.float32),
                   jax.ShapeDtypeStruct((gm, 1, n), jnp.float32)),
        grid=(gm,),
        in_specs=[pl.BlockSpec((tm, k), lambda i: (i, 0)),
                  _invariant((1, k), lambda i: (0, 0)),
                  _invariant((1, k), lambda i: (0, 0)),
                  _invariant((k, n), lambda i: (0, 0))],
        out_specs=(pl.BlockSpec((tm, n), lambda i: (i, 0)),
                   pl.BlockSpec((1, 1, n), lambda i: (i, 0, 0)),
                   pl.BlockSpec((1, 1, n), lambda i: (i, 0, 0))),
        compiler_params=pltpu.CompilerParams(
            dimension_semantics=("parallel",),
            vmem_limit_bytes=cfg["vmem_limit"]),
        cost_estimate=pl.CostEstimate(
            flops=2 * m * k * n + 3 * m * k, transcendentals=0,
            bytes_accessed=2 * m * k + 2 * k * n + 2 * m * n),
    )(y_in, scale, shift, w)
    return z, jnp.sum(s, axis=(0, 1)), jnp.sum(ss, axis=(0, 1))


def _conv3x3_bn_relu_stats(y1_img, scale1, shift1, w2_taps, cfg):
    """Fused BN1-apply + ReLU + 3x3 conv (stride 1) per image + BN2 stats."""
    n_img, H, W, C = y1_img.shape
    # TODO(synk): for very large feature maps, add an H-tiling grid axis with
    # halo rows instead of whole-image blocks (whole images fit comfortably in
    # VMEM for ResNet-sized inputs).
    kern = functools.partial(_conv3x3_bn_relu_stats_kernel, H=H, W=W, C=C)
    y2, s, ss = pl.pallas_call(
        kern,
        out_shape=(jax.ShapeDtypeStruct((n_img, H, W, C), jnp.bfloat16),
                   jax.ShapeDtypeStruct((n_img, 1, C), jnp.float32),
                   jax.ShapeDtypeStruct((n_img, 1, C), jnp.float32)),
        grid=(n_img,),
        in_specs=[pl.BlockSpec((1, H, W, C), lambda i: (i, 0, 0, 0)),
                  _invariant((1, C), lambda i: (0, 0)),
                  _invariant((1, C), lambda i: (0, 0)),
                  _invariant((9, C, C), lambda i: (0, 0, 0))],
        out_specs=(pl.BlockSpec((1, H, W, C), lambda i: (i, 0, 0, 0)),
                   pl.BlockSpec((1, 1, C), lambda i: (i, 0, 0)),
                   pl.BlockSpec((1, 1, C), lambda i: (i, 0, 0))),
        compiler_params=pltpu.CompilerParams(
            dimension_semantics=("parallel",),
            vmem_limit_bytes=cfg["vmem_limit"]),
        cost_estimate=pl.CostEstimate(
            flops=2 * n_img * H * W * 9 * C * C + 3 * n_img * H * W * C,
            transcendentals=0,
            bytes_accessed=4 * n_img * H * W * C + 2 * 9 * C * C),
    )(y1_img, scale1, shift1, w2_taps)
    return y2, jnp.sum(s, axis=(0, 1)), jnp.sum(ss, axis=(0, 1))


def _skip_bn_add_relu(xd, wd, bd, y3, scale3, shift3, cfg):
    """relu(xd @ wd + bd + y3*scale3 + shift3) — skip conv fused with epilogue."""
    m, k = xd.shape
    n = wd.shape[1]
    tm = _pick_tm(m, cfg)
    gm = pl.cdiv(m, tm)
    out = pl.pallas_call(
        _skip_bn_add_relu_kernel,
        out_shape=jax.ShapeDtypeStruct((m, n), jnp.float32),
        grid=(gm,),
        in_specs=[pl.BlockSpec((tm, k), lambda i: (i, 0)),
                  _invariant((k, n), lambda i: (0, 0)),
                  _invariant((1, n), lambda i: (0, 0)),
                  pl.BlockSpec((tm, n), lambda i: (i, 0)),
                  _invariant((1, n), lambda i: (0, 0)),
                  _invariant((1, n), lambda i: (0, 0))],
        out_specs=pl.BlockSpec((tm, n), lambda i: (i, 0)),
        compiler_params=pltpu.CompilerParams(
            dimension_semantics=("parallel",),
            vmem_limit_bytes=cfg["vmem_limit"]),
        cost_estimate=pl.CostEstimate(
            flops=2 * m * k * n + 5 * m * n, transcendentals=0,
            bytes_accessed=2 * m * k + 2 * k * n + 2 * m * n + 4 * m * n),
    )(xd, wd, bd, y3, scale3, shift3)
    return out


# ---------------------------------------------------------------------------
# Tiny glue: fold training-mode BN (biased variance) into a per-channel affine
# ---------------------------------------------------------------------------
def _bn_affine(ssum, ssq, count, gamma, beta):
    mean = ssum / count
    var = ssq / count - mean * mean
    scale = gamma * lax.rsqrt(var + EPS)
    shift = beta - mean * scale
    return (scale.reshape(1, -1).astype(jnp.float32),
            shift.reshape(1, -1).astype(jnp.float32))


# ---------------------------------------------------------------------------
# BottleNeck forward
# ---------------------------------------------------------------------------
def bottleneck_forward(x_nchw, params, stride):
    cfg = _cfg()
    n, cin, h, w = x_nchw.shape
    cb = params["w1"].shape[1]
    cout = params["w3"].shape[1]

    # NHWC + single bf16 cast (fused with the transpose by XLA).
    x = jnp.transpose(x_nchw, (0, 2, 3, 1)).astype(jnp.bfloat16)
    m1 = n * h * w
    x_flat = x.reshape(m1, cin)

    # bf16 weight copies for the MXU (f32 accumulation stays in-kernel)
    w1b = params["w1"].astype(jnp.bfloat16)
    w2t = params["w2"].reshape(9, cb, cb).astype(jnp.bfloat16)    # tap-major HWIO
    w3b = params["w3"].astype(jnp.bfloat16)
    wdb = params["wd"].astype(jnp.bfloat16)
    bd = params["bd"].reshape(1, cout).astype(jnp.float32)

    # --- K1: conv1 (1x1, no bias) + BN1 batch-stat partials ---
    y1, s1, ss1 = _matmul_stats(x_flat, w1b, cfg)
    scale1, shift1 = _bn_affine(s1, ss1, m1, params["g1"], params["b1"])

    if stride == 1:
        ho, wo = h, w
        m2 = m1
        # --- K2: BN1-apply + ReLU + in-kernel 9-tap 3x3 conv + BN2 stats ---
        y2, s2, ss2 = _conv3x3_bn_relu_stats(
            y1.reshape(n, h, w, cb), scale1, shift1, w2t, cfg)
        y2 = y2.reshape(m2, cb)
    else:
        # TODO(synk): stride-2 conv2 still uses a bf16 XLA im2col (blob is only
        # ~9/4 of the activation at stride 2); move the strided tap gather
        # in-kernel so it disappears entirely.
        ho = (h + 2 - 3) // stride + 1
        wo = (w + 2 - 3) // stride + 1
        m2 = n * ho * wo
        a1 = jnp.maximum(y1.astype(jnp.float32) * scale1 + shift1, 0.0)
        a1 = a1.astype(jnp.bfloat16).reshape(n, h, w, cb)
        a1p = jnp.pad(a1, ((0, 0), (1, 1), (1, 1), (0, 0)))
        patches = [a1p[:, ky:ky + stride * (ho - 1) + 1:stride,
                          kx:kx + stride * (wo - 1) + 1:stride, :]
                   for ky in range(3) for kx in range(3)]
        x2 = jnp.concatenate(patches, axis=-1).reshape(m2, 9 * cb)
        w2b = params["w2"].reshape(9 * cb, cb).astype(jnp.bfloat16)
        y2, s2, ss2 = _matmul_stats(x2, w2b, cfg)
    scale2, shift2 = _bn_affine(s2, ss2, m2, params["g2"], params["b2"])

    # --- K3: BN2-apply + ReLU + conv3 (1x1) + BN3 stats, fused ---
    y3, s3, ss3 = _bn_relu_matmul_stats(y2, scale2, shift2, w3b, cfg)
    scale3, shift3 = _bn_affine(s3, ss3, m2, params["g3"], params["b3"])

    # --- K4: skip conv (1x1, stride, bias) + BN3-apply + add + ReLU, fused ---
    xd = (x[:, ::stride, ::stride, :] if stride > 1 else x).reshape(m2, cin)
    out = _skip_bn_add_relu(xd, wdb, bd, y3, scale3, shift3, cfg)

    return jnp.transpose(out.reshape(n, ho, wo, cout), (0, 3, 1, 2))   # NCHW


# ---------------------------------------------------------------------------
# Pure-JAX reference (verification only, full f32 precision)
# ---------------------------------------------------------------------------
def reference_forward(x_nchw, params, stride):
    hp = jax.lax.Precision.HIGHEST

    def bn(y, g, b):
        mean = y.mean(axis=(0, 1, 2), keepdims=True)
        var = ((y - mean) ** 2).mean(axis=(0, 1, 2), keepdims=True)
        return (y - mean) * lax.rsqrt(var + EPS) * g + b

    x = jnp.transpose(x_nchw, (0, 2, 3, 1)).astype(jnp.float32)
    dn = ("NHWC", "HWIO", "NHWC")
    cin = x.shape[-1]
    cb = params["w1"].shape[1]
    cout = params["w3"].shape[1]

    y = jax.lax.conv_general_dilated(
        x, params["w1"].reshape(1, 1, cin, cb), (1, 1), "VALID",
        dimension_numbers=dn, precision=hp)
    y = jax.nn.relu(bn(y, params["g1"], params["b1"]))
    y = jax.lax.conv_general_dilated(
        y, params["w2"], (stride, stride), ((1, 1), (1, 1)),
        dimension_numbers=dn, precision=hp)
    y = jax.nn.relu(bn(y, params["g2"], params["b2"]))
    y = jax.lax.conv_general_dilated(
        y, params["w3"].reshape(1, 1, cb, cout), (1, 1), "VALID",
        dimension_numbers=dn, precision=hp)
    y = bn(y, params["g3"], params["b3"])

    xd = jax.lax.conv_general_dilated(
        x, params["wd"].reshape(1, 1, cin, cout), (stride, stride), "VALID",
        dimension_numbers=dn, precision=hp)
    xd = xd + params["bd"]
    out = jax.nn.relu(xd + y)
    return jnp.transpose(out, (0, 3, 1, 2))


# ---------------------------------------------------------------------------
# Deterministic parameter init (synthetic — shapes from BottleNeck.__init__)
# ---------------------------------------------------------------------------
def init_params(key, in_features, out_features):
    cb = out_features // 4
    ks = jax.random.split(key, 11)

    def nrm(k, shape, scale=0.1):
        return (scale * jax.random.normal(k, shape)).astype(jnp.float32)

    return {
        "w1": nrm(ks[0], (in_features, cb)),            # conv1 1x1 (IO)
        "g1": 1.0 + nrm(ks[1], (cb,)), "b1": nrm(ks[2], (cb,)),
        "w2": nrm(ks[3], (3, 3, cb, cb)),               # conv2 3x3 (HWIO)
        "g2": 1.0 + nrm(ks[4], (cb,)), "b2": nrm(ks[5], (cb,)),
        "w3": nrm(ks[6], (cb, out_features)),           # conv3 1x1 (IO)
        "g3": 1.0 + nrm(ks[7], (out_features,)), "b3": nrm(ks[8], (out_features,)),
        "wd": nrm(ks[9], (in_features, out_features)),  # downsample 1x1 (IO)
        "bd": nrm(ks[10], (out_features,)),             # downsample bias
    }


if __name__ == "__main__":
    key = jax.random.PRNGKey(0)
    k_x, k_p = jax.random.split(key)

    N, Cin, H, W = 2, 4, 16, 16
    Cout = 16   # block_features = Cout // 4 = 4
    x = jax.random.normal(k_x, (N, Cin, H, W), dtype=jnp.float32)
    params = init_params(k_p, Cin, Cout)

    fwd = jax.jit(bottleneck_forward, static_argnums=2)
    ref_fwd = jax.jit(reference_forward, static_argnums=2)

    for stride in (1, 2):
        out = jax.block_until_ready(fwd(x, params, stride))
        ref = jax.block_until_ready(ref_fwd(x, params, stride))
        assert out.shape == ref.shape, (out.shape, ref.shape)
        # bf16 MXU operands / bf16 inter-stage activations with f32 accumulation
        # vs f32 HIGHEST reference; eps=0.8 keeps BN well conditioned.
        assert jnp.allclose(out, ref, atol=1e-2, rtol=1e-2), (
            float(jnp.max(jnp.abs(out - ref))))

    print("KERNEL_OK")
</pallas_src>

<mosaic_0001>
module attributes {stable_mosaic.version = 11 : i64} {
  func.func @_mm_stats_kernel(%arg0: i32, %arg1: memref<512x4xbf16, #tpu.memory_space<vmem>>, %arg2: memref<4x4xbf16, #tpu.memory_space<vmem>>, %arg3: memref<512x4xbf16, #tpu.memory_space<vmem>>, %arg4: memref<1x1x4xf32, #tpu.memory_space<vmem>>, %arg5: memref<1x1x4xf32, #tpu.memory_space<vmem>>) attributes {dimension_semantics = [#tpu.dimension_semantics<parallel>], iteration_bounds = array<i64: 1>, scalar_prefetch = 0 : i64, scratch_operands = 0 : i64, tpu.core_type = #tpu.core_type<tc>, window_params = [{transform_indices = @transform_0, window_bounds = array<i64: 512, 4>}, {pipeline_mode = #tpu.pipeline_mode<synchronous>, transform_indices = @transform_1, window_bounds = array<i64: 4, 4>}, {transform_indices = @transform_2, window_bounds = array<i64: 512, 4>}, {transform_indices = @transform_3, window_bounds = array<i64: 1, 1, 4>}, {transform_indices = @transform_4, window_bounds = array<i64: 1, 1, 4>}]} {
    %c0 = arith.constant 0 : index
    %c0_0 = arith.constant 0 : index
    %0 = vector.load %arg1[%c0, %c0_0] : memref<512x4xbf16, #tpu.memory_space<vmem>>, vector<512x4xbf16>
    %c0_1 = arith.constant 0 : index
    %c0_2 = arith.constant 0 : index
    %1 = vector.load %arg2[%c0_1, %c0_2] : memref<4x4xbf16, #tpu.memory_space<vmem>>, vector<4x4xbf16>
    %cst = arith.constant dense<0.000000e+00> : vector<512x4xf32>
    %2 = tpu.matmul %0, %1, %cst {dimension_numbers = #tpu.dot_dimension_numbers<[1], [0], [0], [1], [0, 0, 1, 1], [], []>} : vector<512x4xbf16>, vector<4x4xbf16>, vector<512x4xf32> -> vector<512x4xf32>
    %3 = arith.truncf %2 : vector<512x4xf32> to vector<512x4xbf16>
    %c0_3 = arith.constant 0 : index
    %c0_4 = arith.constant 0 : index
    %4 = vector.load %arg3[%c0_3, %c0_4] : memref<512x4xbf16, #tpu.memory_space<vmem>>, vector<512x4xbf16>
    tpu.vector_store %arg3[%c0_3, %c0_4], %3 {strides = array<i32>} : memref<512x4xbf16, #tpu.memory_space<vmem>>, vector<512x4xbf16>,
    %cst_5 = arith.constant dense<0.000000e+00> : vector<4xf32>
    %5 = vector.multi_reduction <add>, %2, %cst_5 [0] : vector<512x4xf32> to vector<4xf32>
    %6 = vector.shape_cast %5 : vector<4xf32> to vector<1x1x4xf32>
    %c0_6 = arith.constant 0 : index
    %c0_7 = arith.constant 0 : index
    %c0_8 = arith.constant 0 : index
    %7 = vector.load %arg4[%c0_6, %c0_7, %c0_8] : memref<1x1x4xf32, #tpu.memory_space<vmem>>, vector<1x1x4xf32>
    tpu.vector_store %arg4[%c0_6, %c0_7, %c0_8], %6 {strides = array<i32>} : memref<1x1x4xf32, #tpu.memory_space<vmem>>, vector<1x1x4xf32>,
    %8 = arith.mulf %2, %2 : vector<512x4xf32>
    %cst_9 = arith.constant dense<0.000000e+00> : vector<4xf32>
    %9 = vector.multi_reduction <add>, %8, %cst_9 [0] : vector<512x4xf32> to vector<4xf32>
    %10 = vector.shape_cast %9 : vector<4xf32> to vector<1x1x4xf32>
    %c0_10 = arith.constant 0 : index
    %c0_11 = arith.constant 0 : index
    %c0_12 = arith.constant 0 : index
    %11 = vector.load %arg5[%c0_10, %c0_11, %c0_12] : memref<1x1x4xf32, #tpu.memory_space<vmem>>, vector<1x1x4xf32>
    tpu.vector_store %arg5[%c0_10, %c0_11, %c0_12], %10 {strides = array<i32>} : memref<1x1x4xf32, #tpu.memory_space<vmem>>, vector<1x1x4xf32>,
    return
  }
  func.func @transform_0(%arg0: i32) -> (i32, i32) {
    %c0_i32 = arith.constant 0 : i32
    %c0_i32_0 = arith.constant 0 : i32
    return %arg0, %c0_i32 : i32, i32
  }
  func.func @transform_1(%arg0: i32) -> (i32, i32) {
    %c0_i32 = arith.constant 0 : i32
    %c0_i32_0 = arith.constant 0 : i32
    %c0_i32_1 = arith.constant 0 : i32
    return %c0_i32, %c0_i32_0 : i32, i32
  }
  func.func @transform_2(%arg0: i32) -> (i32, i32) {
    %c0_i32 = arith.constant 0 : i32
    %c0_i32_0 = arith.constant 0 : i32
    return %arg0, %c0_i32 : i32, i32
  }
  func.func @transform_3(%arg0: i32) -> (i32, i32, i32) {
    %c0_i32 = arith.constant 0 : i32
    %c0_i32_0 = arith.constant 0 : i32
    %c0_i32_1 = arith.constant 0 : i32
    return %arg0, %c0_i32, %c0_i32_0 : i32, i32, i32
  }
  func.func @transform_4(%arg0: i32) -> (i32, i32, i32) {
    %c0_i32 = arith.constant 0 : i32
    %c0_i32_0 = arith.constant 0 : i32
    %c0_i32_1 = arith.constant 0 : i32
    return %arg0, %c0_i32, %c0_i32_0 : i32, i32, i32
  }
}

module attributes {stable_mosaic.version = 11 : i64} {
  func.func @_conv3x3_bn_relu_stats_kernel(%arg0: i32, %arg1: memref<1x16x16x4xbf16, #tpu.memory_space<vmem>>, %arg2: memref<1x4xf32, #tpu.memory_space<vmem>>, %arg3: memref<1x4xf32, #tpu.memory_space<vmem>>, %arg4: memref<9x4x4xbf16, #tpu.memory_space<vmem>>, %arg5: memref<1x16x16x4xbf16, #tpu.memory_space<vmem>>, %arg6: memref<1x1x4xf32, #tpu.memory_space<vmem>>, %arg7: memref<1x1x4xf32, #tpu.memory_space<vmem>>) attributes {dimension_semantics = [#tpu.dimension_semantics<parallel>], iteration_bounds = array<i64: 2>, scalar_prefetch = 0 : i64, scratch_operands = 0 : i64, tpu.core_type = #tpu.core_type<tc>, window_params = [{transform_indices = @transform_0, window_bounds = array<i64: 1, 16, 16, 4>}, {pipeline_mode = #tpu.pipeline_mode<synchronous>, transform_indices = @transform_1, window_bounds = array<i64: 1, 4>}, {pipeline_mode = #tpu.pipeline_mode<synchronous>, transform_indices = @transform_2, window_bounds = array<i64: 1, 4>}, {pipeline_mode = #tpu.pipeline_mode<synchronous>, transform_indices = @transform_3, window_bounds = array<i64: 9, 4, 4>}, {transform_indices = @transform_4, window_bounds = array<i64: 1, 16, 16, 4>}, {transform_indices = @transform_5, window_bounds = array<i64: 1, 1, 4>}, {transform_indices = @transform_6, window_bounds = array<i64: 1, 1, 4>}]} {
    %c0 = arith.constant 0 : index
    %c0_0 = arith.constant 0 : index
    %c0_1 = arith.constant 0 : index
    %c0_2 = arith.constant 0 : index
    %0 = vector.load %arg1[%c0, %c0_0, %c0_1, %c0_2] : memref<1x16x16x4xbf16, #tpu.memory_space<vmem>>, vector<1x16x16x4xbf16>
    %1 = vector.shape_cast %0 : vector<1x16x16x4xbf16> to vector<16x16x4xbf16>
    %2 = arith.extf %1 : vector<16x16x4xbf16> to vector<16x16x4xf32>
    %c0_3 = arith.constant 0 : index
    %c0_4 = arith.constant 0 : index
    %3 = vector.load %arg2[%c0_3, %c0_4] : memref<1x4xf32, #tpu.memory_space<vmem>>, vector<1x4xf32>
    %4 = vector.shape_cast %3 : vector<1x4xf32> to vector<1x1x4xf32>
    %5 = vector.broadcast %4 : vector<1x1x4xf32> to vector<16x16x4xf32>
    %6 = arith.mulf %2, %5 : vector<16x16x4xf32>
    %c0_5 = arith.constant 0 : index
    %c0_6 = arith.constant 0 : index
    %7 = vector.load %arg3[%c0_5, %c0_6] : memref<1x4xf32, #tpu.memory_space<vmem>>, vector<1x4xf32>
    %8 = vector.shape_cast %7 : vector<1x4xf32> to vector<1x1x4xf32>
    %9 = vector.broadcast %8 : vector<1x1x4xf32> to vector<16x16x4xf32>
    %10 = arith.addf %6, %9 : vector<16x16x4xf32>
    %cst = arith.constant 0.000000e+00 : f32
    %11 = vector.broadcast %cst : f32 to vector<16x16x4xf32>
    %12 = arith.maximumf %10, %11 : vector<16x16x4xf32>
    %13 = arith.truncf %12 : vector<16x16x4xf32> to vector<16x16x4xbf16>
    %cst_7 = arith.constant 0.000000e+00 : bf16
    %14 = vector.broadcast %cst_7 : bf16 to vector<1x16x4xbf16>
    %15 = tpu.concatenate %14, %13, %14 in 0 : vector<1x16x4xbf16>, vector<16x16x4xbf16>, vector<1x16x4xbf16> -> vector<18x16x4xbf16>
    %cst_8 = arith.constant 0.000000e+00 : bf16
    %16 = vector.broadcast %cst_8 : bf16 to vector<18x1x4xbf16>
    %17 = tpu.concatenate %16, %15, %16 in 1 : vector<18x1x4xbf16>, vector<18x16x4xbf16>, vector<18x1x4xbf16> -> vector<18x18x4xbf16>
    %cst_9 = arith.constant 0.000000e+00 : f32
    %18 = vector.broadcast %cst_9 : f32 to vector<256x4xf32>
    %19 = vector.extract_strided_slice %17 {offsets = [0, 0, 0], sizes = [16, 16, 4], strides = [1, 1, 1]} : vector<18x18x4xbf16> to vector<16x16x4xbf16>
    %20 = vector.shape_cast %19 : vector<16x16x4xbf16> to vector<256x4xbf16>
    %c0_10 = arith.constant 0 : index
    %c0_11 = arith.constant 0 : index
    %c0_12 = arith.constant 0 : index
    %21 = vector.load %arg4[%c0_10, %c0_11, %c0_12] : memref<9x4x4xbf16, #tpu.memory_space<vmem>>, vector<1x4x4xbf16>
    %22 = vector.shape_cast %21 : vector<1x4x4xbf16> to vector<4x4xbf16>
    %cst_13 = arith.constant dense<0.000000e+00> : vector<256x4xf32>
    %23 = tpu.matmul %20, %22, %cst_13 {dimension_numbers = #tpu.dot_dimension_numbers<[1], [0], [0], [1], [0, 0, 1, 1], [], []>} : vector<256x4xbf16>, vector<4x4xbf16>, vector<256x4xf32> -> vector<256x4xf32>
    %24 = arith.addf %18, %23 : vector<256x4xf32>
    %25 = vector.extract_strided_slice %17 {offsets = [0, 1, 0], sizes = [16, 16, 4], strides = [1, 1, 1]} : vector<18x18x4xbf16> to vector<16x16x4xbf16>
    %26 = vector.shape_cast %25 : vector<16x16x4xbf16> to vector<256x4xbf16>
    %c1 = arith.constant 1 : index
    %c0_14 = arith.constant 0 : index
    %c0_15 = arith.constant 0 : index
    %27 = vector.load %arg4[%c1, %c0_14, %c0_15] : memref<9x4x4xbf16, #tpu.memory_space<vmem>>, vector<1x4x4xbf16>
    %28 = vector.shape_cast %27 : vector<1x4x4xbf16> to vector<4x4xbf16>
    %cst_16 = arith.constant dense<0.000000e+00> : vector<256x4xf32>
    %29 = tpu.matmul %26, %28, %cst_16 {dimension_numbers = #tpu.dot_dimension_numbers<[1], [0], [0], [1], [0, 0, 1, 1], [], []>} : vector<256x4xbf16>, vector<4x4xbf16>, vector<256x4xf32> -> vector<256x4xf32>
    %30 = arith.addf %24, %29 : vector<256x4xf32>
    %31 = vector.extract_strided_slice %17 {offsets = [0, 2, 0], sizes = [16, 16, 4], strides = [1, 1, 1]} : vector<18x18x4xbf16> to vector<16x16x4xbf16>
    %32 = vector.shape_cast %31 : vector<16x16x4xbf16> to vector<256x4xbf16>
    %c2 = arith.constant 2 : index
    %c0_17 = arith.constant 0 : index
    %c0_18 = arith.constant 0 : index
    %33 = vector.load %arg4[%c2, %c0_17, %c0_18] : memref<9x4x4xbf16, #tpu.memory_space<vmem>>, vector<1x4x4xbf16>
    %34 = vector.shape_cast %33 : vector<1x4x4xbf16> to vector<4x4xbf16>
    %cst_19 = arith.constant dense<0.000000e+00> : vector<256x4xf32>
    %35 = tpu.matmul %32, %34, %cst_19 {dimension_numbers = #tpu.dot_dimension_numbers<[1], [0], [0], [1], [0, 0, 1, 1], [], []>} : vector<256x4xbf16>, vector<4x4xbf16>, vector<256x4xf32> -> vector<256x4xf32>
    %36 = arith.addf %30, %35 : vector<256x4xf32>
    %37 = vector.extract_strided_slice %17 {offsets = [1, 0, 0], sizes = [16, 16, 4], strides = [1, 1, 1]} : vector<18x18x4xbf16> to vector<16x16x4xbf16>
    %38 = vector.shape_cast %37 : vector<16x16x4xbf16> to vector<256x4xbf16>
    %c3 = arith.constant 3 : index
    %c0_20 = arith.constant 0 : index
    %c0_21 = arith.constant 0 : index
    %39 = vector.load %arg4[%c3, %c0_20, %c0_21] : memref<9x4x4xbf16, #tpu.memory_space<vmem>>, vector<1x4x4xbf16>
    %40 = vector.shape_cast %39 : vector<1x4x4xbf16> to vector<4x4xbf16>
    %cst_22 = arith.constant dense<0.000000e+00> : vector<256x4xf32>
    %41 = tpu.matmul %38, %40, %cst_22 {dimension_numbers = #tpu.dot_dimension_numbers<[1], [0], [0], [1], [0, 0, 1, 1], [], []>} : vector<256x4xbf16>, vector<4x4xbf16>, vector<256x4xf32> -> vector<256x4xf32>
    %42 = arith.addf %36, %41 : vector<256x4xf32>
    %43 = vector.extract_strided_slice %17 {offsets = [1, 1, 0], sizes = [16, 16, 4], strides = [1, 1, 1]} : vector<18x18x4xbf16> to vector<16x16x4xbf16>
    %44 = vector.shape_cast %43 : vector<16x16x4xbf16> to vector<256x4xbf16>
    %c4 = arith.constant 4 : index
    %c0_23 = arith.constant 0 : index
    %c0_24 = arith.constant 0 : index
    %45 = vector.load %arg4[%c4, %c0_23, %c0_24] : memref<9x4x4xbf16, #tpu.memory_space<vmem>>, vector<1x4x4xbf16>
    %46 = vector.shape_cast %45 : vector<1x4x4xbf16> to vector<4x4xbf16>
    %cst_25 = arith.constant dense<0.000000e+00> : vector<256x4xf32>
    %47 = tpu.matmul %44, %46, %cst_25 {dimension_numbers = #tpu.dot_dimension_numbers<[1], [0], [0], [1], [0, 0, 1, 1], [], []>} : vector<256x4xbf16>, vector<4x4xbf16>, vector<256x4xf32> -> vector<256x4xf32>
    %48 = arith.addf %42, %47 : vector<256x4xf32>
    %49 = vector.extract_strided_slice %17 {offsets = [1, 2, 0], sizes = [16, 16, 4], strides = [1, 1, 1]} : vector<18x18x4xbf16> to vector<16x16x4xbf16>
    %50 = vector.shape_cast %49 : vector<16x16x4xbf16> to vector<256x4xbf16>
    %c5 = arith.constant 5 : index
    %c0_26 = arith.constant 0 : index
    %c0_27 = arith.constant 0 : index
    %51 = vector.load %arg4[%c5, %c0_26, %c0_27] : memref<9x4x4xbf16, #tpu.memory_space<vmem>>, vector<1x4x4xbf16>
    %52 = vector.shape_cast %51 : vector<1x4x4xbf16> to vector<4x4xbf16>
    %cst_28 = arith.constant dense<0.000000e+00> : vector<256x4xf32>
    %53 = tpu.matmul %50, %52, %cst_28 {dimension_numbers = #tpu.dot_dimension_numbers<[1], [0], [0], [1], [0, 0, 1, 1], [], []>} : vector<256x4xbf16>, vector<4x4xbf16>, vector<256x4xf32> -> vector<256x4xf32>
    %54 = arith.addf %48, %53 : vector<256x4xf32>
    %55 = vector.extract_strided_slice %17 {offsets = [2, 0, 0], sizes = [16, 16, 4], strides = [1, 1, 1]} : vector<18x18x4xbf16> to vector<16x16x4xbf16>
    %56 = vector.shape_cast %55 : vector<16x16x4xbf16> to vector<256x4xbf16>
    %c6 = arith.constant 6 : index
    %c0_29 = arith.constant 0 : index
    %c0_30 = arith.constant 0 : index
    %57 = vector.load %arg4[%c6, %c0_29, %c0_30] : memref<9x4x4xbf16, #tpu.memory_space<vmem>>, vector<1x4x4xbf16>
    %58 = vector.shape_cast %57 : vector<1x4x4xbf16> to vector<4x4xbf16>
    %cst_31 = arith.constant dense<0.000000e+00> : vector<256x4xf32>
    %59 = tpu.matmul %56, %58, %cst_31 {dimension_numbers = #tpu.dot_dimension_numbers<[1], [0], [0], [1], [0, 0, 1, 1], [], []>} : vector<256x4xbf16>, vector<4x4xbf16>, vector<256x4xf32> -> vector<256x4xf32>
    %60 = arith.addf %54, %59 : vector<256x4xf32>
    %61 = vector.extract_strided_slice %17 {offsets = [2, 1, 0], sizes = [16, 16, 4], strides = [1, 1, 1]} : vector<18x18x4xbf16> to vector<16x16x4xbf16>
    %62 = vector.shape_cast %61 : vector<16x16x4xbf16> to vector<256x4xbf16>
    %c7 = arith.constant 7 : index
    %c0_32 = arith.constant 0 : index
    %c0_33 = arith.constant 0 : index
    %63 = vector.load %arg4[%c7, %c0_32, %c0_33] : memref<9x4x4xbf16, #tpu.memory_space<vmem>>, vector<1x4x4xbf16>
    %64 = vector.shape_cast %63 : vector<1x4x4xbf16> to vector<4x4xbf16>
    %cst_34 = arith.constant dense<0.000000e+00> : vector<256x4xf32>
    %65 = tpu.matmul %62, %64, %cst_34 {dimension_numbers = #tpu.dot_dimension_numbers<[1], [0], [0], [1], [0, 0, 1, 1], [], []>} : vector<256x4xbf16>, vector<4x4xbf16>, vector<256x4xf32> -> vector<256x4xf32>
    %66 = arith.addf %60, %65 : vector<256x4xf32>
    %67 = vector.extract_strided_slice %17 {offsets = [2, 2, 0], sizes = [16, 16, 4], strides = [1, 1, 1]} : vector<18x18x4xbf16> to vector<16x16x4xbf16>
    %68 = vector.shape_cast %67 : vector<16x16x4xbf16> to vector<256x4xbf16>
    %c8 = arith.constant 8 : index
    %c0_35 = arith.constant 0 : index
    %c0_36 = arith.constant 0 : index
    %69 = vector.load %arg4[%c8, %c0_35, %c0_36] : memref<9x4x4xbf16, #tpu.memory_space<vmem>>, vector<1x4x4xbf16>
    %70 = vector.shape_cast %69 : vector<1x4x4xbf16> to vector<4x4xbf16>
    %cst_37 = arith.constant dense<0.000000e+00> : vector<256x4xf32>
    %71 = tpu.matmul %68, %70, %cst_37 {dimension_numbers = #tpu.dot_dimension_numbers<[1], [0], [0], [1], [0, 0, 1, 1], [], []>} : vector<256x4xbf16>, vector<4x4xbf16>, vector<256x4xf32> -> vector<256x4xf32>
    %72 = arith.addf %66, %71 : vector<256x4xf32>
    %73 = vector.shape_cast %72 : vector<256x4xf32> to vector<16x16x4xf32>
    %74 = arith.truncf %73 : vector<16x16x4xf32> to vector<16x16x4xbf16>
    %c0_38 = arith.constant 0 : index
    %c0_39 = arith.constant 0 : index
    %c0_40 = arith.constant 0 : index
    %c0_41 = arith.constant 0 : index
    %75 = vector.load %arg5[%c0_38, %c0_39, %c0_40, %c0_41] : memref<1x16x16x4xbf16, #tpu.memory_space<vmem>>, vector<1x16x16x4xbf16>
    %76 = vector.shape_cast %75 : vector<1x16x16x4xbf16> to vector<16x16x4xbf16>
    %77 = vector.shape_cast %74 : vector<16x16x4xbf16> to vector<1x16x16x4xbf16>
    tpu.vector_store %arg5[%c0_38, %c0_39, %c0_40, %c0_41], %77 {strides = array<i32>} : memref<1x16x16x4xbf16, #tpu.memory_space<vmem>>, vector<1x16x16x4xbf16>,
    %cst_42 = arith.constant dense<0.000000e+00> : vector<4xf32>
    %78 = vector.multi_reduction <add>, %72, %cst_42 [0] : vector<256x4xf32> to vector<4xf32>
    %79 = vector.shape_cast %78 : vector<4xf32> to vector<1x1x4xf32>
    %c0_43 = arith.constant 0 : index
    %c0_44 = arith.constant 0 : index
    %c0_45 = arith.constant 0 : index
    %80 = vector.load %arg6[%c0_43, %c0_44, %c0_45] : memref<1x1x4xf32, #tpu.memory_space<vmem>>, vector<1x1x4xf32>
    tpu.vector_store %arg6[%c0_43, %c0_44, %c0_45], %79 {strides = array<i32>} : memref<1x1x4xf32, #tpu.memory_space<vmem>>, vector<1x1x4xf32>,
    %81 = arith.mulf %72, %72 : vector<256x4xf32>
    %cst_46 = arith.constant dense<0.000000e+00> : vector<4xf32>
    %82 = vector.multi_reduction <add>, %81, %cst_46 [0] : vector<256x4xf32> to vector<4xf32>
    %83 = vector.shape_cast %82 : vector<4xf32> to vector<1x1x4xf32>
    %c0_47 = arith.constant 0 : index
    %c0_48 = arith.constant 0 : index
    %c0_49 = arith.constant 0 : index
    %84 = vector.load %arg7[%c0_47, %c0_48, %c0_49] : memref<1x1x4xf32, #tpu.memory_space<vmem>>, vector<1x1x4xf32>
    tpu.vector_store %arg7[%c0_47, %c0_48, %c0_49], %83 {strides = array<i32>} : memref<1x1x4xf32, #tpu.memory_space<vmem>>, vector<1x1x4xf32>,
    return
  }
  func.func @transform_0(%arg0: i32) -> (i32, i32, i32, i32) {
    %c0_i32 = arith.constant 0 : i32
    %c0_i32_0 = arith.constant 0 : i32
    %c0_i32_1 = arith.constant 0 : i32
    %c0_i32_2 = arith.constant 0 : i32
    return %arg0, %c0_i32, %c0_i32_0, %c0_i32_1 : i32, i32, i32, i32
  }
  func.func @transform_1(%arg0: i32) -> (i32, i32) {
    %c0_i32 = arith.constant 0 : i32
    %c0_i32_0 = arith.constant 0 : i32
    %c0_i32_1 = arith.constant 0 : i32
    return %c0_i32, %c0_i32_0 : i32, i32
  }
  func.func @transform_2(%arg0: i32) -> (i32, i32) {
    %c0_i32 = arith.constant 0 : i32
    %c0_i32_0 = arith.constant 0 : i32
    %c0_i32_1 = arith.constant 0 : i32
    return %c0_i32, %c0_i32_0 : i32, i32
  }
  func.func @transform_3(%arg0: i32) -> (i32, i32, i32) {
    %c0_i32 = arith.constant 0 : i32
    %c0_i32_0 = arith.constant 0 : i32
    %c0_i32_1 = arith.constant 0 : i32
    %c0_i32_2 = arith.constant 0 : i32
    return %c0_i32, %c0_i32_0, %c0_i32_1 : i32, i32, i32
  }
  func.func @transform_4(%arg0: i32) -> (i32, i32, i32, i32) {
    %c0_i32 = arith.constant 0 : i32
    %c0_i32_0 = arith.constant 0 : i32
    %c0_i32_1 = arith.constant 0 : i32
    %c0_i32_2 = arith.constant 0 : i32
    return %arg0, %c0_i32, %c0_i32_0, %c0_i32_1 : i32, i32, i32, i32
  }
  func.func @transform_5(%arg0: i32) -> (i32, i32, i32) {
    %c0_i32 = arith.constant 0 : i32
    %c0_i32_0 = arith.constant 0 : i32
    %c0_i32_1 = arith.constant 0 : i32
    return %arg0, %c0_i32, %c0_i32_0 : i32, i32, i32
  }
  func.func @transform_6(%arg0: i32) -> (i32, i32, i32) {
    %c0_i32 = arith.constant 0 : i32
    %c0_i32_0 = arith.constant 0 : i32
    %c0_i32_1 = arith.constant 0 : i32
    return %arg0, %c0_i32, %c0_i32_0 : i32, i32, i32
  }
}

module attributes {stable_mosaic.version = 11 : i64} {
  func.func @_bn_relu_mm_stats_kernel(%arg0: i32, %arg1: memref<512x4xbf16, #tpu.memory_space<vmem>>, %arg2: memref<1x4xf32, #tpu.memory_space<vmem>>, %arg3: memref<1x4xf32, #tpu.memory_space<vmem>>, %arg4: memref<4x16xbf16, #tpu.memory_space<vmem>>, %arg5: memref<512x16xbf16, #tpu.memory_space<vmem>>, %arg6: memref<1x1x16xf32, #tpu.memory_space<vmem>>, %arg7: memref<1x1x16xf32, #tpu.memory_space<vmem>>) attributes {dimension_semantics = [#tpu.dimension_semantics<parallel>], iteration_bounds = array<i64: 1>, scalar_prefetch = 0 : i64, scratch_operands = 0 : i64, tpu.core_type = #tpu.core_type<tc>, window_params = [{transform_indices = @transform_0, window_bounds = array<i64: 512, 4>}, {pipeline_mode = #tpu.pipeline_mode<synchronous>, transform_indices = @transform_1, window_bounds = array<i64: 1, 4>}, {pipeline_mode = #tpu.pipeline_mode<synchronous>, transform_indices = @transform_2, window_bounds = array<i64: 1, 4>}, {pipeline_mode = #tpu.pipeline_mode<synchronous>, transform_indices = @transform_3, window_bounds = array<i64: 4, 16>}, {transform_indices = @transform_4, window_bounds = array<i64: 512, 16>}, {transform_indices = @transform_5, window_bounds = array<i64: 1, 1, 16>}, {transform_indices = @transform_6, window_bounds = array<i64: 1, 1, 16>}]} {
    %c0 = arith.constant 0 : index
    %c0_0 = arith.constant 0 : index
    %0 = vector.load %arg1[%c0, %c0_0] : memref<512x4xbf16, #tpu.memory_space<vmem>>, vector<512x4xbf16>
    %1 = arith.extf %0 : vector<512x4xbf16> to vector<512x4xf32>
    %c0_1 = arith.constant 0 : index
    %c0_2 = arith.constant 0 : index
    %2 = vector.load %arg2[%c0_1, %c0_2] : memref<1x4xf32, #tpu.memory_space<vmem>>, vector<1x4xf32>
    %3 = vector.broadcast %2 : vector<1x4xf32> to vector<512x4xf32>
    %4 = arith.mulf %1, %3 : vector<512x4xf32>
    %c0_3 = arith.constant 0 : index
    %c0_4 = arith.constant 0 : index
    %5 = vector.load %arg3[%c0_3, %c0_4] : memref<1x4xf32, #tpu.memory_space<vmem>>, vector<1x4xf32>
    %6 = vector.broadcast %5 : vector<1x4xf32> to vector<512x4xf32>
    %7 = arith.addf %4, %6 : vector<512x4xf32>
    %cst = arith.constant 0.000000e+00 : f32
    %8 = vector.broadcast %cst : f32 to vector<512x4xf32>
    %9 = arith.maximumf %7, %8 : vector<512x4xf32>
    %10 = arith.truncf %9 : vector<512x4xf32> to vector<512x4xbf16>
    %c0_5 = arith.constant 0 : index
    %c0_6 = arith.constant 0 : index
    %11 = vector.load %arg4[%c0_5, %c0_6] : memref<4x16xbf16, #tpu.memory_space<vmem>>, vector<4x16xbf16>
    %cst_7 = arith.constant dense<0.000000e+00> : vector<512x16xf32>
    %12 = tpu.matmul %10, %11, %cst_7 {dimension_numbers = #tpu.dot_dimension_numbers<[1], [0], [0], [1], [0, 0, 1, 1], [], []>} : vector<512x4xbf16>, vector<4x16xbf16>, vector<512x16xf32> -> vector<512x16xf32>
    %13 = arith.truncf %12 : vector<512x16xf32> to vector<512x16xbf16>
    %c0_8 = arith.constant 0 : index
    %c0_9 = arith.constant 0 : index
    %14 = vector.load %arg5[%c0_8, %c0_9] : memref<512x16xbf16, #tpu.memory_space<vmem>>, vector<512x16xbf16>
    tpu.vector_store %arg5[%c0_8, %c0_9], %13 {strides = array<i32>} : memref<512x16xbf16, #tpu.memory_space<vmem>>, vector<512x16xbf16>,
    %cst_10 = arith.constant dense<0.000000e+00> : vector<16xf32>
    %15 = vector.multi_reduction <add>, %12, %cst_10 [0] : vector<512x16xf32> to vector<16xf32>
    %16 = vector.shape_cast %15 : vector<16xf32> to vector<1x1x16xf32>
    %c0_11 = arith.constant 0 : index
    %c0_12 = arith.constant 0 : index
    %c0_13 = arith.constant 0 : index
    %17 = vector.load %arg6[%c0_11, %c0_12, %c0_13] : memref<1x1x16xf32, #tpu.memory_space<vmem>>, vector<1x1x16xf32>
    tpu.vector_store %arg6[%c0_11, %c0_12, %c0_13], %16 {strides = array<i32>} : memref<1x1x16xf32, #tpu.memory_space<vmem>>, vector<1x1x16xf32>,
    %18 = arith.mulf %12, %12 : vector<512x16xf32>
    %cst_14 = arith.constant dense<0.000000e+00> : vector<16xf32>
    %19 = vector.multi_reduction <add>, %18, %cst_14 [0] : vector<512x16xf32> to vector<16xf32>
    %20 = vector.shape_cast %19 : vector<16xf32> to vector<1x1x16xf32>
    %c0_15 = arith.constant 0 : index
    %c0_16 = arith.constant 0 : index
    %c0_17 = arith.constant 0 : index
    %21 = vector.load %arg7[%c0_15, %c0_16, %c0_17] : memref<1x1x16xf32, #tpu.memory_space<vmem>>, vector<1x1x16xf32>
    tpu.vector_store %arg7[%c0_15, %c0_16, %c0_17], %20 {strides = array<i32>} : memref<1x1x16xf32, #tpu.memory_space<vmem>>, vector<1x1x16xf32>,
    return
  }
  func.func @transform_0(%arg0: i32) -> (i32, i32) {
    %c0_i32 = arith.constant 0 : i32
    %c0_i32_0 = arith.constant 0 : i32
    return %arg0, %c0_i32 : i32, i32
  }
  func.func @transform_1(%arg0: i32) -> (i32, i32) {
    %c0_i32 = arith.constant 0 : i32
    %c0_i32_0 = arith.constant 0 : i32
    %c0_i32_1 = arith.constant 0 : i32
    return %c0_i32, %c0_i32_0 : i32, i32
  }
  func.func @transform_2(%arg0: i32) -> (i32, i32) {
    %c0_i32 = arith.constant 0 : i32
    %c0_i32_0 = arith.constant 0 : i32
    %c0_i32_1 = arith.constant 0 : i32
    return %c0_i32, %c0_i32_0 : i32, i32
  }
  func.func @transform_3(%arg0: i32) -> (i32, i32) {
    %c0_i32 = arith.constant 0 : i32
    %c0_i32_0 = arith.constant 0 : i32
    %c0_i32_1 = arith.constant 0 : i32
    return %c0_i32, %c0_i32_0 : i32, i32
  }
  func.func @transform_4(%arg0: i32) -> (i32, i32) {
    %c0_i32 = arith.constant 0 : i32
    %c0_i32_0 = arith.constant 0 : i32
    return %arg0, %c0_i32 : i32, i32
  }
  func.func @transform_5(%arg0: i32) -> (i32, i32, i32) {
    %c0_i32 = arith.constant 0 : i32
    %c0_i32_0 = arith.constant 0 : i32
    %c0_i32_1 = arith.constant 0 : i32
    return %arg0, %c0_i32, %c0_i32_0 : i32, i32, i32
  }
  func.func @transform_6(%arg0: i32) -> (i32, i32, i32) {
    %c0_i32 = arith.constant 0 : i32
    %c0_i32_0 = arith.constant 0 : i32
    %c0_i32_1 = arith.constant 0 : i32
    return %arg0, %c0_i32, %c0_i32_0 : i32, i32, i32
  }
}

module attributes {stable_mosaic.version = 11 : i64} {
  func.func @_skip_bn_add_relu_kernel(%arg0: i32, %arg1: memref<512x4xbf16, #tpu.memory_space<vmem>>, %arg2: memref<4x16xbf16, #tpu.memory_space<vmem>>, %arg3: memref<1x16xf32, #tpu.memory_space<vmem>>, %arg4: memref<512x16xbf16, #tpu.memory_space<vmem>>, %arg5: memref<1x16xf32, #tpu.memory_space<vmem>>, %arg6: memref<1x16xf32, #tpu.memory_space<vmem>>, %arg7: memref<512x16xf32, #tpu.memory_space<vmem>>) attributes {dimension_semantics = [#tpu.dimension_semantics<parallel>], iteration_bounds = array<i64: 1>, scalar_prefetch = 0 : i64, scratch_operands = 0 : i64, tpu.core_type = #tpu.core_type<tc>, window_params = [{transform_indices = @transform_0, window_bounds = array<i64: 512, 4>}, {pipeline_mode = #tpu.pipeline_mode<synchronous>, transform_indices = @transform_1, window_bounds = array<i64: 4, 16>}, {pipeline_mode = #tpu.pipeline_mode<synchronous>, transform_indices = @transform_2, window_bounds = array<i64: 1, 16>}, {transform_indices = @transform_3, window_bounds = array<i64: 512, 16>}, {pipeline_mode = #tpu.pipeline_mode<synchronous>, transform_indices = @transform_4, window_bounds = array<i64: 1, 16>}, {pipeline_mode = #tpu.pipeline_mode<synchronous>, transform_indices = @transform_5, window_bounds = array<i64: 1, 16>}, {transform_indices = @transform_6, window_bounds = array<i64: 512, 16>}]} {
    %c0 = arith.constant 0 : index
    %c0_0 = arith.constant 0 : index
    %0 = vector.load %arg1[%c0, %c0_0] : memref<512x4xbf16, #tpu.memory_space<vmem>>, vector<512x4xbf16>
    %c0_1 = arith.constant 0 : index
    %c0_2 = arith.constant 0 : index
    %1 = vector.load %arg2[%c0_1, %c0_2] : memref<4x16xbf16, #tpu.memory_space<vmem>>, vector<4x16xbf16>
    %cst = arith.constant dense<0.000000e+00> : vector<512x16xf32>
    %2 = tpu.matmul %0, %1, %cst {dimension_numbers = #tpu.dot_dimension_numbers<[1], [0], [0], [1], [0, 0, 1, 1], [], []>} : vector<512x4xbf16>, vector<4x16xbf16>, vector<512x16xf32> -> vector<512x16xf32>
    %c0_3 = arith.constant 0 : index
    %c0_4 = arith.constant 0 : index
    %3 = vector.load %arg3[%c0_3, %c0_4] : memref<1x16xf32, #tpu.memory_space<vmem>>, vector<1x16xf32>
    %4 = vector.broadcast %3 : vector<1x16xf32> to vector<512x16xf32>
    %5 = arith.addf %2, %4 : vector<512x16xf32>
    %c0_5 = arith.constant 0 : index
    %c0_6 = arith.constant 0 : index
    %6 = vector.load %arg4[%c0_5, %c0_6] : memref<512x16xbf16, #tpu.memory_space<vmem>>, vector<512x16xbf16>
    %7 = arith.extf %6 : vector<512x16xbf16> to vector<512x16xf32>
    %c0_7 = arith.constant 0 : index
    %c0_8 = arith.constant 0 : index
    %8 = vector.load %arg5[%c0_7, %c0_8] : memref<1x16xf32, #tpu.memory_space<vmem>>, vector<1x16xf32>
    %9 = vector.broadcast %8 : vector<1x16xf32> to vector<512x16xf32>
    %10 = arith.mulf %7, %9 : vector<512x16xf32>
    %11 = arith.addf %5, %10 : vector<512x16xf32>
    %c0_9 = arith.constant 0 : index
    %c0_10 = arith.constant 0 : index
    %12 = vector.load %arg6[%c0_9, %c0_10] : memref<1x16xf32, #tpu.memory_space<vmem>>, vector<1x16xf32>
    %13 = vector.broadcast %12 : vector<1x16xf32> to vector<512x16xf32>
    %14 = arith.addf %11, %13 : vector<512x16xf32>
    %cst_11 = arith.constant 0.000000e+00 : f32
    %15 = vector.broadcast %cst_11 : f32 to vector<512x16xf32>
    %16 = arith.maximumf %14, %15 : vector<512x16xf32>
    %c0_12 = arith.constant 0 : index
    %c0_13 = arith.constant 0 : index
    %17 = vector.load %arg7[%c0_12, %c0_13] : memref<512x16xf32, #tpu.memory_space<vmem>>, vector<512x16xf32>
    tpu.vector_store %arg7[%c0_12, %c0_13], %16 {strides = array<i32>} : memref<512x16xf32, #tpu.memory_space<vmem>>, vector<512x16xf32>,
    return
  }
  func.func @transform_0(%arg0: i32) -> (i32, i32) {
    %c0_i32 = arith.constant 0 : i32
    %c0_i32_0 = arith.constant 0 : i32
    return %arg0, %c0_i32 : i32, i32
  }
  func.func @transform_1(%arg0: i32) -> (i32, i32) {
    %c0_i32 = arith.constant 0 : i32
    %c0_i32_0 = arith.constant 0 : i32
    %c0_i32_1 = arith.constant 0 : i32
    return %c0_i32, %c0_i32_0 : i32, i32
  }
  func.func @transform_2(%arg0: i32) -> (i32, i32) {
    %c0_i32 = arith.constant 0 : i32
    %c0_i32_0 = arith.constant 0 : i32
    %c0_i32_1 = arith.constant 0 : i32
    return %c0_i32, %c0_i32_0 : i32, i32
  }
  func.func @transform_3(%arg0: i32) -> (i32, i32) {
    %c0_i32 = arith.constant 0 : i32
    %c0_i32_0 = arith.constant 0 : i32
    return %arg0, %c0_i32 : i32, i32
  }
  func.func @transform_4(%arg0: i32) -> (i32, i32) {
    %c0_i32 = arith.constant 0 : i32
    %c0_i32_0 = arith.constant 0 : i32
    %c0_i32_1 = arith.constant 0 : i32
    return %c0_i32, %c0_i32_0 : i32, i32
  }
  func.func @transform_5(%arg0: i32) -> (i32, i32) {
    %c0_i32 = arith.constant 0 : i32
    %c0_i32_0 = arith.constant 0 : i32
    %c0_i32_1 = arith.constant 0 : i32
    return %c0_i32, %c0_i32_0 : i32, i32
  }
  func.func @transform_6(%arg0: i32) -> (i32, i32) {
    %c0_i32 = arith.constant 0 : i32
    %c0_i32_0 = arith.constant 0 : i32
    return %arg0, %c0_i32 : i32, i32
  }
}

</mosaic_0001>

<llo_original>
// kernel: bottleneck_forward.4
$region0: #{bottleneck_forward.4}
  #allocation0 [shape = 'u32[]', space=smem, size = 0x4, offset = 0x4, fixed_abs, tag = 'smem constant byte address 0x4 - core index']
  #allocation1 [shape = 'u32[72,128]{1,0:T(1,128)}', space=vmem, size = 0x9000, scoped, tag = 'internal scratch']
  %s0 = inlined_call_operand.vmem [shape: bf16[512,4], index: 0, kind: input, shape index: {}]
  %s1 = inlined_call_operand.vmem [shape: bf16[4,4], index: 1, kind: input, shape index: {}]
  %s2 = inlined_call_operand.vmem [shape: bf16[512,4], index: 2, kind: output, shape index: {0}]
  %s3 = inlined_call_operand.vmem [shape: f32[1,1,4], index: 3, kind: output, shape index: {1}]
  %s4 = inlined_call_operand.vmem [shape: f32[1,1,4], index: 4, kind: output, shape index: {2}]
  %5 = xla_tuple %s2, %s3, %s4
  %s6 = sld [smem:[#allocation0]]
  $region34: #{bottleneck_forward.4} parent=0
    _
  %s8 = ssub.s32 1, %s6
  %s9 = scalar_select 0, %s8, %s6
  // Predicated region
  $region2: #{bottleneck_forward.4} parent=0 // pred_check
    _
  $region3: #{bottleneck_forward.4} parent=0 // pred_check_branch
    %11 = sbr.rel (0) target = $region5
  $region4: #{bottleneck_forward.4} parent=0 // pred_region
    _
  $region5: #{bottleneck_forward.4} parent=0 // pred_fallthru
    _
  // Predicated region
  $region6: #{bottleneck_forward.4} parent=0 // pred_check
    _
  $region7: #{bottleneck_forward.4} parent=0 // pred_check_branch
    %13 = sbr.rel (0) target = $region9
  $region8: #{bottleneck_forward.4} parent=0 // pred_region
    _
  $region9: #{bottleneck_forward.4} parent=0 // pred_fallthru
    _
  %v15 = vld [vmem:[%s0] sm:$0xf]
  %v16 = vld [vmem:[%s0 + $0x4] sm:$0xf]
  %v17 = vld [vmem:[%s0 + $0x8] sm:$0xf]
  %v18 = vld [vmem:[%s0 + $0xc] sm:$0xf]
  %v19 = vld [vmem:[%s0 + $0x10] sm:$0xf]
  %v20 = vld [vmem:[%s0 + $0x14] sm:$0xf]
  %v21 = vld [vmem:[%s0 + $0x18] sm:$0xf]
  %v22 = vld [vmem:[%s0 + $0x1c] sm:$0xf]
  %v23 = vld [vmem:[%s0 + $0x20] sm:$0xf]
  %v24 = vld [vmem:[%s0 + $0x24] sm:$0xf]
  %v25 = vld [vmem:[%s0 + $0x28] sm:$0xf]
  %v26 = vld [vmem:[%s0 + $0x2c] sm:$0xf]
  %v27 = vld [vmem:[%s0 + $0x30] sm:$0xf]
  %v28 = vld [vmem:[%s0 + $0x34] sm:$0xf]
  %v29 = vld [vmem:[%s0 + $0x38] sm:$0xf]
  %v30 = vld [vmem:[%s0 + $0x3c] sm:$0xf]
  %v31 = vld [vmem:[%s0 + $0x40] sm:$0xf]
  %v32 = vld [vmem:[%s0 + $0x44] sm:$0xf]
  %v33 = vld [vmem:[%s0 + $0x48] sm:$0xf]
  %v34 = vld [vmem:[%s0 + $0x4c] sm:$0xf]
  %v35 = vld [vmem:[%s0 + $0x50] sm:$0xf]
  %v36 = vld [vmem:[%s0 + $0x54] sm:$0xf]
  %v37 = vld [vmem:[%s0 + $0x58] sm:$0xf]
  %v38 = vld [vmem:[%s0 + $0x5c] sm:$0xf]
  %v39 = vld [vmem:[%s0 + $0x60] sm:$0xf]
  %v40 = vld [vmem:[%s0 + $0x64] sm:$0xf]
  %v41 = vld [vmem:[%s0 + $0x68] sm:$0xf]
  %v42 = vld [vmem:[%s0 + $0x6c] sm:$0xf]
  %v43 = vld [vmem:[%s0 + $0x70] sm:$0xf]
  %v44 = vld [vmem:[%s0 + $0x74] sm:$0xf]
  %v45 = vld [vmem:[%s0 + $0x78] sm:$0xf]
  %v46 = vld [vmem:[%s0 + $0x7c] sm:$0xf]
  %v47 = vld [vmem:[%s0 + $0x80] sm:$0xf]
  %v48 = vld [vmem:[%s0 + $0x84] sm:$0xf]
  %v49 = vld [vmem:[%s0 + $0x88] sm:$0xf]
  %v50 = vld [vmem:[%s0 + $0x8c] sm:$0xf]
  %v51 = vld [vmem:[%s0 + $0x90] sm:$0xf]
  %v52 = vld [vmem:[%s0 + $0x94] sm:$0xf]
  %v53 = vld [vmem:[%s0 + $0x98] sm:$0xf]
  %v54 = vld [vmem:[%s0 + $0x9c] sm:$0xf]
  %v55 = vld [vmem:[%s0 + $0xa0] sm:$0xf]
  %v56 = vld [vmem:[%s0 + $0xa4] sm:$0xf]
  %v57 = vld [vmem:[%s0 + $0xa8] sm:$0xf]
  %v58 = vld [vmem:[%s0 + $0xac] sm:$0xf]
  %v59 = vld [vmem:[%s0 + $0xb0] sm:$0xf]
  %v60 = vld [vmem:[%s0 + $0xb4] sm:$0xf]
  %v61 = vld [vmem:[%s0 + $0xb8] sm:$0xf]
  %v62 = vld [vmem:[%s0 + $0xbc] sm:$0xf]
  %v63 = vld [vmem:[%s0 + $0xc0] sm:$0xf]
  %v64 = vld [vmem:[%s0 + $0xc4] sm:$0xf]
  %v65 = vld [vmem:[%s0 + $0xc8] sm:$0xf]
  %v66 = vld [vmem:[%s0 + $0xcc] sm:$0xf]
  %v67 = vld [vmem:[%s0 + $0xd0] sm:$0xf]
  %v68 = vld [vmem:[%s0 + $0xd4] sm:$0xf]
  %v69 = vld [vmem:[%s0 + $0xd8] sm:$0xf]
  %v70 = vld [vmem:[%s0 + $0xdc] sm:$0xf]
  %v71 = vld [vmem:[%s0 + $0xe0] sm:$0xf]
  %v72 = vld [vmem:[%s0 + $0xe4] sm:$0xf]
  %v73 = vld [vmem:[%s0 + $0xe8] sm:$0xf]
  %v74 = vld [vmem:[%s0 + $0xec] sm:$0xf]
  %v75 = vld [vmem:[%s0 + $0xf0] sm:$0xf]
  %v76 = vld [vmem:[%s0 + $0xf4] sm:$0xf]
  %v77 = vld [vmem:[%s0 + $0xf8] sm:$0xf]
  %v78 = vld [vmem:[%s0 + $0xfc] sm:$0xf]
  %v79 = vld [vmem:[%s1] sm:$0x3]
  %v144 = vunpack.c.l.b16 %v15
  %v145 = vunpack.c.l.b16 %v16
  %v146 = vunpack.c.l.b16 %v17
  %v147 = vunpack.c.l.b16 %v18
  %v148 = vunpack.c.l.b16 %v19
  %v149 = vunpack.c.l.b16 %v20
  %v150 = vunpack.c.l.b16 %v21
  %v151 = vunpack.c.l.b16 %v22
  %v152 = vunpack.c.l.b16 %v23
  %v153 = vunpack.c.l.b16 %v24
  %v154 = vunpack.c.l.b16 %v25
  %v155 = vunpack.c.l.b16 %v26
  %v156 = vunpack.c.l.b16 %v27
  %v157 = vunpack.c.l.b16 %v28
  %v158 = vunpack.c.l.b16 %v29
  %v159 = vunpack.c.l.b16 %v30
  %v160 = vunpack.c.l.b16 %v31
  %v161 = vunpack.c.l.b16 %v32
  %v162 = vunpack.c.l.b16 %v33
  %v163 = vunpack.c.l.b16 %v34
  %v164 = vunpack.c.l.b16 %v35
  %v165 = vunpack.c.l.b16 %v36
  %v166 = vunpack.c.l.b16 %v37
  %v167 = vunpack.c.l.b16 %v38
  %v168 = vunpack.c.l.b16 %v39
  %v169 = vunpack.c.l.b16 %v40
  %v170 = vunpack.c.l.b16 %v41
  %v171 = vunpack.c.l.b16 %v42
  %v172 = vunpack.c.l.b16 %v43
  %v173 = vunpack.c.l.b16 %v44
  %v174 = vunpack.c.l.b16 %v45
  %v175 = vunpack.c.l.b16 %v46
  %v176 = vunpack.c.l.b16 %v47
  %v177 = vunpack.c.l.b16 %v48
  %v178 = vunpack.c.l.b16 %v49
  %v179 = vunpack.c.l.b16 %v50
  %v180 = vunpack.c.l.b16 %v51
  %v181 = vunpack.c.l.b16 %v52
  %v182 = vunpack.c.l.b16 %v53
  %v183 = vunpack.c.l.b16 %v54
  %v184 = vunpack.c.l.b16 %v55
  %v185 = vunpack.c.l.b16 %v56
  %v186 = vunpack.c.l.b16 %v57
  %v187 = vunpack.c.l.b16 %v58
  %v188 = vunpack.c.l.b16 %v59
  %v189 = vunpack.c.l.b16 %v60
  %v190 = vunpack.c.l.b16 %v61
  %v191 = vunpack.c.l.b16 %v62
  %v192 = vunpack.c.l.b16 %v63
  %v193 = vunpack.c.l.b16 %v64
  %v194 = vunpack.c.l.b16 %v65
  %v195 = vunpack.c.l.b16 %v66
  %v196 = vunpack.c.l.b16 %v67
  %v197 = vunpack.c.l.b16 %v68
  %v198 = vunpack.c.l.b16 %v69
  %v199 = vunpack.c.l.b16 %v70
  %v200 = vunpack.c.l.b16 %v71
  %v201 = vunpack.c.l.b16 %v72
  %v202 = vunpack.c.l.b16 %v73
  %v203 = vunpack.c.l.b16 %v74
  %v204 = vunpack.c.l.b16 %v75
  %v205 = vunpack.c.l.b16 %v76
  %v206 = vunpack.c.l.b16 %v77
  %v207 = vunpack.c.l.b16 %v78
  %v208 = vpack.c.b16 %v145, %v144
  %v209 = vpack.c.b16 %v147, %v146
  %v210 = vpack.c.b16 %v149, %v148
  %v211 = vpack.c.b16 %v151, %v150
  %v212 = vpack.c.b16 %v153, %v152
  %v213 = vpack.c.b16 %v155, %v154
  %v214 = vpack.c.b16 %v157, %v156
  %v215 = vpack.c.b16 %v159, %v158
  %v216 = vpack.c.b16 %v161, %v160
  %v217 = vpack.c.b16 %v163, %v162
  %v218 = vpack.c.b16 %v165, %v164
  %v219 = vpack.c.b16 %v167, %v166
  %v220 = vpack.c.b16 %v169, %v168
  %v221 = vpack.c.b16 %v171, %v170
  %v222 = vpack.c.b16 %v173, %v172
  %v223 = vpack.c.b16 %v175, %v174
  %v224 = vpack.c.b16 %v177, %v176
  %v225 = vpack.c.b16 %v179, %v178
  %v226 = vpack.c.b16 %v181, %v180
  %v227 = vpack.c.b16 %v183, %v182
  %v228 = vpack.c.b16 %v185, %v184
  %v229 = vpack.c.b16 %v187, %v186
  %v230 = vpack.c.b16 %v189, %v188
  %v231 = vpack.c.b16 %v191, %v190
  %v232 = vpack.c.b16 %v193, %v192
  %v233 = vpack.c.b16 %v195, %v194
  %v234 = vpack.c.b16 %v197, %v196
  %v235 = vpack.c.b16 %v199, %v198
  %v236 = vpack.c.b16 %v201, %v200
  %v237 = vpack.c.b16 %v203, %v202
  %v238 = vpack.c.b16 %v205, %v204
  %v239 = vpack.c.b16 %v207, %v206
  %vm240 = vcmask 31744
  %v242 = vsel %vm240, %v208, 0
  %v245 = vsel %vm240, %v209, 0
  %v248 = vsel %vm240, %v210, 0
  %v251 = vsel %vm240, %v211, 0
  %v254 = vsel %vm240, %v212, 0
  %v257 = vsel %vm240, %v213, 0
  %v260 = vsel %vm240, %v214, 0
  %v263 = vsel %vm240, %v215, 0
  %v266 = vsel %vm240, %v216, 0
  %v269 = vsel %vm240, %v217, 0
  %v272 = vsel %vm240, %v218, 0
  %v275 = vsel %vm240, %v219, 0
  %v278 = vsel %vm240, %v220, 0
  %v281 = vsel %vm240, %v221, 0
  %v284 = vsel %vm240, %v222, 0
  %v287 = vsel %vm240, %v223, 0
  %v290 = vsel %vm240, %v224, 0
  %v293 = vsel %vm240, %v225, 0
  %v296 = vsel %vm240, %v226, 0
  %v299 = vsel %vm240, %v227, 0
  %v302 = vsel %vm240, %v228, 0
  %v305 = vsel %vm240, %v229, 0
  %v308 = vsel %vm240, %v230, 0
  %v311 = vsel %vm240, %v231, 0
  %v314 = vsel %vm240, %v232, 0
  %v317 = vsel %vm240, %v233, 0
  %v320 = vsel %vm240, %v234, 0
  %v323 = vsel %vm240, %v235, 0
  %v326 = vsel %vm240, %v236, 0
  %v329 = vsel %vm240, %v237, 0
  %v332 = vsel %vm240, %v238, 0
  %v335 = vsel %vm240, %v239, 0
  %vm337 = vcmask 1041408
  %v339 = vsel %vm337, %v79, 0
  %341 = vmatpush.bf16.msra.mxu0 0
  %342 = vmatpush.bf16.msra.mxu0 0
  %343 = vmatpush.bf16.msra.mxu0 0
  %344 = vmatpush.bf16.msra.mxu0 0
  %345 = vmatpush.bf16.msra.mxu0 0
  %346 = vmatpush.bf16.msra.mxu0 0
  %347 = vmatpush.bf16.msra.mxu0 0
  %348 = vmatpush.bf16.msra.mxu0 %v339
  %349 = vmatmul.bf16.gmra.mxu0 %v242
  %v350 = vpop.f32.mrf.mxu0
  %v351 = vadd.f32 0.0, %v350
  %v352 = vpop.f32.mrf.mxu0
  %v353 = vadd.f32 0.0, %v352
  %354 = vmatmul.bf16.gmra.mxu0 %v245
  %v355 = vpop.f32.mrf.mxu0
  %v356 = vadd.f32 0.0, %v355
  %v357 = vpop.f32.mrf.mxu0
  %v358 = vadd.f32 0.0, %v357
  %359 = vmatmul.bf16.gmra.mxu0 %v248
  %v360 = vpop.f32.mrf.mxu0
  %v361 = vadd.f32 0.0, %v360
  %v362 = vpop.f32.mrf.mxu0
  %v363 = vadd.f32 0.0, %v362
  %364 = vmatmul.bf16.gmra.mxu0 %v251
  %v365 = vpop.f32.mrf.mxu0
  %v366 = vadd.f32 0.0, %v365
  %v367 = vpop.f32.mrf.mxu0
  %v368 = vadd.f32 0.0, %v367
  %369 = vmatmul.bf16.gmra.mxu0 %v254
  %v370 = vpop.f32.mrf.mxu0
  %v371 = vadd.f32 0.0, %v370
  %v372 = vpop.f32.mrf.mxu0
  %v373 = vadd.f32 0.0, %v372
  %374 = vmatmul.bf16.gmra.mxu0 %v257
  %v375 = vpop.f32.mrf.mxu0
  %v376 = vadd.f32 0.0, %v375
  %v377 = vpop.f32.mrf.mxu0
  %v378 = vadd.f32 0.0, %v377
  %379 = vmatmul.bf16.gmra.mxu0 %v260
  %v380 = vpop.f32.mrf.mxu0
  %v381 = vadd.f32 0.0, %v380
  %v382 = vpop.f32.mrf.mxu0
  %v383 = vadd.f32 0.0, %v382
  %384 = vmatmul.bf16.gmra.mxu0 %v263
  %v385 = vpop.f32.mrf.mxu0
  %v386 = vadd.f32 0.0, %v385
  %v387 = vpop.f32.mrf.mxu0
  %v388 = vadd.f32 0.0, %v387
  %389 = vmatmul.bf16.gmra.mxu0 %v266
  %v390 = vpop.f32.mrf.mxu0
  %v391 = vadd.f32 0.0, %v390
  %v392 = vpop.f32.mrf.mxu0
  %v393 = vadd.f32 0.0, %v392
  %394 = vmatmul.bf16.gmra.mxu0 %v269
  %v395 = vpop.f32.mrf.mxu0
  %v396 = vadd.f32 0.0, %v395
  %v397 = vpop.f32.mrf.mxu0
  %v398 = vadd.f32 0.0, %v397
  %399 = vmatmul.bf16.gmra.mxu0 %v272
  %v400 = vpop.f32.mrf.mxu0
  %v401 = vadd.f32 0.0, %v400
  %v402 = vpop.f32.mrf.mxu0
  %v403 = vadd.f32 0.0, %v402
  %404 = vmatmul.bf16.gmra.mxu0 %v275
  %v405 = vpop.f32.mrf.mxu0
  %v406 = vadd.f32 0.0, %v405
  %v407 = vpop.f32.mrf.mxu0
  %v408 = vadd.f32 0.0, %v407
  %409 = vmatmul.bf16.gmra.mxu0 %v278
  %v410 = vpop.f32.mrf.mxu0
  %v411 = vadd.f32 0.0, %v410
  %v412 = vpop.f32.mrf.mxu0
  %v413 = vadd.f32 0.0, %v412
  %414 = vmatmul.bf16.gmra.mxu0 %v281
  %v415 = vpop.f32.mrf.mxu0
  %v416 = vadd.f32 0.0, %v415
  %v417 = vpop.f32.mrf.mxu0
  %v418 = vadd.f32 0.0, %v417
  %419 = vmatmul.bf16.gmra.mxu0 %v284
  %v420 = vpop.f32.mrf.mxu0
  %v421 = vadd.f32 0.0, %v420
  %v422 = vpop.f32.mrf.mxu0
  %v423 = vadd.f32 0.0, %v422
  %424 = vmatmul.bf16.gmra.mxu0 %v287
  %v425 = vpop.f32.mrf.mxu0
  %v426 = vadd.f32 0.0, %v425
  %v427 = vpop.f32.mrf.mxu0
  %v428 = vadd.f32 0.0, %v427
  %429 = vmatmul.bf16.gmra.mxu0 %v290
  %v430 = vpop.f32.mrf.mxu0
  %v431 = vadd.f32 0.0, %v430
  %v432 = vpop.f32.mrf.mxu0
  %v433 = vadd.f32 0.0, %v432
  %434 = vmatmul.bf16.gmra.mxu0 %v293
  %v435 = vpop.f32.mrf.mxu0
  %v436 = vadd.f32 0.0, %v435
  %v437 = vpop.f32.mrf.mxu0
  %v438 = vadd.f32 0.0, %v437
  %439 = vmatmul.bf16.gmra.mxu0 %v296
  %v440 = vpop.f32.mrf.mxu0
  %v441 = vadd.f32 0.0, %v440
  %v442 = vpop.f32.mrf.mxu0
  %v443 = vadd.f32 0.0, %v442
  %444 = vmatmul.bf16.gmra.mxu0 %v299
  %v445 = vpop.f32.mrf.mxu0
  %v446 = vadd.f32 0.0, %v445
  %v447 = vpop.f32.mrf.mxu0
  %v448 = vadd.f32 0.0, %v447
  %449 = vmatmul.bf16.gmra.mxu0 %v302
  %v450 = vpop.f32.mrf.mxu0
  %v451 = vadd.f32 0.0, %v450
  %v452 = vpop.f32.mrf.mxu0
  %v453 = vadd.f32 0.0, %v452
  %454 = vmatmul.bf16.gmra.mxu0 %v305
  %v455 = vpop.f32.mrf.mxu0
  %v456 = vadd.f32 0.0, %v455
  %v457 = vpop.f32.mrf.mxu0
  %v458 = vadd.f32 0.0, %v457
  %459 = vmatmul.bf16.gmra.mxu0 %v308
  %v460 = vpop.f32.mrf.mxu0
  %v461 = vadd.f32 0.0, %v460
  %v462 = vpop.f32.mrf.mxu0
  %v463 = vadd.f32 0.0, %v462
  %464 = vmatmul.bf16.gmra.mxu0 %v311
  %v465 = vpop.f32.mrf.mxu0
  %v466 = vadd.f32 0.0, %v465
  %v467 = vpop.f32.mrf.mxu0
  %v468 = vadd.f32 0.0, %v467
  %469 = vmatmul.bf16.gmra.mxu0 %v314
  %v470 = vpop.f32.mrf.mxu0
  %v471 = vadd.f32 0.0, %v470
  %v472 = vpop.f32.mrf.mxu0
  %v473 = vadd.f32 0.0, %v472
  %474 = vmatmul.bf16.gmra.mxu0 %v317
  %v475 = vpop.f32.mrf.mxu0
  %v476 = vadd.f32 0.0, %v475
  %v477 = vpop.f32.mrf.mxu0
  %v478 = vadd.f32 0.0, %v477
  %479 = vmatmul.bf16.gmra.mxu0 %v320
  %v480 = vpop.f32.mrf.mxu0
  %v481 = vadd.f32 0.0, %v480
  %v482 = vpop.f32.mrf.mxu0
  %v483 = vadd.f32 0.0, %v482
  %484 = vmatmul.bf16.gmra.mxu0 %v323
  %v485 = vpop.f32.mrf.mxu0
  %v486 = vadd.f32 0.0, %v485
  %v487 = vpop.f32.mrf.mxu0
  %v488 = vadd.f32 0.0, %v487
  %489 = vmatmul.bf16.gmra.mxu0 %v326
  %v490 = vpop.f32.mrf.mxu0
  %v491 = vadd.f32 0.0, %v490
  %v492 = vpop.f32.mrf.mxu0
  %v493 = vadd.f32 0.0, %v492
  %494 = vmatmul.bf16.gmra.mxu0 %v329
  %v495 = vpop.f32.mrf.mxu0
  %v496 = vadd.f32 0.0, %v495
  %v497 = vpop.f32.mrf.mxu0
  %v498 = vadd.f32 0.0, %v497
  %499 = vmatmul.bf16.gmra.mxu0 %v332
  %v500 = vpop.f32.mrf.mxu0
  %v501 = vadd.f32 0.0, %v500
  %v502 = vpop.f32.mrf.mxu0
  %v503 = vadd.f32 0.0, %v502
  %504 = vmatmul.bf16.gmra.mxu0 %v335
  %v505 = vpop.f32.mrf.mxu0
  %v506 = vadd.f32 0.0, %v505
  %v507 = vpop.f32.mrf.mxu0
  %v508 = vadd.f32 0.0, %v507
  %509 = vdwg.mxu0
  %v510 = vpack.c.bf16 %v351, %v351
  %v511 = vpack.c.bf16 %v353, %v353
  %v512 = vpack.c.bf16 %v356, %v356
  %v513 = vpack.c.bf16 %v358, %v358
  %v514 = vpack.c.bf16 %v361, %v361
  %v515 = vpack.c.bf16 %v363, %v363
  %v516 = vpack.c.bf16 %v366, %v366
  %v517 = vpack.c.bf16 %v368, %v368
  %v518 = vpack.c.bf16 %v371, %v371
  %v519 = vpack.c.bf16 %v373, %v373
  %v520 = vpack.c.bf16 %v376, %v376
  %v521 = vpack.c.bf16 %v378, %v378
  %v522 = vpack.c.bf16 %v381, %v381
  %v523 = vpack.c.bf16 %v383, %v383
  %v524 = vpack.c.bf16 %v386, %v386
  %v525 = vpack.c.bf16 %v388, %v388
  %v526 = vpack.c.bf16 %v391, %v391
  %v527 = vpack.c.bf16 %v393, %v393
  %v528 = vpack.c.bf16 %v396, %v396
  %v529 = vpack.c.bf16 %v398, %v398
  %v530 = vpack.c.bf16 %v401, %v401
  %v531 = vpack.c.bf16 %v403, %v403
  %v532 = vpack.c.bf16 %v406, %v406
  %v533 = vpack.c.bf16 %v408, %v408
  %v534 = vpack.c.bf16 %v411, %v411
  %v535 = vpack.c.bf16 %v413, %v413
  %v536 = vpack.c.bf16 %v416, %v416
  %v537 = vpack.c.bf16 %v418, %v418
  %v538 = vpack.c.bf16 %v421, %v421
  %v539 = vpack.c.bf16 %v423, %v423
  %v540 = vpack.c.bf16 %v426, %v426
  %v541 = vpack.c.bf16 %v428, %v428
  %v542 = vpack.c.bf16 %v431, %v431
  %v543 = vpack.c.bf16 %v433, %v433
  %v544 = vpack.c.bf16 %v436, %v436
  %v545 = vpack.c.bf16 %v438, %v438
  %v546 = vpack.c.bf16 %v441, %v441
  %v547 = vpack.c.bf16 %v443, %v443
  %v548 = vpack.c.bf16 %v446, %v446
  %v549 = vpack.c.bf16 %v448, %v448
  %v550 = vpack.c.bf16 %v451, %v451
  %v551 = vpack.c.bf16 %v453, %v453
  %v552 = vpack.c.bf16 %v456, %v456
  %v553 = vpack.c.bf16 %v458, %v458
  %v554 = vpack.c.bf16 %v461, %v461
  %v555 = vpack.c.bf16 %v463, %v463
  %v556 = vpack.c.bf16 %v466, %v466
  %v557 = vpack.c.bf16 %v468, %v468
  %v558 = vpack.c.bf16 %v471, %v471
  %v559 = vpack.c.bf16 %v473, %v473
  %v560 = vpack.c.bf16 %v476, %v476
  %v561 = vpack.c.bf16 %v478, %v478
  %v562 = vpack.c.bf16 %v481, %v481
  %v563 = vpack.c.bf16 %v483, %v483
  %v564 = vpack.c.bf16 %v486, %v486
  %v565 = vpack.c.bf16 %v488, %v488
  %v566 = vpack.c.bf16 %v491, %v491
  %v567 = vpack.c.bf16 %v493, %v493
  %v568 = vpack.c.bf16 %v496, %v496
  %v569 = vpack.c.bf16 %v498, %v498
  %v570 = vpack.c.bf16 %v501, %v501
  %v571 = vpack.c.bf16 %v503, %v503
  %v572 = vpack.c.bf16 %v506, %v506
  %v573 = vpack.c.bf16 %v508, %v508
  %vm574 = vcmask 27648
  %575 = vst.msk [vmem:[%s2] sm:$0xf] %vm574, %v510
  %576 = vst.msk [vmem:[%s2 + $0x4] sm:$0xf] %vm574, %v511
  %577 = vst.msk [vmem:[%s2 + $0x8] sm:$0xf] %vm574, %v512
  %578 = vst.msk [vmem:[%s2 + $0xc] sm:$0xf] %vm574, %v513
  %579 = vst.msk [vmem:[%s2 + $0x10] sm:$0xf] %vm574, %v514
  %580 = vst.msk [vmem:[%s2 + $0x14] sm:$0xf] %vm574, %v515
  %581 = vst.msk [vmem:[%s2 + $0x18] sm:$0xf] %vm574, %v516
  %582 = vst.msk [vmem:[%s2 + $0x1c] sm:$0xf] %vm574, %v517
  %583 = vst.msk [vmem:[%s2 + $0x20] sm:$0xf] %vm574, %v518
  %584 = vst.msk [vmem:[%s2 + $0x24] sm:$0xf] %vm574, %v519
  %585 = vst.msk [vmem:[%s2 + $0x28] sm:$0xf] %vm574, %v520
  %586 = vst.msk [vmem:[%s2 + $0x2c] sm:$0xf] %vm574, %v521
  %587 = vst.msk [vmem:[%s2 + $0x30] sm:$0xf] %vm574, %v522
  %588 = vst.msk [vmem:[%s2 + $0x34] sm:$0xf] %vm574, %v523
  %589 = vst.msk [vmem:[%s2 + $0x38] sm:$0xf] %vm574, %v524
  %590 = vst.msk [vmem:[%s2 + $0x3c] sm:$0xf] %vm574, %v525
  %591 = vst.msk [vmem:[%s2 + $0x40] sm:$0xf] %vm574, %v526
  %592 = vst.msk [vmem:[%s2 + $0x44] sm:$0xf] %vm574, %v527
  %593 = vst.msk [vmem:[%s2 + $0x48] sm:$0xf] %vm574, %v528
  %594 = vst.msk [vmem:[%s2 + $0x4c] sm:$0xf] %vm574, %v529
  %595 = vst.msk [vmem:[%s2 + $0x50] sm:$0xf] %vm574, %v530
  %596 = vst.msk [vmem:[%s2 + $0x54] sm:$0xf] %vm574, %v531
  %597 = vst.msk [vmem:[%s2 + $0x58] sm:$0xf] %vm574, %v532
  %598 = vst.msk [vmem:[%s2 + $0x5c] sm:$0xf] %vm574, %v533
  %599 = vst.msk [vmem:[%s2 + $0x60] sm:$0xf] %vm574, %v534
  %600 = vst.msk [vmem:[%s2 + $0x64] sm:$0xf] %vm574, %v535
  %601 = vst.msk [vmem:[%s2 + $0x68] sm:$0xf] %vm574, %v536
  %602 = vst.msk [vmem:[%s2 + $0x6c] sm:$0xf] %vm574, %v537
  %603 = vst.msk [vmem:[%s2 + $0x70] sm:$0xf] %vm574, %v538
  %604 = vst.msk [vmem:[%s2 + $0x74] sm:$0xf] %vm574, %v539
  %605 = vst.msk [vmem:[%s2 + $0x78] sm:$0xf] %vm574, %v540
  %606 = vst.msk [vmem:[%s2 + $0x7c] sm:$0xf] %vm574, %v541
  %607 = vst.msk [vmem:[%s2 + $0x80] sm:$0xf] %vm574, %v542
  %608 = vst.msk [vmem:[%s2 + $0x84] sm:$0xf] %vm574, %v543
  %609 = vst.msk [vmem:[%s2 + $0x88] sm:$0xf] %vm574, %v544
  %610 = vst.msk [vmem:[%s2 + $0x8c] sm:$0xf] %vm574, %v545
  %611 = vst.msk [vmem:[%s2 + $0x90] sm:$0xf] %vm574, %v546
  %612 = vst.msk [vmem:[%s2 + $0x94] sm:$0xf] %vm574, %v547
  %613 = vst.msk [vmem:[%s2 + $0x98] sm:$0xf] %vm574, %v548
  %614 = vst.msk [vmem:[%s2 + $0x9c] sm:$0xf] %vm574, %v549
  %615 = vst.msk [vmem:[%s2 + $0xa0] sm:$0xf] %vm574, %v550
  %616 = vst.msk [vmem:[%s2 + $0xa4] sm:$0xf] %vm574, %v551
  %617 = vst.msk [vmem:[%s2 + $0xa8] sm:$0xf] %vm574, %v552
  %618 = vst.msk [vmem:[%s2 + $0xac] sm:$0xf] %vm574, %v553
  %619 = vst.msk [vmem:[%s2 + $0xb0] sm:$0xf] %vm574, %v554
  %620 = vst.msk [vmem:[%s2 + $0xb4] sm:$0xf] %vm574, %v555
  %621 = vst.msk [vmem:[%s2 + $0xb8] sm:$0xf] %vm574, %v556
  %622 = vst.msk [vmem:[%s2 + $0xbc] sm:$0xf] %vm574, %v557
  %623 = vst.msk [vmem:[%s2 + $0xc0] sm:$0xf] %vm574, %v558
  %624 = vst.msk [vmem:[%s2 + $0xc4] sm:$0xf] %vm574, %v559
  %625 = vst.msk [vmem:[%s2 + $0xc8] sm:$0xf] %vm574, %v560
  %626 = vst.msk [vmem:[%s2 + $0xcc] sm:$0xf] %vm574, %v561
  %627 = vst.msk [vmem:[%s2 + $0xd0] sm:$0xf] %vm574, %v562
  %628 = vst.msk [vmem:[%s2 + $0xd4] sm:$0xf] %vm574, %v563
  %629 = vst.msk [vmem:[%s2 + $0xd8] sm:$0xf] %vm574, %v564
  %630 = vst.msk [vmem:[%s2 + $0xdc] sm:$0xf] %vm574, %v565
  %631 = vst.msk [vmem:[%s2 + $0xe0] sm:$0xf] %vm574, %v566
  %632 = vst.msk [vmem:[%s2 + $0xe4] sm:$0xf] %vm574, %v567
  %633 = vst.msk [vmem:[%s2 + $0xe8] sm:$0xf] %vm574, %v568
  %634 = vst.msk [vmem:[%s2 + $0xec] sm:$0xf] %vm574, %v569
  %635 = vst.msk [vmem:[%s2 + $0xf0] sm:$0xf] %vm574, %v570
  %636 = vst.msk [vmem:[%s2 + $0xf4] sm:$0xf] %vm574, %v571
  %637 = vst.msk [vmem:[%s2 + $0xf8] sm:$0xf] %vm574, %v572
  %638 = vst.msk [vmem:[%s2 + $0xfc] sm:$0xf] %vm574, %v573
  %v639 = vsel %vm240, %v351, 0.0
  %v640 = vsel %vm240, %v353, 0.0
  %v641 = vadd.f32 %v639, %v640
  %v642 = vsel %vm240, %v356, 0.0
  %v643 = vadd.f32 %v641, %v642
  %v644 = vsel %vm240, %v358, 0.0
  %v645 = vadd.f32 %v643, %v644
  %v646 = vsel %vm240, %v361, 0.0
  %v647 = vadd.f32 %v645, %v646
  %v648 = vsel %vm240, %v363, 0.0
  %v649 = vadd.f32 %v647, %v648
  %v650 = vsel %vm240, %v366, 0.0
  %v651 = vadd.f32 %v649, %v650
  %v652 = vsel %vm240, %v368, 0.0
  %v653 = vadd.f32 %v651, %v652
  %v654 = vsel %vm240, %v371, 0.0
  %v655 = vadd.f32 %v653, %v654
  %v656 = vsel %vm240, %v373, 0.0
  %v657 = vadd.f32 %v655, %v656
  %v658 = vsel %vm240, %v376, 0.0
  %v659 = vadd.f32 %v657, %v658
  %v660 = vsel %vm240, %v378, 0.0
  %v661 = vadd.f32 %v659, %v660
  %v662 = vsel %vm240, %v381, 0.0
  %v663 = vadd.f32 %v661, %v662
  %v664 = vsel %vm240, %v383, 0.0
  %v665 = vadd.f32 %v663, %v664
  %v666 = vsel %vm240, %v386, 0.0
  %v667 = vadd.f32 %v665, %v666
  %v668 = vsel %vm240, %v388, 0.0
  %v669 = vadd.f32 %v667, %v668
  %v670 = vsel %vm240, %v391, 0.0
  %v671 = vadd.f32 %v669, %v670
  %v672 = vsel %vm240, %v393, 0.0
  %v673 = vadd.f32 %v671, %v672
  %v674 = vsel %vm240, %v396, 0.0
  %v675 = vadd.f32 %v673, %v674
  %v676 = vsel %vm240, %v398, 0.0
  %v677 = vadd.f32 %v675, %v676
  %v678 = vsel %vm240, %v401, 0.0
  %v679 = vadd.f32 %v677, %v678
  %v680 = vsel %vm240, %v403, 0.0
  %v681 = vadd.f32 %v679, %v680
  %v682 = vsel %vm240, %v406, 0.0
  %v683 = vadd.f32 %v681, %v682
  %v684 = vsel %vm240, %v408, 0.0
  %v685 = vadd.f32 %v683, %v684
  %v686 = vsel %vm240, %v411, 0.0
  %v687 = vadd.f32 %v685, %v686
  %v688 = vsel %vm240, %v413, 0.0
  %v689 = vadd.f32 %v687, %v688
  %v690 = vsel %vm240, %v416, 0.0
  %v691 = vadd.f32 %v689, %v690
  %v692 = vsel %vm240, %v418, 0.0
  %v693 = vadd.f32 %v691, %v692
  %v694 = vsel %vm240, %v421, 0.0
  %v695 = vadd.f32 %v693, %v694
  %v696 = vsel %vm240, %v423, 0.0
  %v697 = vadd.f32 %v695, %v696
  %v698 = vsel %vm240, %v426, 0.0
  %v699 = vadd.f32 %v697, %v698
  %v700 = vsel %vm240, %v428, 0.0
  %v701 = vadd.f32 %v699, %v700
  %v702 = vsel %vm240, %v431, 0.0
  %v703 = vadd.f32 %v701, %v702
  %v704 = vsel %vm240, %v433, 0.0
  %v705 = vadd.f32 %v703, %v704
  %v706 = vsel %vm240, %v436, 0.0
  %v707 = vadd.f32 %v705, %v706
  %v708 = vsel %vm240, %v438, 0.0
  %v709 = vadd.f32 %v707, %v708
  %v710 = vsel %vm240, %v441, 0.0
  %v711 = vadd.f32 %v709, %v710
  %v712 = vsel %vm240, %v443, 0.0
  %v713 = vadd.f32 %v711, %v712
  %v714 = vsel %vm240, %v446, 0.0
  %v715 = vadd.f32 %v713, %v714
  %v716 = vsel %vm240, %v448, 0.0
  %v717 = vadd.f32 %v715, %v716
  %v718 = vsel %vm240, %v451, 0.0
  %v719 = vadd.f32 %v717, %v718
  %v720 = vsel %vm240, %v453, 0.0
  %v721 = vadd.f32 %v719, %v720
  %v722 = vsel %vm240, %v456, 0.0
  %v723 = vadd.f32 %v721, %v722
  %v724 = vsel %vm240, %v458, 0.0
  %v725 = vadd.f32 %v723, %v724
  %v726 = vsel %vm240, %v461, 0.0
  %v727 = vadd.f32 %v725, %v726
  %v728 = vsel %vm240, %v463, 0.0
  %v729 = vadd.f32 %v727, %v728
  %v730 = vsel %vm240, %v466, 0.0
  %v731 = vadd.f32 %v729, %v730
  %v732 = vsel %vm240, %v468, 0.0
  %v733 = vadd.f32 %v731, %v732
  %v734 = vsel %vm240, %v471, 0.0
  %v735 = vadd.f32 %v733, %v734
  %v736 = vsel %vm240, %v473, 0.0
  %v737 = vadd.f32 %v735, %v736
  %v738 = vsel %vm240, %v476, 0.0
  %v739 = vadd.f32 %v737, %v738
  %v740 = vsel %vm240, %v478, 0.0
  %v741 = vadd.f32 %v739, %v740
  %v742 = vsel %vm240, %v481, 0.0
  %v743 = vadd.f32 %v741, %v742
  %v744 = vsel %vm240, %v483, 0.0
  %v745 = vadd.f32 %v743, %v744
  %v746 = vsel %vm240, %v486, 0.0
  %v747 = vadd.f32 %v745, %v746
  %v748 = vsel %vm240, %v488, 0.0
  %v749 = vadd.f32 %v747, %v748
  %v750 = vsel %vm240, %v491, 0.0
  %v751 = vadd.f32 %v749, %v750
  %v752 = vsel %vm240, %v493, 0.0
  %v753 = vadd.f32 %v751, %v752
  %v754 = vsel %vm240, %v496, 0.0
  %v755 = vadd.f32 %v753, %v754
  %v756 = vsel %vm240, %v498, 0.0
  %v757 = vadd.f32 %v755, %v756
  %v758 = vsel %vm240, %v501, 0.0
  %v759 = vadd.f32 %v757, %v758
  %v760 = vsel %vm240, %v503, 0.0
  %v761 = vadd.f32 %v759, %v760
  %v762 = vsel %vm240, %v506, 0.0
  %v763 = vadd.f32 %v761, %v762
  %v764 = vsel %vm240, %v508, 0.0
  %v765 = vadd.f32 %v763, %v764
  %v766 = vrot.slane %v765, 4
  %v767 = vadd.f32 %v765, %v766
  %v768 = vrot.slane %v767, 2
  %v769 = vadd.f32 %v767, %v768
  %v770 = vrot.slane %v769, 1
  %v771 = vadd.f32 %v769, %v770
  %vm772 = vcmask 24576
  %773 = vst.msk [vmem:[%s3] sm:$0x1] %vm772, %v771
  %v774 = vmul.f32 %v351, %v351
  %v775 = vmul.f32 %v353, %v353
  %v776 = vmul.f32 %v356, %v356
  %v777 = vmul.f32 %v358, %v358
  %v778 = vmul.f32 %v361, %v361
  %v779 = vmul.f32 %v363, %v363
  %v780 = vmul.f32 %v366, %v366
  %v781 = vmul.f32 %v368, %v368
  %v782 = vmul.f32 %v371, %v371
  %v783 = vmul.f32 %v373, %v373
  %v784 = vmul.f32 %v376, %v376
  %v785 = vmul.f32 %v378, %v378
  %v786 = vmul.f32 %v381, %v381
  %v787 = vmul.f32 %v383, %v383
  %v788 = vmul.f32 %v386, %v386
  %v789 = vmul.f32 %v388, %v388
  %v790 = vmul.f32 %v391, %v391
  %v791 = vmul.f32 %v393, %v393
  %v792 = vmul.f32 %v396, %v396
  %v793 = vmul.f32 %v398, %v398
  %v794 = vmul.f32 %v401, %v401
  %v795 = vmul.f32 %v403, %v403
  %v796 = vmul.f32 %v406, %v406
  %v797 = vmul.f32 %v408, %v408
  %v798 = vmul.f32 %v411, %v411
  %v799 = vmul.f32 %v413, %v413
  %v800 = vmul.f32 %v416, %v416
  %v801 = vmul.f32 %v418, %v418
  %v802 = vmul.f32 %v421, %v421
  %v803 = vmul.f32 %v423, %v423
  %v804 = vmul.f32 %v426, %v426
  %v805 = vmul.f32 %v428, %v428
  %v806 = vmul.f32 %v431, %v431
  %v807 = vmul.f32 %v433, %v433
  %v808 = vmul.f32 %v436, %v436
  %v809 = vmul.f32 %v438, %v438
  %v810 = vmul.f32 %v441, %v441
  %v811 = vmul.f32 %v443, %v443
  %v812 = vmul.f32 %v446, %v446
  %v813 = vmul.f32 %v448, %v448
  %v814 = vmul.f32 %v451, %v451
  %v815 = vmul.f32 %v453, %v453
  %v816 = vmul.f32 %v456, %v456
  %v817 = vmul.f32 %v458, %v458
  %v818 = vmul.f32 %v461, %v461
  %v819 = vmul.f32 %v463, %v463
  %v820 = vmul.f32 %v466, %v466
  %v821 = vmul.f32 %v468, %v468
  %v822 = vmul.f32 %v471, %v471
  %v823 = vmul.f32 %v473, %v473
  %v824 = vmul.f32 %v476, %v476
  %v825 = vmul.f32 %v478, %v478
  %v826 = vmul.f32 %v481, %v481
  %v827 = vmul.f32 %v483, %v483
  %v828 = vmul.f32 %v486, %v486
  %v829 = vmul.f32 %v488, %v488
  %v830 = vmul.f32 %v491, %v491
  %v831 = vmul.f32 %v493, %v493
  %v832 = vmul.f32 %v496, %v496
  %v833 = vmul.f32 %v498, %v498
  %v834 = vmul.f32 %v501, %v501
  %v835 = vmul.f32 %v503, %v503
  %v836 = vmul.f32 %v506, %v506
  %v837 = vmul.f32 %v508, %v508
  %v838 = vsel %vm240, %v774, 0.0
  %v839 = vsel %vm240, %v775, 0.0
  %v840 = vadd.f32 %v838, %v839
  %v841 = vsel %vm240, %v776, 0.0
  %v842 = vadd.f32 %v840, %v841
  %v843 = vsel %vm240, %v777, 0.0
  %v844 = vadd.f32 %v842, %v843
  %v845 = vsel %vm240, %v778, 0.0
  %v846 = vadd.f32 %v844, %v845
  %v847 = vsel %vm240, %v779, 0.0
  %v848 = vadd.f32 %v846, %v847
  %v849 = vsel %vm240, %v780, 0.0
  %v850 = vadd.f32 %v848, %v849
  %v851 = vsel %vm240, %v781, 0.0
  %v852 = vadd.f32 %v850, %v851
  %v853 = vsel %vm240, %v782, 0.0
  %v854 = vadd.f32 %v852, %v853
  %v855 = vsel %vm240, %v783, 0.0
  %v856 = vadd.f32 %v854, %v855
  %v857 = vsel %vm240, %v784, 0.0
  %v858 = vadd.f32 %v856, %v857
  %v859 = vsel %vm240, %v785, 0.0
  %v860 = vadd.f32 %v858, %v859
  %v861 = vsel %vm240, %v786, 0.0
  %v862 = vadd.f32 %v860, %v861
  %v863 = vsel %vm240, %v787, 0.0
  %v864 = vadd.f32 %v862, %v863
  %v865 = vsel %vm240, %v788, 0.0
  %v866 = vadd.f32 %v864, %v865
  %v867 = vsel %vm240, %v789, 0.0
  %v868 = vadd.f32 %v866, %v867
  %v869 = vsel %vm240, %v790, 0.0
  %v870 = vadd.f32 %v868, %v869
  %v871 = vsel %vm240, %v791, 0.0
  %v872 = vadd.f32 %v870, %v871
  %v873 = vsel %vm240, %v792, 0.0
  %v874 = vadd.f32 %v872, %v873
  %v875 = vsel %vm240, %v793, 0.0
  %v876 = vadd.f32 %v874, %v875
  %v877 = vsel %vm240, %v794, 0.0
  %v878 = vadd.f32 %v876, %v877
  %v879 = vsel %vm240, %v795, 0.0
  %v880 = vadd.f32 %v878, %v879
  %v881 = vsel %vm240, %v796, 0.0
  %v882 = vadd.f32 %v880, %v881
  %v883 = vsel %vm240, %v797, 0.0
  %v884 = vadd.f32 %v882, %v883
  %v885 = vsel %vm240, %v798, 0.0
  %v886 = vadd.f32 %v884, %v885
  %v887 = vsel %vm240, %v799, 0.0
  %v888 = vadd.f32 %v886, %v887
  %v889 = vsel %vm240, %v800, 0.0
  %v890 = vadd.f32 %v888, %v889
  %v891 = vsel %vm240, %v801, 0.0
  %v892 = vadd.f32 %v890, %v891
  %v893 = vsel %vm240, %v802, 0.0
  %v894 = vadd.f32 %v892, %v893
  %v895 = vsel %vm240, %v803, 0.0
  %v896 = vadd.f32 %v894, %v895
  %v897 = vsel %vm240, %v804, 0.0
  %v898 = vadd.f32 %v896, %v897
  %v899 = vsel %vm240, %v805, 0.0
  %v900 = vadd.f32 %v898, %v899
  %v901 = vsel %vm240, %v806, 0.0
  %v902 = vadd.f32 %v900, %v901
  %v903 = vsel %vm240, %v807, 0.0
  %v904 = vadd.f32 %v902, %v903
  %v905 = vsel %vm240, %v808, 0.0
  %v906 = vadd.f32 %v904, %v905
  %v907 = vsel %vm240, %v809, 0.0
  %v908 = vadd.f32 %v906, %v907
  %v909 = vsel %vm240, %v810, 0.0
  %v910 = vadd.f32 %v908, %v909
  %v911 = vsel %vm240, %v811, 0.0
  %v912 = vadd.f32 %v910, %v911
  %v913 = vsel %vm240, %v812, 0.0
  %v914 = vadd.f32 %v912, %v913
  %v915 = vsel %vm240, %v813, 0.0
  %v916 = vadd.f32 %v914, %v915
  %v917 = vsel %vm240, %v814, 0.0
  %v918 = vadd.f32 %v916, %v917
  %v919 = vsel %vm240, %v815, 0.0
  %v920 = vadd.f32 %v918, %v919
  %v921 = vsel %vm240, %v816, 0.0
  %v922 = vadd.f32 %v920, %v921
  %v923 = vsel %vm240, %v817, 0.0
  %v924 = vadd.f32 %v922, %v923
  %v925 = vsel %vm240, %v818, 0.0
  %v926 = vadd.f32 %v924, %v925
  %v927 = vsel %vm240, %v819, 0.0
  %v928 = vadd.f32 %v926, %v927
  %v929 = vsel %vm240, %v820, 0.0
  %v930 = vadd.f32 %v928, %v929
  %v931 = vsel %vm240, %v821, 0.0
  %v932 = vadd.f32 %v930, %v931
  %v933 = vsel %vm240, %v822, 0.0
  %v934 = vadd.f32 %v932, %v933
  %v935 = vsel %vm240, %v823, 0.0
  %v936 = vadd.f32 %v934, %v935
  %v937 = vsel %vm240, %v824, 0.0
  %v938 = vadd.f32 %v936, %v937
  %v939 = vsel %vm240, %v825, 0.0
  %v940 = vadd.f32 %v938, %v939
  %v941 = vsel %vm240, %v826, 0.0
  %v942 = vadd.f32 %v940, %v941
  %v943 = vsel %vm240, %v827, 0.0
  %v944 = vadd.f32 %v942, %v943
  %v945 = vsel %vm240, %v828, 0.0
  %v946 = vadd.f32 %v944, %v945
  %v947 = vsel %vm240, %v829, 0.0
  %v948 = vadd.f32 %v946, %v947
  %v949 = vsel %vm240, %v830, 0.0
  %v950 = vadd.f32 %v948, %v949
  %v951 = vsel %vm240, %v831, 0.0
  %v952 = vadd.f32 %v950, %v951
  %v953 = vsel %vm240, %v832, 0.0
  %v954 = vadd.f32 %v952, %v953
  %v955 = vsel %vm240, %v833, 0.0
  %v956 = vadd.f32 %v954, %v955
  %v957 = vsel %vm240, %v834, 0.0
  %v958 = vadd.f32 %v956, %v957
  %v959 = vsel %vm240, %v835, 0.0
  %v960 = vadd.f32 %v958, %v959
  %v961 = vsel %vm240, %v836, 0.0
  %v962 = vadd.f32 %v960, %v961
  %v963 = vsel %vm240, %v837, 0.0
  %v964 = vadd.f32 %v962, %v963
  %v965 = vrot.slane %v964, 4
  %v966 = vadd.f32 %v964, %v965
  %v967 = vrot.slane %v966, 2
  %v968 = vadd.f32 %v966, %v967
  %v969 = vrot.slane %v968, 1
  %v970 = vadd.f32 %v968, %v969
  %971 = vst.msk [vmem:[%s4] sm:$0x1] %vm772, %v970
  // Predicated region
  $region10: #{bottleneck_forward.4} parent=0 // pred_check
    _
  $region11: #{bottleneck_forward.4} parent=0 // pred_check_branch
    %973 = sbr.rel (0) target = $region13
  $region12: #{bottleneck_forward.4} parent=0 // pred_region
    _
  $region13: #{bottleneck_forward.4} parent=0 // pred_fallthru
    _
  // Predicated region
  $region14: #{bottleneck_forward.4} parent=0 // pred_check
    _
  $region15: #{bottleneck_forward.4} parent=0 // pred_check_branch
    %975 = sbr.rel (0) target = $region17
  $region16: #{bottleneck_forward.4} parent=0 // pred_region
    _
  $region17: #{bottleneck_forward.4} parent=0 // pred_fallthru
    _
  // Predicated region
  $region18: #{bottleneck_forward.4} parent=0 // pred_check
    _
  $region19: #{bottleneck_forward.4} parent=0 // pred_check_branch
    %977 = sbr.rel (0) target = $region21
  $region20: #{bottleneck_forward.4} parent=0 // pred_region
    _
  $region21: #{bottleneck_forward.4} parent=0 // pred_fallthru
    _
  // Predicated region
  $region22: #{bottleneck_forward.4} parent=0 // pred_check
    _
  $region23: #{bottleneck_forward.4} parent=0 // pred_check_branch
    %979 = sbr.rel (0) target = $region25
  $region24: #{bottleneck_forward.4} parent=0 // pred_region
    _
  $region25: #{bottleneck_forward.4} parent=0 // pred_fallthru
    _
  // Predicated region
  $region26: #{bottleneck_forward.4} parent=0 // pred_check
    _
  $region27: #{bottleneck_forward.4} parent=0 // pred_check_branch
    %981 = sbr.rel (0) target = $region29
  $region28: #{bottleneck_forward.4} parent=0 // pred_region
    _
  $region29: #{bottleneck_forward.4} parent=0 // pred_fallthru
    _
  // Predicated region
  $region30: #{bottleneck_forward.4} parent=0 // pred_check
    _
  $region31: #{bottleneck_forward.4} parent=0 // pred_check_branch
    %983 = sbr.rel (0) target = $region33
  $region32: #{bottleneck_forward.4} parent=0 // pred_region
    _
  $region33: #{bottleneck_forward.4} parent=0 // pred_fallthru
    _

// kernel: bottleneck_forward.6
$region0: #{bottleneck_forward.6}
  #allocation0 [shape = 'u32[]', space=smem, size = 0x4, offset = 0x4, fixed_abs, tag = 'smem constant byte address 0x4 - core index']
  #allocation1 [shape = 'u32[72,128]{1,0:T(1,128)}', space=vmem, size = 0x9000, scoped, tag = 'internal scratch']
  %s0 = inlined_call_operand.vmem [shape: bf16[512,4], index: 0, kind: input, shape index: {}]
  %s1 = inlined_call_operand.vmem [shape: f32[1,4], index: 1, kind: input, shape index: {}]
  %s2 = inlined_call_operand.vmem [shape: f32[1,4], index: 2, kind: input, shape index: {}]
  %s3 = inlined_call_operand.vmem [shape: bf16[4,16], index: 3, kind: input, shape index: {}]
  %s4 = inlined_call_operand.vmem [shape: bf16[512,16], index: 4, kind: output, shape index: {0}]
  %s5 = inlined_call_operand.vmem [shape: f32[1,1,16], index: 5, kind: output, shape index: {1}]
  %s6 = inlined_call_operand.vmem [shape: f32[1,1,16], index: 6, kind: output, shape index: {2}]
  %7 = xla_tuple %s4, %s5, %s6
  %s8 = sld [smem:[#allocation0]]
  $region42: #{bottleneck_forward.6} parent=0
    _
  %s10 = ssub.s32 1, %s8
  %s11 = scalar_select 0, %s10, %s8
  // Predicated region
  $region2: #{bottleneck_forward.6} parent=0 // pred_check
    _
  $region3: #{bottleneck_forward.6} parent=0 // pred_check_branch
    %13 = sbr.rel (0) target = $region5
  $region4: #{bottleneck_forward.6} parent=0 // pred_region
    _
  $region5: #{bottleneck_forward.6} parent=0 // pred_fallthru
    _
  // Predicated region
  $region6: #{bottleneck_forward.6} parent=0 // pred_check
    _
  $region7: #{bottleneck_forward.6} parent=0 // pred_check_branch
    %15 = sbr.rel (0) target = $region9
  $region8: #{bottleneck_forward.6} parent=0 // pred_region
    _
  $region9: #{bottleneck_forward.6} parent=0 // pred_fallthru
    _
  // Predicated region
  $region10: #{bottleneck_forward.6} parent=0 // pred_check
    _
  $region11: #{bottleneck_forward.6} parent=0 // pred_check_branch
    %17 = sbr.rel (0) target = $region13
  $region12: #{bottleneck_forward.6} parent=0 // pred_region
    _
  $region13: #{bottleneck_forward.6} parent=0 // pred_fallthru
    _
  // Predicated region
  $region14: #{bottleneck_forward.6} parent=0 // pred_check
    _
  $region15: #{bottleneck_forward.6} parent=0 // pred_check_branch
    %19 = sbr.rel (0) target = $region17
  $region16: #{bottleneck_forward.6} parent=0 // pred_region
    _
  $region17: #{bottleneck_forward.6} parent=0 // pred_fallthru
    _
  %v21 = vld [vmem:[%s0] sm:$0xf]
  %v22 = vld [vmem:[%s0 + $0x4] sm:$0xf]
  %v23 = vld [vmem:[%s0 + $0x8] sm:$0xf]
  %v24 = vld [vmem:[%s0 + $0xc] sm:$0xf]
  %v25 = vld [vmem:[%s0 + $0x10] sm:$0xf]
  %v26 = vld [vmem:[%s0 + $0x14] sm:$0xf]
  %v27 = vld [vmem:[%s0 + $0x18] sm:$0xf]
  %v28 = vld [vmem:[%s0 + $0x1c] sm:$0xf]
  %v29 = vld [vmem:[%s0 + $0x20] sm:$0xf]
  %v30 = vld [vmem:[%s0 + $0x24] sm:$0xf]
  %v31 = vld [vmem:[%s0 + $0x28] sm:$0xf]
  %v32 = vld [vmem:[%s0 + $0x2c] sm:$0xf]
  %v33 = vld [vmem:[%s0 + $0x30] sm:$0xf]
  %v34 = vld [vmem:[%s0 + $0x34] sm:$0xf]
  %v35 = vld [vmem:[%s0 + $0x38] sm:$0xf]
  %v36 = vld [vmem:[%s0 + $0x3c] sm:$0xf]
  %v37 = vld [vmem:[%s0 + $0x40] sm:$0xf]
  %v38 = vld [vmem:[%s0 + $0x44] sm:$0xf]
  %v39 = vld [vmem:[%s0 + $0x48] sm:$0xf]
  %v40 = vld [vmem:[%s0 + $0x4c] sm:$0xf]
  %v41 = vld [vmem:[%s0 + $0x50] sm:$0xf]
  %v42 = vld [vmem:[%s0 + $0x54] sm:$0xf]
  %v43 = vld [vmem:[%s0 + $0x58] sm:$0xf]
  %v44 = vld [vmem:[%s0 + $0x5c] sm:$0xf]
  %v45 = vld [vmem:[%s0 + $0x60] sm:$0xf]
  %v46 = vld [vmem:[%s0 + $0x64] sm:$0xf]
  %v47 = vld [vmem:[%s0 + $0x68] sm:$0xf]
  %v48 = vld [vmem:[%s0 + $0x6c] sm:$0xf]
  %v49 = vld [vmem:[%s0 + $0x70] sm:$0xf]
  %v50 = vld [vmem:[%s0 + $0x74] sm:$0xf]
  %v51 = vld [vmem:[%s0 + $0x78] sm:$0xf]
  %v52 = vld [vmem:[%s0 + $0x7c] sm:$0xf]
  %v53 = vld [vmem:[%s0 + $0x80] sm:$0xf]
  %v54 = vld [vmem:[%s0 + $0x84] sm:$0xf]
  %v55 = vld [vmem:[%s0 + $0x88] sm:$0xf]
  %v56 = vld [vmem:[%s0 + $0x8c] sm:$0xf]
  %v57 = vld [vmem:[%s0 + $0x90] sm:$0xf]
  %v58 = vld [vmem:[%s0 + $0x94] sm:$0xf]
  %v59 = vld [vmem:[%s0 + $0x98] sm:$0xf]
  %v60 = vld [vmem:[%s0 + $0x9c] sm:$0xf]
  %v61 = vld [vmem:[%s0 + $0xa0] sm:$0xf]
  %v62 = vld [vmem:[%s0 + $0xa4] sm:$0xf]
  %v63 = vld [vmem:[%s0 + $0xa8] sm:$0xf]
  %v64 = vld [vmem:[%s0 + $0xac] sm:$0xf]
  %v65 = vld [vmem:[%s0 + $0xb0] sm:$0xf]
  %v66 = vld [vmem:[%s0 + $0xb4] sm:$0xf]
  %v67 = vld [vmem:[%s0 + $0xb8] sm:$0xf]
  %v68 = vld [vmem:[%s0 + $0xbc] sm:$0xf]
  %v69 = vld [vmem:[%s0 + $0xc0] sm:$0xf]
  %v70 = vld [vmem:[%s0 + $0xc4] sm:$0xf]
  %v71 = vld [vmem:[%s0 + $0xc8] sm:$0xf]
  %v72 = vld [vmem:[%s0 + $0xcc] sm:$0xf]
  %v73 = vld [vmem:[%s0 + $0xd0] sm:$0xf]
  %v74 = vld [vmem:[%s0 + $0xd4] sm:$0xf]
  %v75 = vld [vmem:[%s0 + $0xd8] sm:$0xf]
  %v76 = vld [vmem:[%s0 + $0xdc] sm:$0xf]
  %v77 = vld [vmem:[%s0 + $0xe0] sm:$0xf]
  %v78 = vld [vmem:[%s0 + $0xe4] sm:$0xf]
  %v79 = vld [vmem:[%s0 + $0xe8] sm:$0xf]
  %v80 = vld [vmem:[%s0 + $0xec] sm:$0xf]
  %v81 = vld [vmem:[%s0 + $0xf0] sm:$0xf]
  %v82 = vld [vmem:[%s0 + $0xf4] sm:$0xf]
  %v83 = vld [vmem:[%s0 + $0xf8] sm:$0xf]
  %v84 = vld [vmem:[%s0 + $0xfc] sm:$0xf]
  %v85 = vunpack.c.l.bf16 %v21
  %v86 = vunpack.c.l.bf16 %v22
  %v87 = vunpack.c.l.bf16 %v23
  %v88 = vunpack.c.l.bf16 %v24
  %v89 = vunpack.c.l.bf16 %v25
  %v90 = vunpack.c.l.bf16 %v26
  %v91 = vunpack.c.l.bf16 %v27
  %v92 = vunpack.c.l.bf16 %v28
  %v93 = vunpack.c.l.bf16 %v29
  %v94 = vunpack.c.l.bf16 %v30
  %v95 = vunpack.c.l.bf16 %v31
  %v96 = vunpack.c.l.bf16 %v32
  %v97 = vunpack.c.l.bf16 %v33
  %v98 = vunpack.c.l.bf16 %v34
  %v99 = vunpack.c.l.bf16 %v35
  %v100 = vunpack.c.l.bf16 %v36
  %v101 = vunpack.c.l.bf16 %v37
  %v102 = vunpack.c.l.bf16 %v38
  %v103 = vunpack.c.l.bf16 %v39
  %v104 = vunpack.c.l.bf16 %v40
  %v105 = vunpack.c.l.bf16 %v41
  %v106 = vunpack.c.l.bf16 %v42
  %v107 = vunpack.c.l.bf16 %v43
  %v108 = vunpack.c.l.bf16 %v44
  %v109 = vunpack.c.l.bf16 %v45
  %v110 = vunpack.c.l.bf16 %v46
  %v111 = vunpack.c.l.bf16 %v47
  %v112 = vunpack.c.l.bf16 %v48
  %v113 = vunpack.c.l.bf16 %v49
  %v114 = vunpack.c.l.bf16 %v50
  %v115 = vunpack.c.l.bf16 %v51
  %v116 = vunpack.c.l.bf16 %v52
  %v117 = vunpack.c.l.bf16 %v53
  %v118 = vunpack.c.l.bf16 %v54
  %v119 = vunpack.c.l.bf16 %v55
  %v120 = vunpack.c.l.bf16 %v56
  %v121 = vunpack.c.l.bf16 %v57
  %v122 = vunpack.c.l.bf16 %v58
  %v123 = vunpack.c.l.bf16 %v59
  %v124 = vunpack.c.l.bf16 %v60
  %v125 = vunpack.c.l.bf16 %v61
  %v126 = vunpack.c.l.bf16 %v62
  %v127 = vunpack.c.l.bf16 %v63
  %v128 = vunpack.c.l.bf16 %v64
  %v129 = vunpack.c.l.bf16 %v65
  %v130 = vunpack.c.l.bf16 %v66
  %v131 = vunpack.c.l.bf16 %v67
  %v132 = vunpack.c.l.bf16 %v68
  %v133 = vunpack.c.l.bf16 %v69
  %v134 = vunpack.c.l.bf16 %v70
  %v135 = vunpack.c.l.bf16 %v71
  %v136 = vunpack.c.l.bf16 %v72
  %v137 = vunpack.c.l.bf16 %v73
  %v138 = vunpack.c.l.bf16 %v74
  %v139 = vunpack.c.l.bf16 %v75
  %v140 = vunpack.c.l.bf16 %v76
  %v141 = vunpack.c.l.bf16 %v77
  %v142 = vunpack.c.l.bf16 %v78
  %v143 = vunpack.c.l.bf16 %v79
  %v144 = vunpack.c.l.bf16 %v80
  %v145 = vunpack.c.l.bf16 %v81
  %v146 = vunpack.c.l.bf16 %v82
  %v147 = vunpack.c.l.bf16 %v83
  %v148 = vunpack.c.l.bf16 %v84
  %v149 = vld [vmem:[%s1] sm:$0x1]
  %v151 = vperm.slane %v149, 0
  %v153 = vmul.f32 %v85, %v151
  %v154 = vmul.f32 %v86, %v151
  %v155 = vmul.f32 %v87, %v151
  %v156 = vmul.f32 %v88, %v151
  %v157 = vmul.f32 %v89, %v151
  %v158 = vmul.f32 %v90, %v151
  %v159 = vmul.f32 %v91, %v151
  %v160 = vmul.f32 %v92, %v151
  %v161 = vmul.f32 %v93, %v151
  %v162 = vmul.f32 %v94, %v151
  %v163 = vmul.f32 %v95, %v151
  %v164 = vmul.f32 %v96, %v151
  %v165 = vmul.f32 %v97, %v151
  %v166 = vmul.f32 %v98, %v151
  %v167 = vmul.f32 %v99, %v151
  %v168 = vmul.f32 %v100, %v151
  %v169 = vmul.f32 %v101, %v151
  %v170 = vmul.f32 %v102, %v151
  %v171 = vmul.f32 %v103, %v151
  %v172 = vmul.f32 %v104, %v151
  %v173 = vmul.f32 %v105, %v151
  %v174 = vmul.f32 %v106, %v151
  %v175 = vmul.f32 %v107, %v151
  %v176 = vmul.f32 %v108, %v151
  %v177 = vmul.f32 %v109, %v151
  %v178 = vmul.f32 %v110, %v151
  %v179 = vmul.f32 %v111, %v151
  %v180 = vmul.f32 %v112, %v151
  %v181 = vmul.f32 %v113, %v151
  %v182 = vmul.f32 %v114, %v151
  %v183 = vmul.f32 %v115, %v151
  %v184 = vmul.f32 %v116, %v151
  %v185 = vmul.f32 %v117, %v151
  %v186 = vmul.f32 %v118, %v151
  %v187 = vmul.f32 %v119, %v151
  %v188 = vmul.f32 %v120, %v151
  %v189 = vmul.f32 %v121, %v151
  %v190 = vmul.f32 %v122, %v151
  %v191 = vmul.f32 %v123, %v151
  %v192 = vmul.f32 %v124, %v151
  %v193 = vmul.f32 %v125, %v151
  %v194 = vmul.f32 %v126, %v151
  %v195 = vmul.f32 %v127, %v151
  %v196 = vmul.f32 %v128, %v151
  %v197 = vmul.f32 %v129, %v151
  %v198 = vmul.f32 %v130, %v151
  %v199 = vmul.f32 %v131, %v151
  %v200 = vmul.f32 %v132, %v151
  %v201 = vmul.f32 %v133, %v151
  %v202 = vmul.f32 %v134, %v151
  %v203 = vmul.f32 %v135, %v151
  %v204 = vmul.f32 %v136, %v151
  %v205 = vmul.f32 %v137, %v151
  %v206 = vmul.f32 %v138, %v151
  %v207 = vmul.f32 %v139, %v151
  %v208 = vmul.f32 %v140, %v151
  %v209 = vmul.f32 %v141, %v151
  %v210 = vmul.f32 %v142, %v151
  %v211 = vmul.f32 %v143, %v151
  %v212 = vmul.f32 %v144, %v151
  %v213 = vmul.f32 %v145, %v151
  %v214 = vmul.f32 %v146, %v151
  %v215 = vmul.f32 %v147, %v151
  %v216 = vmul.f32 %v148, %v151
  %v217 = vld [vmem:[%s2] sm:$0x1]
  %v219 = vperm.slane %v217, 0
  %v221 = vadd.f32 %v153, %v219
  %v222 = vadd.f32 %v154, %v219
  %v223 = vadd.f32 %v155, %v219
  %v224 = vadd.f32 %v156, %v219
  %v225 = vadd.f32 %v157, %v219
  %v226 = vadd.f32 %v158, %v219
  %v227 = vadd.f32 %v159, %v219
  %v228 = vadd.f32 %v160, %v219
  %v229 = vadd.f32 %v161, %v219
  %v230 = vadd.f32 %v162, %v219
  %v231 = vadd.f32 %v163, %v219
  %v232 = vadd.f32 %v164, %v219
  %v233 = vadd.f32 %v165, %v219
  %v234 = vadd.f32 %v166, %v219
  %v235 = vadd.f32 %v167, %v219
  %v236 = vadd.f32 %v168, %v219
  %v237 = vadd.f32 %v169, %v219
  %v238 = vadd.f32 %v170, %v219
  %v239 = vadd.f32 %v171, %v219
  %v240 = vadd.f32 %v172, %v219
  %v241 = vadd.f32 %v173, %v219
  %v242 = vadd.f32 %v174, %v219
  %v243 = vadd.f32 %v175, %v219
  %v244 = vadd.f32 %v176, %v219
  %v245 = vadd.f32 %v177, %v219
  %v246 = vadd.f32 %v178, %v219
  %v247 = vadd.f32 %v179, %v219
  %v248 = vadd.f32 %v180, %v219
  %v249 = vadd.f32 %v181, %v219
  %v250 = vadd.f32 %v182, %v219
  %v251 = vadd.f32 %v183, %v219
  %v252 = vadd.f32 %v184, %v219
  %v253 = vadd.f32 %v185, %v219
  %v254 = vadd.f32 %v186, %v219
  %v255 = vadd.f32 %v187, %v219
  %v256 = vadd.f32 %v188, %v219
  %v257 = vadd.f32 %v189, %v219
  %v258 = vadd.f32 %v190, %v219
  %v259 = vadd.f32 %v191, %v219
  %v260 = vadd.f32 %v192, %v219
  %v261 = vadd.f32 %v193, %v219
  %v262 = vadd.f32 %v194, %v219
  %v263 = vadd.f32 %v195, %v219
  %v264 = vadd.f32 %v196, %v219
  %v265 = vadd.f32 %v197, %v219
  %v266 = vadd.f32 %v198, %v219
  %v267 = vadd.f32 %v199, %v219
  %v268 = vadd.f32 %v200, %v219
  %v269 = vadd.f32 %v201, %v219
  %v270 = vadd.f32 %v202, %v219
  %v271 = vadd.f32 %v203, %v219
  %v272 = vadd.f32 %v204, %v219
  %v273 = vadd.f32 %v205, %v219
  %v274 = vadd.f32 %v206, %v219
  %v275 = vadd.f32 %v207, %v219
  %v276 = vadd.f32 %v208, %v219
  %v277 = vadd.f32 %v209, %v219
  %v278 = vadd.f32 %v210, %v219
  %v279 = vadd.f32 %v211, %v219
  %v280 = vadd.f32 %v212, %v219
  %v281 = vadd.f32 %v213, %v219
  %v282 = vadd.f32 %v214, %v219
  %v283 = vadd.f32 %v215, %v219
  %v284 = vadd.f32 %v216, %v219
  %v285 = vmax.f32 %v221, 0.0
  %v286 = vmax.f32 %v222, 0.0
  %v287 = vmax.f32 %v223, 0.0
  %v288 = vmax.f32 %v224, 0.0
  %v289 = vmax.f32 %v225, 0.0
  %v290 = vmax.f32 %v226, 0.0
  %v291 = vmax.f32 %v227, 0.0
  %v292 = vmax.f32 %v228, 0.0
  %v293 = vmax.f32 %v229, 0.0
  %v294 = vmax.f32 %v230, 0.0
  %v295 = vmax.f32 %v231, 0.0
  %v296 = vmax.f32 %v232, 0.0
  %v297 = vmax.f32 %v233, 0.0
  %v298 = vmax.f32 %v234, 0.0
  %v299 = vmax.f32 %v235, 0.0
  %v300 = vmax.f32 %v236, 0.0
  %v301 = vmax.f32 %v237, 0.0
  %v302 = vmax.f32 %v238, 0.0
  %v303 = vmax.f32 %v239, 0.0
  %v304 = vmax.f32 %v240, 0.0
  %v305 = vmax.f32 %v241, 0.0
  %v306 = vmax.f32 %v242, 0.0
  %v307 = vmax.f32 %v243, 0.0
  %v308 = vmax.f32 %v244, 0.0
  %v309 = vmax.f32 %v245, 0.0
  %v310 = vmax.f32 %v246, 0.0
  %v311 = vmax.f32 %v247, 0.0
  %v312 = vmax.f32 %v248, 0.0
  %v313 = vmax.f32 %v249, 0.0
  %v314 = vmax.f32 %v250, 0.0
  %v315 = vmax.f32 %v251, 0.0
  %v316 = vmax.f32 %v252, 0.0
  %v317 = vmax.f32 %v253, 0.0
  %v318 = vmax.f32 %v254, 0.0
  %v319 = vmax.f32 %v255, 0.0
  %v320 = vmax.f32 %v256, 0.0
  %v321 = vmax.f32 %v257, 0.0
  %v322 = vmax.f32 %v258, 0.0
  %v323 = vmax.f32 %v259, 0.0
  %v324 = vmax.f32 %v260, 0.0
  %v325 = vmax.f32 %v261, 0.0
  %v326 = vmax.f32 %v262, 0.0
  %v327 = vmax.f32 %v263, 0.0
  %v328 = vmax.f32 %v264, 0.0
  %v329 = vmax.f32 %v265, 0.0
  %v330 = vmax.f32 %v266, 0.0
  %v331 = vmax.f32 %v267, 0.0
  %v332 = vmax.f32 %v268, 0.0
  %v333 = vmax.f32 %v269, 0.0
  %v334 = vmax.f32 %v270, 0.0
  %v335 = vmax.f32 %v271, 0.0
  %v336 = vmax.f32 %v272, 0.0
  %v337 = vmax.f32 %v273, 0.0
  %v338 = vmax.f32 %v274, 0.0
  %v339 = vmax.f32 %v275, 0.0
  %v340 = vmax.f32 %v276, 0.0
  %v341 = vmax.f32 %v277, 0.0
  %v342 = vmax.f32 %v278, 0.0
  %v343 = vmax.f32 %v279, 0.0
  %v344 = vmax.f32 %v280, 0.0
  %v345 = vmax.f32 %v281, 0.0
  %v346 = vmax.f32 %v282, 0.0
  %v347 = vmax.f32 %v283, 0.0
  %v348 = vmax.f32 %v284, 0.0
  %v349 = vpack.c.bf16 %v286, %v285
  %v350 = vpack.c.bf16 %v288, %v287
  %v351 = vpack.c.bf16 %v290, %v289
  %v352 = vpack.c.bf16 %v292, %v291
  %v353 = vpack.c.bf16 %v294, %v293
  %v354 = vpack.c.bf16 %v296, %v295
  %v355 = vpack.c.bf16 %v298, %v297
  %v356 = vpack.c.bf16 %v300, %v299
  %v357 = vpack.c.bf16 %v302, %v301
  %v358 = vpack.c.bf16 %v304, %v303
  %v359 = vpack.c.bf16 %v306, %v305
  %v360 = vpack.c.bf16 %v308, %v307
  %v361 = vpack.c.bf16 %v310, %v309
  %v362 = vpack.c.bf16 %v312, %v311
  %v363 = vpack.c.bf16 %v314, %v313
  %v364 = vpack.c.bf16 %v316, %v315
  %v365 = vpack.c.bf16 %v318, %v317
  %v366 = vpack.c.bf16 %v320, %v319
  %v367 = vpack.c.bf16 %v322, %v321
  %v368 = vpack.c.bf16 %v324, %v323
  %v369 = vpack.c.bf16 %v326, %v325
  %v370 = vpack.c.bf16 %v328, %v327
  %v371 = vpack.c.bf16 %v330, %v329
  %v372 = vpack.c.bf16 %v332, %v331
  %v373 = vpack.c.bf16 %v334, %v333
  %v374 = vpack.c.bf16 %v336, %v335
  %v375 = vpack.c.bf16 %v338, %v337
  %v376 = vpack.c.bf16 %v340, %v339
  %v377 = vpack.c.bf16 %v342, %v341
  %v378 = vpack.c.bf16 %v344, %v343
  %v379 = vpack.c.bf16 %v346, %v345
  %v380 = vpack.c.bf16 %v348, %v347
  %v381 = vld [vmem:[%s3] sm:$0x3]
  %vm382 = vcmask 31744
  %v384 = vsel %vm382, %v349, 0
  %v387 = vsel %vm382, %v350, 0
  %v390 = vsel %vm382, %v351, 0
  %v393 = vsel %vm382, %v352, 0
  %v396 = vsel %vm382, %v353, 0
  %v399 = vsel %vm382, %v354, 0
  %v402 = vsel %vm382, %v355, 0
  %v405 = vsel %vm382, %v356, 0
  %v408 = vsel %vm382, %v357, 0
  %v411 = vsel %vm382, %v358, 0
  %v414 = vsel %vm382, %v359, 0
  %v417 = vsel %vm382, %v360, 0
  %v420 = vsel %vm382, %v361, 0
  %v423 = vsel %vm382, %v362, 0
  %v426 = vsel %vm382, %v363, 0
  %v429 = vsel %vm382, %v364, 0
  %v432 = vsel %vm382, %v365, 0
  %v435 = vsel %vm382, %v366, 0
  %v438 = vsel %vm382, %v367, 0
  %v441 = vsel %vm382, %v368, 0
  %v444 = vsel %vm382, %v369, 0
  %v447 = vsel %vm382, %v370, 0
  %v450 = vsel %vm382, %v371, 0
  %v453 = vsel %vm382, %v372, 0
  %v456 = vsel %vm382, %v373, 0
  %v459 = vsel %vm382, %v374, 0
  %v462 = vsel %vm382, %v375, 0
  %v465 = vsel %vm382, %v376, 0
  %v468 = vsel %vm382, %v377, 0
  %v471 = vsel %vm382, %v378, 0
  %v474 = vsel %vm382, %v379, 0
  %v477 = vsel %vm382, %v380, 0
  %vm479 = vcmask 1041408
  %v481 = vsel %vm479, %v381, 0
  %483 = vmatpush.bf16.msra.mxu0 0
  %484 = vmatpush.bf16.msra.mxu0 0
  %485 = vmatpush.bf16.msra.mxu0 0
  %486 = vmatpush.bf16.msra.mxu0 0
  %487 = vmatpush.bf16.msra.mxu0 0
  %488 = vmatpush.bf16.msra.mxu0 0
  %489 = vmatpush.bf16.msra.mxu0 0
  %490 = vmatpush.bf16.msra.mxu0 %v481
  %491 = vmatmul.bf16.gmra.mxu0 %v384
  %v492 = vpop.f32.mrf.mxu0
  %v493 = vadd.f32 0.0, %v492
  %v494 = vpop.f32.mrf.mxu0
  %v495 = vadd.f32 0.0, %v494
  %496 = vmatmul.bf16.gmra.mxu0 %v387
  %v497 = vpop.f32.mrf.mxu0
  %v498 = vadd.f32 0.0, %v497
  %v499 = vpop.f32.mrf.mxu0
  %v500 = vadd.f32 0.0, %v499
  %501 = vmatmul.bf16.gmra.mxu0 %v390
  %v502 = vpop.f32.mrf.mxu0
  %v503 = vadd.f32 0.0, %v502
  %v504 = vpop.f32.mrf.mxu0
  %v505 = vadd.f32 0.0, %v504
  %506 = vmatmul.bf16.gmra.mxu0 %v393
  %v507 = vpop.f32.mrf.mxu0
  %v508 = vadd.f32 0.0, %v507
  %v509 = vpop.f32.mrf.mxu0
  %v510 = vadd.f32 0.0, %v509
  %511 = vmatmul.bf16.gmra.mxu0 %v396
  %v512 = vpop.f32.mrf.mxu0
  %v513 = vadd.f32 0.0, %v512
  %v514 = vpop.f32.mrf.mxu0
  %v515 = vadd.f32 0.0, %v514
  %516 = vmatmul.bf16.gmra.mxu0 %v399
  %v517 = vpop.f32.mrf.mxu0
  %v518 = vadd.f32 0.0, %v517
  %v519 = vpop.f32.mrf.mxu0
  %v520 = vadd.f32 0.0, %v519
  %521 = vmatmul.bf16.gmra.mxu0 %v402
  %v522 = vpop.f32.mrf.mxu0
  %v523 = vadd.f32 0.0, %v522
  %v524 = vpop.f32.mrf.mxu0
  %v525 = vadd.f32 0.0, %v524
  %526 = vmatmul.bf16.gmra.mxu0 %v405
  %v527 = vpop.f32.mrf.mxu0
  %v528 = vadd.f32 0.0, %v527
  %v529 = vpop.f32.mrf.mxu0
  %v530 = vadd.f32 0.0, %v529
  %531 = vmatmul.bf16.gmra.mxu0 %v408
  %v532 = vpop.f32.mrf.mxu0
  %v533 = vadd.f32 0.0, %v532
  %v534 = vpop.f32.mrf.mxu0
  %v535 = vadd.f32 0.0, %v534
  %536 = vmatmul.bf16.gmra.mxu0 %v411
  %v537 = vpop.f32.mrf.mxu0
  %v538 = vadd.f32 0.0, %v537
  %v539 = vpop.f32.mrf.mxu0
  %v540 = vadd.f32 0.0, %v539
  %541 = vmatmul.bf16.gmra.mxu0 %v414
  %v542 = vpop.f32.mrf.mxu0
  %v543 = vadd.f32 0.0, %v542
  %v544 = vpop.f32.mrf.mxu0
  %v545 = vadd.f32 0.0, %v544
  %546 = vmatmul.bf16.gmra.mxu0 %v417
  %v547 = vpop.f32.mrf.mxu0
  %v548 = vadd.f32 0.0, %v547
  %v549 = vpop.f32.mrf.mxu0
  %v550 = vadd.f32 0.0, %v549
  %551 = vmatmul.bf16.gmra.mxu0 %v420
  %v552 = vpop.f32.mrf.mxu0
  %v553 = vadd.f32 0.0, %v552
  %v554 = vpop.f32.mrf.mxu0
  %v555 = vadd.f32 0.0, %v554
  %556 = vmatmul.bf16.gmra.mxu0 %v423
  %v557 = vpop.f32.mrf.mxu0
  %v558 = vadd.f32 0.0, %v557
  %v559 = vpop.f32.mrf.mxu0
  %v560 = vadd.f32 0.0, %v559
  %561 = vmatmul.bf16.gmra.mxu0 %v426
  %v562 = vpop.f32.mrf.mxu0
  %v563 = vadd.f32 0.0, %v562
  %v564 = vpop.f32.mrf.mxu0
  %v565 = vadd.f32 0.0, %v564
  %566 = vmatmul.bf16.gmra.mxu0 %v429
  %v567 = vpop.f32.mrf.mxu0
  %v568 = vadd.f32 0.0, %v567
  %v569 = vpop.f32.mrf.mxu0
  %v570 = vadd.f32 0.0, %v569
  %571 = vmatmul.bf16.gmra.mxu0 %v432
  %v572 = vpop.f32.mrf.mxu0
  %v573 = vadd.f32 0.0, %v572
  %v574 = vpop.f32.mrf.mxu0
  %v575 = vadd.f32 0.0, %v574
  %576 = vmatmul.bf16.gmra.mxu0 %v435
  %v577 = vpop.f32.mrf.mxu0
  %v578 = vadd.f32 0.0, %v577
  %v579 = vpop.f32.mrf.mxu0
  %v580 = vadd.f32 0.0, %v579
  %581 = vmatmul.bf16.gmra.mxu0 %v438
  %v582 = vpop.f32.mrf.mxu0
  %v583 = vadd.f32 0.0, %v582
  %v584 = vpop.f32.mrf.mxu0
  %v585 = vadd.f32 0.0, %v584
  %586 = vmatmul.bf16.gmra.mxu0 %v441
  %v587 = vpop.f32.mrf.mxu0
  %v588 = vadd.f32 0.0, %v587
  %v589 = vpop.f32.mrf.mxu0
  %v590 = vadd.f32 0.0, %v589
  %591 = vmatmul.bf16.gmra.mxu0 %v444
  %v592 = vpop.f32.mrf.mxu0
  %v593 = vadd.f32 0.0, %v592
  %v594 = vpop.f32.mrf.mxu0
  %v595 = vadd.f32 0.0, %v594
  %596 = vmatmul.bf16.gmra.mxu0 %v447
  %v597 = vpop.f32.mrf.mxu0
  %v598 = vadd.f32 0.0, %v597
  %v599 = vpop.f32.mrf.mxu0
  %v600 = vadd.f32 0.0, %v599
  %601 = vmatmul.bf16.gmra.mxu0 %v450
  %v602 = vpop.f32.mrf.mxu0
  %v603 = vadd.f32 0.0, %v602
  %v604 = vpop.f32.mrf.mxu0
  %v605 = vadd.f32 0.0, %v604
  %606 = vmatmul.bf16.gmra.mxu0 %v453
  %v607 = vpop.f32.mrf.mxu0
  %v608 = vadd.f32 0.0, %v607
  %v609 = vpop.f32.mrf.mxu0
  %v610 = vadd.f32 0.0, %v609
  %611 = vmatmul.bf16.gmra.mxu0 %v456
  %v612 = vpop.f32.mrf.mxu0
  %v613 = vadd.f32 0.0, %v612
  %v614 = vpop.f32.mrf.mxu0
  %v615 = vadd.f32 0.0, %v614
  %616 = vmatmul.bf16.gmra.mxu0 %v459
  %v617 = vpop.f32.mrf.mxu0
  %v618 = vadd.f32 0.0, %v617
  %v619 = vpop.f32.mrf.mxu0
  %v620 = vadd.f32 0.0, %v619
  %621 = vmatmul.bf16.gmra.mxu0 %v462
  %v622 = vpop.f32.mrf.mxu0
  %v623 = vadd.f32 0.0, %v622
  %v624 = vpop.f32.mrf.mxu0
  %v625 = vadd.f32 0.0, %v624
  %626 = vmatmul.bf16.gmra.mxu0 %v465
  %v627 = vpop.f32.mrf.mxu0
  %v628 = vadd.f32 0.0, %v627
  %v629 = vpop.f32.mrf.mxu0
  %v630 = vadd.f32 0.0, %v629
  %631 = vmatmul.bf16.gmra.mxu0 %v468
  %v632 = vpop.f32.mrf.mxu0
  %v633 = vadd.f32 0.0, %v632
  %v634 = vpop.f32.mrf.mxu0
  %v635 = vadd.f32 0.0, %v634
  %636 = vmatmul.bf16.gmra.mxu0 %v471
  %v637 = vpop.f32.mrf.mxu0
  %v638 = vadd.f32 0.0, %v637
  %v639 = vpop.f32.mrf.mxu0
  %v640 = vadd.f32 0.0, %v639
  %641 = vmatmul.bf16.gmra.mxu0 %v474
  %v642 = vpop.f32.mrf.mxu0
  %v643 = vadd.f32 0.0, %v642
  %v644 = vpop.f32.mrf.mxu0
  %v645 = vadd.f32 0.0, %v644
  %646 = vmatmul.bf16.gmra.mxu0 %v477
  %v647 = vpop.f32.mrf.mxu0
  %v648 = vadd.f32 0.0, %v647
  %v649 = vpop.f32.mrf.mxu0
  %v650 = vadd.f32 0.0, %v649
  %651 = vdwg.mxu0
  %v652 = vpack.c.bf16 %v493, %v493
  %v653 = vpack.c.bf16 %v495, %v495
  %v654 = vpack.c.bf16 %v498, %v498
  %v655 = vpack.c.bf16 %v500, %v500
  %v656 = vpack.c.bf16 %v503, %v503
  %v657 = vpack.c.bf16 %v505, %v505
  %v658 = vpack.c.bf16 %v508, %v508
  %v659 = vpack.c.bf16 %v510, %v510
  %v660 = vpack.c.bf16 %v513, %v513
  %v661 = vpack.c.bf16 %v515, %v515
  %v662 = vpack.c.bf16 %v518, %v518
  %v663 = vpack.c.bf16 %v520, %v520
  %v664 = vpack.c.bf16 %v523, %v523
  %v665 = vpack.c.bf16 %v525, %v525
  %v666 = vpack.c.bf16 %v528, %v528
  %v667 = vpack.c.bf16 %v530, %v530
  %v668 = vpack.c.bf16 %v533, %v533
  %v669 = vpack.c.bf16 %v535, %v535
  %v670 = vpack.c.bf16 %v538, %v538
  %v671 = vpack.c.bf16 %v540, %v540
  %v672 = vpack.c.bf16 %v543, %v543
  %v673 = vpack.c.bf16 %v545, %v545
  %v674 = vpack.c.bf16 %v548, %v548
  %v675 = vpack.c.bf16 %v550, %v550
  %v676 = vpack.c.bf16 %v553, %v553
  %v677 = vpack.c.bf16 %v555, %v555
  %v678 = vpack.c.bf16 %v558, %v558
  %v679 = vpack.c.bf16 %v560, %v560
  %v680 = vpack.c.bf16 %v563, %v563
  %v681 = vpack.c.bf16 %v565, %v565
  %v682 = vpack.c.bf16 %v568, %v568
  %v683 = vpack.c.bf16 %v570, %v570
  %v684 = vpack.c.bf16 %v573, %v573
  %v685 = vpack.c.bf16 %v575, %v575
  %v686 = vpack.c.bf16 %v578, %v578
  %v687 = vpack.c.bf16 %v580, %v580
  %v688 = vpack.c.bf16 %v583, %v583
  %v689 = vpack.c.bf16 %v585, %v585
  %v690 = vpack.c.bf16 %v588, %v588
  %v691 = vpack.c.bf16 %v590, %v590
  %v692 = vpack.c.bf16 %v593, %v593
  %v693 = vpack.c.bf16 %v595, %v595
  %v694 = vpack.c.bf16 %v598, %v598
  %v695 = vpack.c.bf16 %v600, %v600
  %v696 = vpack.c.bf16 %v603, %v603
  %v697 = vpack.c.bf16 %v605, %v605
  %v698 = vpack.c.bf16 %v608, %v608
  %v699 = vpack.c.bf16 %v610, %v610
  %v700 = vpack.c.bf16 %v613, %v613
  %v701 = vpack.c.bf16 %v615, %v615
  %v702 = vpack.c.bf16 %v618, %v618
  %v703 = vpack.c.bf16 %v620, %v620
  %v704 = vpack.c.bf16 %v623, %v623
  %v705 = vpack.c.bf16 %v625, %v625
  %v706 = vpack.c.bf16 %v628, %v628
  %v707 = vpack.c.bf16 %v630, %v630
  %v708 = vpack.c.bf16 %v633, %v633
  %v709 = vpack.c.bf16 %v635, %v635
  %v710 = vpack.c.bf16 %v638, %v638
  %v711 = vpack.c.bf16 %v640, %v640
  %v712 = vpack.c.bf16 %v643, %v643
  %v713 = vpack.c.bf16 %v645, %v645
  %v714 = vpack.c.bf16 %v648, %v648
  %v715 = vpack.c.bf16 %v650, %v650
  %vm716 = vcmask 125952
  %717 = vst.msk [vmem:[%s4] sm:$0xf] %vm716, %v652
  %718 = vst.msk [vmem:[%s4 + $0x4] sm:$0xf] %vm716, %v653
  %719 = vst.msk [vmem:[%s4 + $0x8] sm:$0xf] %vm716, %v654
  %720 = vst.msk [vmem:[%s4 + $0xc] sm:$0xf] %vm716, %v655
  %721 = vst.msk [vmem:[%s4 + $0x10] sm:$0xf] %vm716, %v656
  %722 = vst.msk [vmem:[%s4 + $0x14] sm:$0xf] %vm716, %v657
  %723 = vst.msk [vmem:[%s4 + $0x18] sm:$0xf] %vm716, %v658
  %724 = vst.msk [vmem:[%s4 + $0x1c] sm:$0xf] %vm716, %v659
  %725 = vst.msk [vmem:[%s4 + $0x20] sm:$0xf] %vm716, %v660
  %726 = vst.msk [vmem:[%s4 + $0x24] sm:$0xf] %vm716, %v661
  %727 = vst.msk [vmem:[%s4 + $0x28] sm:$0xf] %vm716, %v662
  %728 = vst.msk [vmem:[%s4 + $0x2c] sm:$0xf] %vm716, %v663
  %729 = vst.msk [vmem:[%s4 + $0x30] sm:$0xf] %vm716, %v664
  %730 = vst.msk [vmem:[%s4 + $0x34] sm:$0xf] %vm716, %v665
  %731 = vst.msk [vmem:[%s4 + $0x38] sm:$0xf] %vm716, %v666
  %732 = vst.msk [vmem:[%s4 + $0x3c] sm:$0xf] %vm716, %v667
  %733 = vst.msk [vmem:[%s4 + $0x40] sm:$0xf] %vm716, %v668
  %734 = vst.msk [vmem:[%s4 + $0x44] sm:$0xf] %vm716, %v669
  %735 = vst.msk [vmem:[%s4 + $0x48] sm:$0xf] %vm716, %v670
  %736 = vst.msk [vmem:[%s4 + $0x4c] sm:$0xf] %vm716, %v671
  %737 = vst.msk [vmem:[%s4 + $0x50] sm:$0xf] %vm716, %v672
  %738 = vst.msk [vmem:[%s4 + $0x54] sm:$0xf] %vm716, %v673
  %739 = vst.msk [vmem:[%s4 + $0x58] sm:$0xf] %vm716, %v674
  %740 = vst.msk [vmem:[%s4 + $0x5c] sm:$0xf] %vm716, %v675
  %741 = vst.msk [vmem:[%s4 + $0x60] sm:$0xf] %vm716, %v676
  %742 = vst.msk [vmem:[%s4 + $0x64] sm:$0xf] %vm716, %v677
  %743 = vst.msk [vmem:[%s4 + $0x68] sm:$0xf] %vm716, %v678
  %744 = vst.msk [vmem:[%s4 + $0x6c] sm:$0xf] %vm716, %v679
  %745 = vst.msk [vmem:[%s4 + $0x70] sm:$0xf] %vm716, %v680
  %746 = vst.msk [vmem:[%s4 + $0x74] sm:$0xf] %vm716, %v681
  %747 = vst.msk [vmem:[%s4 + $0x78] sm:$0xf] %vm716, %v682
  %748 = vst.msk [vmem:[%s4 + $0x7c] sm:$0xf] %vm716, %v683
  %749 = vst.msk [vmem:[%s4 + $0x80] sm:$0xf] %vm716, %v684
  %750 = vst.msk [vmem:[%s4 + $0x84] sm:$0xf] %vm716, %v685
  %751 = vst.msk [vmem:[%s4 + $0x88] sm:$0xf] %vm716, %v686
  %752 = vst.msk [vmem:[%s4 + $0x8c] sm:$0xf] %vm716, %v687
  %753 = vst.msk [vmem:[%s4 + $0x90] sm:$0xf] %vm716, %v688
  %754 = vst.msk [vmem:[%s4 + $0x94] sm:$0xf] %vm716, %v689
  %755 = vst.msk [vmem:[%s4 + $0x98] sm:$0xf] %vm716, %v690
  %756 = vst.msk [vmem:[%s4 + $0x9c] sm:$0xf] %vm716, %v691
  %757 = vst.msk [vmem:[%s4 + $0xa0] sm:$0xf] %vm716, %v692
  %758 = vst.msk [vmem:[%s4 + $0xa4] sm:$0xf] %vm716, %v693
  %759 = vst.msk [vmem:[%s4 + $0xa8] sm:$0xf] %vm716, %v694
  %760 = vst.msk [vmem:[%s4 + $0xac] sm:$0xf] %vm716, %v695
  %761 = vst.msk [vmem:[%s4 + $0xb0] sm:$0xf] %vm716, %v696
  %762 = vst.msk [vmem:[%s4 + $0xb4] sm:$0xf] %vm716, %v697
  %763 = vst.msk [vmem:[%s4 + $0xb8] sm:$0xf] %vm716, %v698
  %764 = vst.msk [vmem:[%s4 + $0xbc] sm:$0xf] %vm716, %v699
  %765 = vst.msk [vmem:[%s4 + $0xc0] sm:$0xf] %vm716, %v700
  %766 = vst.msk [vmem:[%s4 + $0xc4] sm:$0xf] %vm716, %v701
  %767 = vst.msk [vmem:[%s4 + $0xc8] sm:$0xf] %vm716, %v702
  %768 = vst.msk [vmem:[%s4 + $0xcc] sm:$0xf] %vm716, %v703
  %769 = vst.msk [vmem:[%s4 + $0xd0] sm:$0xf] %vm716, %v704
  %770 = vst.msk [vmem:[%s4 + $0xd4] sm:$0xf] %vm716, %v705
  %771 = vst.msk [vmem:[%s4 + $0xd8] sm:$0xf] %vm716, %v706
  %772 = vst.msk [vmem:[%s4 + $0xdc] sm:$0xf] %vm716, %v707
  %773 = vst.msk [vmem:[%s4 + $0xe0] sm:$0xf] %vm716, %v708
  %774 = vst.msk [vmem:[%s4 + $0xe4] sm:$0xf] %vm716, %v709
  %775 = vst.msk [vmem:[%s4 + $0xe8] sm:$0xf] %vm716, %v710
  %776 = vst.msk [vmem:[%s4 + $0xec] sm:$0xf] %vm716, %v711
  %777 = vst.msk [vmem:[%s4 + $0xf0] sm:$0xf] %vm716, %v712
  %778 = vst.msk [vmem:[%s4 + $0xf4] sm:$0xf] %vm716, %v713
  %779 = vst.msk [vmem:[%s4 + $0xf8] sm:$0xf] %vm716, %v714
  %780 = vst.msk [vmem:[%s4 + $0xfc] sm:$0xf] %vm716, %v715
  %vm781 = vcmask 130048
  %v782 = vsel %vm781, %v493, 0.0
  %v783 = vsel %vm781, %v495, 0.0
  %v784 = vadd.f32 %v782, %v783
  %v785 = vsel %vm781, %v498, 0.0
  %v786 = vadd.f32 %v784, %v785
  %v787 = vsel %vm781, %v500, 0.0
  %v788 = vadd.f32 %v786, %v787
  %v789 = vsel %vm781, %v503, 0.0
  %v790 = vadd.f32 %v788, %v789
  %v791 = vsel %vm781, %v505, 0.0
  %v792 = vadd.f32 %v790, %v791
  %v793 = vsel %vm781, %v508, 0.0
  %v794 = vadd.f32 %v792, %v793
  %v795 = vsel %vm781, %v510, 0.0
  %v796 = vadd.f32 %v794, %v795
  %v797 = vsel %vm781, %v513, 0.0
  %v798 = vadd.f32 %v796, %v797
  %v799 = vsel %vm781, %v515, 0.0
  %v800 = vadd.f32 %v798, %v799
  %v801 = vsel %vm781, %v518, 0.0
  %v802 = vadd.f32 %v800, %v801
  %v803 = vsel %vm781, %v520, 0.0
  %v804 = vadd.f32 %v802, %v803
  %v805 = vsel %vm781, %v523, 0.0
  %v806 = vadd.f32 %v804, %v805
  %v807 = vsel %vm781, %v525, 0.0
  %v808 = vadd.f32 %v806, %v807
  %v809 = vsel %vm781, %v528, 0.0
  %v810 = vadd.f32 %v808, %v809
  %v811 = vsel %vm781, %v530, 0.0
  %v812 = vadd.f32 %v810, %v811
  %v813 = vsel %vm781, %v533, 0.0
  %v814 = vadd.f32 %v812, %v813
  %v815 = vsel %vm781, %v535, 0.0
  %v816 = vadd.f32 %v814, %v815
  %v817 = vsel %vm781, %v538, 0.0
  %v818 = vadd.f32 %v816, %v817
  %v819 = vsel %vm781, %v540, 0.0
  %v820 = vadd.f32 %v818, %v819
  %v821 = vsel %vm781, %v543, 0.0
  %v822 = vadd.f32 %v820, %v821
  %v823 = vsel %vm781, %v545, 0.0
  %v824 = vadd.f32 %v822, %v823
  %v825 = vsel %vm781, %v548, 0.0
  %v826 = vadd.f32 %v824, %v825
  %v827 = vsel %vm781, %v550, 0.0
  %v828 = vadd.f32 %v826, %v827
  %v829 = vsel %vm781, %v553, 0.0
  %v830 = vadd.f32 %v828, %v829
  %v831 = vsel %vm781, %v555, 0.0
  %v832 = vadd.f32 %v830, %v831
  %v833 = vsel %vm781, %v558, 0.0
  %v834 = vadd.f32 %v832, %v833
  %v835 = vsel %vm781, %v560, 0.0
  %v836 = vadd.f32 %v834, %v835
  %v837 = vsel %vm781, %v563, 0.0
  %v838 = vadd.f32 %v836, %v837
  %v839 = vsel %vm781, %v565, 0.0
  %v840 = vadd.f32 %v838, %v839
  %v841 = vsel %vm781, %v568, 0.0
  %v842 = vadd.f32 %v840, %v841
  %v843 = vsel %vm781, %v570, 0.0
  %v844 = vadd.f32 %v842, %v843
  %v845 = vsel %vm781, %v573, 0.0
  %v846 = vadd.f32 %v844, %v845
  %v847 = vsel %vm781, %v575, 0.0
  %v848 = vadd.f32 %v846, %v847
  %v849 = vsel %vm781, %v578, 0.0
  %v850 = vadd.f32 %v848, %v849
  %v851 = vsel %vm781, %v580, 0.0
  %v852 = vadd.f32 %v850, %v851
  %v853 = vsel %vm781, %v583, 0.0
  %v854 = vadd.f32 %v852, %v853
  %v855 = vsel %vm781, %v585, 0.0
  %v856 = vadd.f32 %v854, %v855
  %v857 = vsel %vm781, %v588, 0.0
  %v858 = vadd.f32 %v856, %v857
  %v859 = vsel %vm781, %v590, 0.0
  %v860 = vadd.f32 %v858, %v859
  %v861 = vsel %vm781, %v593, 0.0
  %v862 = vadd.f32 %v860, %v861
  %v863 = vsel %vm781, %v595, 0.0
  %v864 = vadd.f32 %v862, %v863
  %v865 = vsel %vm781, %v598, 0.0
  %v866 = vadd.f32 %v864, %v865
  %v867 = vsel %vm781, %v600, 0.0
  %v868 = vadd.f32 %v866, %v867
  %v869 = vsel %vm781, %v603, 0.0
  %v870 = vadd.f32 %v868, %v869
  %v871 = vsel %vm781, %v605, 0.0
  %v872 = vadd.f32 %v870, %v871
  %v873 = vsel %vm781, %v608, 0.0
  %v874 = vadd.f32 %v872, %v873
  %v875 = vsel %vm781, %v610, 0.0
  %v876 = vadd.f32 %v874, %v875
  %v877 = vsel %vm781, %v613, 0.0
  %v878 = vadd.f32 %v876, %v877
  %v879 = vsel %vm781, %v615, 0.0
  %v880 = vadd.f32 %v878, %v879
  %v881 = vsel %vm781, %v618, 0.0
  %v882 = vadd.f32 %v880, %v881
  %v883 = vsel %vm781, %v620, 0.0
  %v884 = vadd.f32 %v882, %v883
  %v885 = vsel %vm781, %v623, 0.0
  %v886 = vadd.f32 %v884, %v885
  %v887 = vsel %vm781, %v625, 0.0
  %v888 = vadd.f32 %v886, %v887
  %v889 = vsel %vm781, %v628, 0.0
  %v890 = vadd.f32 %v888, %v889
  %v891 = vsel %vm781, %v630, 0.0
  %v892 = vadd.f32 %v890, %v891
  %v893 = vsel %vm781, %v633, 0.0
  %v894 = vadd.f32 %v892, %v893
  %v895 = vsel %vm781, %v635, 0.0
  %v896 = vadd.f32 %v894, %v895
  %v897 = vsel %vm781, %v638, 0.0
  %v898 = vadd.f32 %v896, %v897
  %v899 = vsel %vm781, %v640, 0.0
  %v900 = vadd.f32 %v898, %v899
  %v901 = vsel %vm781, %v643, 0.0
  %v902 = vadd.f32 %v900, %v901
  %v903 = vsel %vm781, %v645, 0.0
  %v904 = vadd.f32 %v902, %v903
  %v905 = vsel %vm781, %v648, 0.0
  %v906 = vadd.f32 %v904, %v905
  %v907 = vsel %vm781, %v650, 0.0
  %v908 = vadd.f32 %v906, %v907
  %v909 = vrot.slane %v908, 4
  %v910 = vadd.f32 %v908, %v909
  %v911 = vrot.slane %v910, 2
  %v912 = vadd.f32 %v910, %v911
  %v913 = vrot.slane %v912, 1
  %v914 = vadd.f32 %v912, %v913
  %vm915 = vcmask 122880
  %916 = vst.msk [vmem:[%s5] sm:$0x1] %vm915, %v914
  %v917 = vmul.f32 %v493, %v493
  %v918 = vmul.f32 %v495, %v495
  %v919 = vmul.f32 %v498, %v498
  %v920 = vmul.f32 %v500, %v500
  %v921 = vmul.f32 %v503, %v503
  %v922 = vmul.f32 %v505, %v505
  %v923 = vmul.f32 %v508, %v508
  %v924 = vmul.f32 %v510, %v510
  %v925 = vmul.f32 %v513, %v513
  %v926 = vmul.f32 %v515, %v515
  %v927 = vmul.f32 %v518, %v518
  %v928 = vmul.f32 %v520, %v520
  %v929 = vmul.f32 %v523, %v523
  %v930 = vmul.f32 %v525, %v525
  %v931 = vmul.f32 %v528, %v528
  %v932 = vmul.f32 %v530, %v530
  %v933 = vmul.f32 %v533, %v533
  %v934 = vmul.f32 %v535, %v535
  %v935 = vmul.f32 %v538, %v538
  %v936 = vmul.f32 %v540, %v540
  %v937 = vmul.f32 %v543, %v543
  %v938 = vmul.f32 %v545, %v545
  %v939 = vmul.f32 %v548, %v548
  %v940 = vmul.f32 %v550, %v550
  %v941 = vmul.f32 %v553, %v553
  %v942 = vmul.f32 %v555, %v555
  %v943 = vmul.f32 %v558, %v558
  %v944 = vmul.f32 %v560, %v560
  %v945 = vmul.f32 %v563, %v563
  %v946 = vmul.f32 %v565, %v565
  %v947 = vmul.f32 %v568, %v568
  %v948 = vmul.f32 %v570, %v570
  %v949 = vmul.f32 %v573, %v573
  %v950 = vmul.f32 %v575, %v575
  %v951 = vmul.f32 %v578, %v578
  %v952 = vmul.f32 %v580, %v580
  %v953 = vmul.f32 %v583, %v583
  %v954 = vmul.f32 %v585, %v585
  %v955 = vmul.f32 %v588, %v588
  %v956 = vmul.f32 %v590, %v590
  %v957 = vmul.f32 %v593, %v593
  %v958 = vmul.f32 %v595, %v595
  %v959 = vmul.f32 %v598, %v598
  %v960 = vmul.f32 %v600, %v600
  %v961 = vmul.f32 %v603, %v603
  %v962 = vmul.f32 %v605, %v605
  %v963 = vmul.f32 %v608, %v608
  %v964 = vmul.f32 %v610, %v610
  %v965 = vmul.f32 %v613, %v613
  %v966 = vmul.f32 %v615, %v615
  %v967 = vmul.f32 %v618, %v618
  %v968 = vmul.f32 %v620, %v620
  %v969 = vmul.f32 %v623, %v623
  %v970 = vmul.f32 %v625, %v625
  %v971 = vmul.f32 %v628, %v628
  %v972 = vmul.f32 %v630, %v630
  %v973 = vmul.f32 %v633, %v633
  %v974 = vmul.f32 %v635, %v635
  %v975 = vmul.f32 %v638, %v638
  %v976 = vmul.f32 %v640, %v640
  %v977 = vmul.f32 %v643, %v643
  %v978 = vmul.f32 %v645, %v645
  %v979 = vmul.f32 %v648, %v648
  %v980 = vmul.f32 %v650, %v650
  %v981 = vsel %vm781, %v917, 0.0
  %v982 = vsel %vm781, %v918, 0.0
  %v983 = vadd.f32 %v981, %v982
  %v984 = vsel %vm781, %v919, 0.0
  %v985 = vadd.f32 %v983, %v984
  %v986 = vsel %vm781, %v920, 0.0
  %v987 = vadd.f32 %v985, %v986
  %v988 = vsel %vm781, %v921, 0.0
  %v989 = vadd.f32 %v987, %v988
  %v990 = vsel %vm781, %v922, 0.0
  %v991 = vadd.f32 %v989, %v990
  %v992 = vsel %vm781, %v923, 0.0
  %v993 = vadd.f32 %v991, %v992
  %v994 = vsel %vm781, %v924, 0.0
  %v995 = vadd.f32 %v993, %v994
  %v996 = vsel %vm781, %v925, 0.0
  %v997 = vadd.f32 %v995, %v996
  %v998 = vsel %vm781, %v926, 0.0
  %v999 = vadd.f32 %v997, %v998
  %v1000 = vsel %vm781, %v927, 0.0
  %v1001 = vadd.f32 %v999, %v1000
  %v1002 = vsel %vm781, %v928, 0.0
  %v1003 = vadd.f32 %v1001, %v1002
  %v1004 = vsel %vm781, %v929, 0.0
  %v1005 = vadd.f32 %v1003, %v1004
  %v1006 = vsel %vm781, %v930, 0.0
  %v1007 = vadd.f32 %v1005, %v1006
  %v1008 = vsel %vm781, %v931, 0.0
  %v1009 = vadd.f32 %v1007, %v1008
  %v1010 = vsel %vm781, %v932, 0.0
  %v1011 = vadd.f32 %v1009, %v1010
  %v1012 = vsel %vm781, %v933, 0.0
  %v1013 = vadd.f32 %v1011, %v1012
  %v1014 = vsel %vm781, %v934, 0.0
  %v1015 = vadd.f32 %v1013, %v1014
  %v1016 = vsel %vm781, %v935, 0.0
  %v1017 = vadd.f32 %v1015, %v1016
  %v1018 = vsel %vm781, %v936, 0.0
  %v1019 = vadd.f32 %v1017, %v1018
  %v1020 = vsel %vm781, %v937, 0.0
  %v1021 = vadd.f32 %v1019, %v1020
  %v1022 = vsel %vm781, %v938, 0.0
  %v1023 = vadd.f32 %v1021, %v1022
  %v1024 = vsel %vm781, %v939, 0.0
  %v1025 = vadd.f32 %v1023, %v1024
  %v1026 = vsel %vm781, %v940, 0.0
  %v1027 = vadd.f32 %v1025, %v1026
  %v1028 = vsel %vm781, %v941, 0.0
  %v1029 = vadd.f32 %v1027, %v1028
  %v1030 = vsel %vm781, %v942, 0.0
  %v1031 = vadd.f32 %v1029, %v1030
  %v1032 = vsel %vm781, %v943, 0.0
  %v1033 = vadd.f32 %v1031, %v1032
  %v1034 = vsel %vm781, %v944, 0.0
  %v1035 = vadd.f32 %v1033, %v1034
  %v1036 = vsel %vm781, %v945, 0.0
  %v1037 = vadd.f32 %v1035, %v1036
  %v1038 = vsel %vm781, %v946, 0.0
  %v1039 = vadd.f32 %v1037, %v1038
  %v1040 = vsel %vm781, %v947, 0.0
  %v1041 = vadd.f32 %v1039, %v1040
  %v1042 = vsel %vm781, %v948, 0.0
  %v1043 = vadd.f32 %v1041, %v1042
  %v1044 = vsel %vm781, %v949, 0.0
  %v1045 = vadd.f32 %v1043, %v1044
  %v1046 = vsel %vm781, %v950, 0.0
  %v1047 = vadd.f32 %v1045, %v1046
  %v1048 = vsel %vm781, %v951, 0.0
  %v1049 = vadd.f32 %v1047, %v1048
  %v1050 = vsel %vm781, %v952, 0.0
  %v1051 = vadd.f32 %v1049, %v1050
  %v1052 = vsel %vm781, %v953, 0.0
  %v1053 = vadd.f32 %v1051, %v1052
  %v1054 = vsel %vm781, %v954, 0.0
  %v1055 = vadd.f32 %v1053, %v1054
  %v1056 = vsel %vm781, %v955, 0.0
  %v1057 = vadd.f32 %v1055, %v1056
  %v1058 = vsel %vm781, %v956, 0.0
  %v1059 = vadd.f32 %v1057, %v1058
  %v1060 = vsel %vm781, %v957, 0.0
  %v1061 = vadd.f32 %v1059, %v1060
  %v1062 = vsel %vm781, %v958, 0.0
  %v1063 = vadd.f32 %v1061, %v1062
  %v1064 = vsel %vm781, %v959, 0.0
  %v1065 = vadd.f32 %v1063, %v1064
  %v1066 = vsel %vm781, %v960, 0.0
  %v1067 = vadd.f32 %v1065, %v1066
  %v1068 = vsel %vm781, %v961, 0.0
  %v1069 = vadd.f32 %v1067, %v1068
  %v1070 = vsel %vm781, %v962, 0.0
  %v1071 = vadd.f32 %v1069, %v1070
  %v1072 = vsel %vm781, %v963, 0.0
  %v1073 = vadd.f32 %v1071, %v1072
  %v1074 = vsel %vm781, %v964, 0.0
  %v1075 = vadd.f32 %v1073, %v1074
  %v1076 = vsel %vm781, %v965, 0.0
  %v1077 = vadd.f32 %v1075, %v1076
  %v1078 = vsel %vm781, %v966, 0.0
  %v1079 = vadd.f32 %v1077, %v1078
  %v1080 = vsel %vm781, %v967, 0.0
  %v1081 = vadd.f32 %v1079, %v1080
  %v1082 = vsel %vm781, %v968, 0.0
  %v1083 = vadd.f32 %v1081, %v1082
  %v1084 = vsel %vm781, %v969, 0.0
  %v1085 = vadd.f32 %v1083, %v1084
  %v1086 = vsel %vm781, %v970, 0.0
  %v1087 = vadd.f32 %v1085, %v1086
  %v1088 = vsel %vm781, %v971, 0.0
  %v1089 = vadd.f32 %v1087, %v1088
  %v1090 = vsel %vm781, %v972, 0.0
  %v1091 = vadd.f32 %v1089, %v1090
  %v1092 = vsel %vm781, %v973, 0.0
  %v1093 = vadd.f32 %v1091, %v1092
  %v1094 = vsel %vm781, %v974, 0.0
  %v1095 = vadd.f32 %v1093, %v1094
  %v1096 = vsel %vm781, %v975, 0.0
  %v1097 = vadd.f32 %v1095, %v1096
  %v1098 = vsel %vm781, %v976, 0.0
  %v1099 = vadd.f32 %v1097, %v1098
  %v1100 = vsel %vm781, %v977, 0.0
  %v1101 = vadd.f32 %v1099, %v1100
  %v1102 = vsel %vm781, %v978, 0.0
  %v1103 = vadd.f32 %v1101, %v1102
  %v1104 = vsel %vm781, %v979, 0.0
  %v1105 = vadd.f32 %v1103, %v1104
  %v1106 = vsel %vm781, %v980, 0.0
  %v1107 = vadd.f32 %v1105, %v1106
  %v1108 = vrot.slane %v1107, 4
  %v1109 = vadd.f32 %v1107, %v1108
  %v1110 = vrot.slane %v1109, 2
  %v1111 = vadd.f32 %v1109, %v1110
  %v1112 = vrot.slane %v1111, 1
  %v1113 = vadd.f32 %v1111, %v1112
  %1114 = vst.msk [vmem:[%s6] sm:$0x1] %vm915, %v1113
  // Predicated region
  $region18: #{bottleneck_forward.6} parent=0 // pred_check
    _
  $region19: #{bottleneck_forward.6} parent=0 // pred_check_branch
    %1116 = sbr.rel (0) target = $region21
  $region20: #{bottleneck_forward.6} parent=0 // pred_region
    _
  $region21: #{bottleneck_forward.6} parent=0 // pred_fallthru
    _
  // Predicated region
  $region22: #{bottleneck_forward.6} parent=0 // pred_check
    _
  $region23: #{bottleneck_forward.6} parent=0 // pred_check_branch
    %1118 = sbr.rel (0) target = $region25
  $region24: #{bottleneck_forward.6} parent=0 // pred_region
    _
  $region25: #{bottleneck_forward.6} parent=0 // pred_fallthru
    _
  // Predicated region
  $region26: #{bottleneck_forward.6} parent=0 // pred_check
    _
  $region27: #{bottleneck_forward.6} parent=0 // pred_check_branch
    %1120 = sbr.rel (0) target = $region29
  $region28: #{bottleneck_forward.6} parent=0 // pred_region
    _
  $region29: #{bottleneck_forward.6} parent=0 // pred_fallthru
    _
  // Predicated region
  $region30: #{bottleneck_forward.6} parent=0 // pred_check
    _
  $region31: #{bottleneck_forward.6} parent=0 // pred_check_branch
    %1122 = sbr.rel (0) target = $region33
  $region32: #{bottleneck_forward.6} parent=0 // pred_region
    _
  $region33: #{bottleneck_forward.6} parent=0 // pred_fallthru
    _
  // Predicated region
  $region34: #{bottleneck_forward.6} parent=0 // pred_check
    _
  $region35: #{bottleneck_forward.6} parent=0 // pred_check_branch
    %1124 = sbr.rel (0) target = $region37
  $region36: #{bottleneck_forward.6} parent=0 // pred_region
    _
  $region37: #{bottleneck_forward.6} parent=0 // pred_fallthru
    _
  // Predicated region
  $region38: #{bottleneck_forward.6} parent=0 // pred_check
    _
  $region39: #{bottleneck_forward.6} parent=0 // pred_check_branch
    %1126 = sbr.rel (0) target = $region41
  $region40: #{bottleneck_forward.6} parent=0 // pred_region
    _
  $region41: #{bottleneck_forward.6} parent=0 // pred_fallthru
    _

// kernel: bottleneck_forward.5
$region0: #{bottleneck_forward.5}
  #allocation0 [shape = 'u32[]', space=smem, size = 0x4, offset = 0x4, fixed_abs, tag = 'smem constant byte address 0x4 - core index']
  #allocation1 [shape = 'u32[72,128]{1,0:T(1,128)}', space=vmem, size = 0x9000, scoped, tag = 'internal scratch']
  %s0 = inlined_call_operand.vmem [shape: bf16[2,16,16,4], index: 0, kind: input, shape index: {}]
  %s1 = inlined_call_operand.vmem [shape: f32[1,4], index: 1, kind: input, shape index: {}]
  %s2 = inlined_call_operand.vmem [shape: f32[1,4], index: 2, kind: input, shape index: {}]
  %s3 = inlined_call_operand.vmem [shape: bf16[9,4,4], index: 3, kind: input, shape index: {}]
  %s4 = inlined_call_operand.vmem [shape: bf16[2,16,16,4], index: 4, kind: output, shape index: {0}]
  %s5 = inlined_call_operand.vmem [shape: f32[2,1,4], index: 5, kind: output, shape index: {1}]
  %s6 = inlined_call_operand.vmem [shape: f32[2,1,4], index: 6, kind: output, shape index: {2}]
  %7 = xla_tuple %s4, %s5, %s6
  %s8 = sld [smem:[#allocation0]]
  $region65: #{bottleneck_forward.5} parent=0
    _
  %s10 = ssub.s32 1, %s8
  %s11 = scalar_select 0, %s10, %s8
  loop: start=0, step=1, limit=4
  $region2: #{bottleneck_forward.5} parent=0 // loop_pre_header
    _
  $region3: #{bottleneck_forward.5} parent=0 // loop_header
    %s13 = sphi 0, %s17
    %p14 = scmp.ge.s32.totalorder %s13, 4
    %s23 = sphi 0, %s25
    %s26 = sphi 0, %s23
    %s27 = sphi 0, %s26
    %s43 = sphi 0, %s27
    %s47 = sphi 0, %s47
    %s49 = sphi 0, %s47
    %s50 = sphi 0, %s49
    %s64 = sphi 0, %s50
    %s68 = sphi 0, %s68
    %s70 = sphi 0, %s68
    %s71 = sphi 0, %s70
    %s85 = sphi 0, %s71
    %s89 = sphi 0, %s89
    %s91 = sphi 0, %s89
    %s92 = sphi 0, %s91
    %s106 = sphi 0, %s92
    %s112 = sphi 0, %s114
    %s115 = sphi 0, %s112
    %s116 = sphi 0, %s115
    %s132 = sphi 0, %s116
    %s138 = sphi 0, %s140
    %s141 = sphi 0, %s138
    %s142 = sphi 0, %s141
    %s158 = sphi 0, %s142
    %s164 = sphi 0, %s166
    %s167 = sphi 0, %s164
    %s168 = sphi 0, %s167
    %s184 = sphi 0, %s168
  $region4: #{bottleneck_forward.5} parent=0 // loop_header_branch
    %16 = sbr.rel (%p14) target = $region8
  $region5: #{bottleneck_forward.5} parent=0 // loop_body
    %s18 = ssub.s32 %s13, 1
    %s19 = ssub.s32 %s13, 2
    %s20 = sadd.s32 %s13, 1
    %s21 = ssub.s32 %s13, %s20
    %p22 = scmp.eq.s32.totalorder %s21, 0
    %s24 = sadd.s32 %s23, 1
    %s25 = scalar_select %p22, %s23, %s24
    %p28 = pneg %p22
    %p29 = scmp.eq.s32.totalorder %s13, 1
    %p30 = por %p28, %p29
    %p31 = scmp.ne.s32.totalorder %s23, %s26
    %p32 = scmp.eq.s32.totalorder %s13, 0
    %p33 = por %p31, %p32
    %p34 = scmp.ne.s32.totalorder %s23, %s26
    %p35 = scmp.eq.s32.totalorder %s18, 1
    %p36 = por %p34, %p35
    %p37 = scmp.ne.s32.totalorder %s26, %s27
    %p38 = scmp.eq.s32.totalorder %s18, 0
    %p39 = por %p37, %p38
    %p40 = scmp.ne.s32.totalorder %s26, %s27
    %p41 = scmp.eq.s32.totalorder %s19, 1
    %p42 = por %p40, %p41
    %p44 = scmp.ne.s32.totalorder %s27, %s43
    %p45 = scmp.eq.s32.totalorder %s19, 0
    %p46 = por %p44, %p45
    %s48 = sadd.s32 %s47, 1
    %p51 = scmp.eq.s32.totalorder %s13, 1
    %p52 = scmp.ne.s32.totalorder %s47, %s49
    %p53 = scmp.eq.s32.totalorder %s13, 0
    %p54 = por %p52, %p53
    %p55 = scmp.ne.s32.totalorder %s47, %s49
    %p56 = scmp.eq.s32.totalorder %s18, 1
    %p57 = por %p55, %p56
    %p58 = scmp.ne.s32.totalorder %s49, %s50
    %p59 = scmp.eq.s32.totalorder %s18, 0
    %p60 = por %p58, %p59
    %p61 = scmp.ne.s32.totalorder %s49, %s50
    %p62 = scmp.eq.s32.totalorder %s19, 1
    %p63 = por %p61, %p62
    %p65 = scmp.ne.s32.totalorder %s50, %s64
    %p66 = scmp.eq.s32.totalorder %s19, 0
    %p67 = por %p65, %p66
    %s69 = sadd.s32 %s68, 1
    %p72 = scmp.eq.s32.totalorder %s13, 1
    %p73 = scmp.ne.s32.totalorder %s68, %s70
    %p74 = scmp.eq.s32.totalorder %s13, 0
    %p75 = por %p73, %p74
    %p76 = scmp.ne.s32.totalorder %s68, %s70
    %p77 = scmp.eq.s32.totalorder %s18, 1
    %p78 = por %p76, %p77
    %p79 = scmp.ne.s32.totalorder %s70, %s71
    %p80 = scmp.eq.s32.totalorder %s18, 0
    %p81 = por %p79, %p80
    %p82 = scmp.ne.s32.totalorder %s70, %s71
    %p83 = scmp.eq.s32.totalorder %s19, 1
    %p84 = por %p82, %p83
    %p86 = scmp.ne.s32.totalorder %s71, %s85
    %p87 = scmp.eq.s32.totalorder %s19, 0
    %p88 = por %p86, %p87
    %s90 = sadd.s32 %s89, 1
    %p93 = scmp.eq.s32.totalorder %s13, 1
    %p94 = scmp.ne.s32.totalorder %s89, %s91
    %p95 = scmp.eq.s32.totalorder %s13, 0
    %p96 = por %p94, %p95
    %p97 = scmp.ne.s32.totalorder %s89, %s91
    %p98 = scmp.eq.s32.totalorder %s18, 1
    %p99 = por %p97, %p98
    %p100 = scmp.ne.s32.totalorder %s91, %s92
    %p101 = scmp.eq.s32.totalorder %s18, 0
    %p102 = por %p100, %p101
    %p103 = scmp.ne.s32.totalorder %s91, %s92
    %p104 = scmp.eq.s32.totalorder %s19, 1
    %p105 = por %p103, %p104
    %p107 = scmp.ne.s32.totalorder %s92, %s106
    %p108 = scmp.eq.s32.totalorder %s19, 0
    %p109 = por %p107, %p108
    %s110 = ssub.s32 %s13, %s20
    %p111 = scmp.eq.s32.totalorder %s110, 0
    %s113 = sadd.s32 %s112, 1
    %s114 = scalar_select %p111, %s112, %s113
    %p117 = pneg %p111
    %p118 = scmp.eq.s32.totalorder %s13, 1
    %p119 = por %p117, %p118
    %p120 = scmp.ne.s32.totalorder %s112, %s115
    %p121 = scmp.eq.s32.totalorder %s13, 0
    %p122 = por %p120, %p121
    %p123 = scmp.ne.s32.totalorder %s112, %s115
    %p124 = scmp.eq.s32.totalorder %s18, 1
    %p125 = por %p123, %p124
    %p126 = scmp.ne.s32.totalorder %s115, %s116
    %p127 = scmp.eq.s32.totalorder %s18, 0
    %p128 = por %p126, %p127
    %p129 = scmp.ne.s32.totalorder %s115, %s116
    %p130 = scmp.eq.s32.totalorder %s19, 1
    %p131 = por %p129, %p130
    %p133 = scmp.ne.s32.totalorder %s116, %s132
    %p134 = scmp.eq.s32.totalorder %s19, 0
    %p135 = por %p133, %p134
    %s136 = ssub.s32 %s13, %s20
    %p137 = scmp.eq.s32.totalorder %s136, 0
    %s139 = sadd.s32 %s138, 1
    %s140 = scalar_select %p137, %s138, %s139
    %p143 = pneg %p137
    %p144 = scmp.eq.s32.totalorder %s13, 1
    %p145 = por %p143, %p144
    %p146 = scmp.ne.s32.totalorder %s138, %s141
    %p147 = scmp.eq.s32.totalorder %s13, 0
    %p148 = por %p146, %p147
    %p149 = scmp.ne.s32.totalorder %s138, %s141
    %p150 = scmp.eq.s32.totalorder %s18, 1
    %p151 = por %p149, %p150
    %p152 = scmp.ne.s32.totalorder %s141, %s142
    %p153 = scmp.eq.s32.totalorder %s18, 0
    %p154 = por %p152, %p153
    %p155 = scmp.ne.s32.totalorder %s141, %s142
    %p156 = scmp.eq.s32.totalorder %s19, 1
    %p157 = por %p155, %p156
    %p159 = scmp.ne.s32.totalorder %s142, %s158
    %p160 = scmp.eq.s32.totalorder %s19, 0
    %p161 = por %p159, %p160
    %s162 = ssub.s32 %s13, %s20
    %p163 = scmp.eq.s32.totalorder %s162, 0
    %s165 = sadd.s32 %s164, 1
    %s166 = scalar_select %p163, %s164, %s165
    %p169 = pneg %p163
    %p170 = scmp.eq.s32.totalorder %s13, 1
    %p171 = por %p169, %p170
    %p172 = scmp.ne.s32.totalorder %s164, %s167
    %p173 = scmp.eq.s32.totalorder %s13, 0
    %p174 = por %p172, %p173
    %p175 = scmp.ne.s32.totalorder %s164, %s167
    %p176 = scmp.eq.s32.totalorder %s18, 1
    %p177 = por %p175, %p176
    %p178 = scmp.ne.s32.totalorder %s167, %s168
    %p179 = scmp.eq.s32.totalorder %s18, 0
    %p180 = por %p178, %p179
    %p181 = scmp.ne.s32.totalorder %s167, %s168
    %p182 = scmp.eq.s32.totalorder %s19, 1
    %p183 = por %p181, %p182
    %p185 = scmp.ne.s32.totalorder %s168, %s184
    %p186 = scmp.eq.s32.totalorder %s19, 0
    %p187 = por %p185, %p186
    %p188 = scmp.le.s32.totalorder 1, %s13
    %p189 = scmp.lt.s32.totalorder %s13, 3
    %p190 = pnand %p188, %p189
    %p191 = pneg %p190
    // Predicated region
    $region9: #{bottleneck_forward.5} parent=5 // pred_check
      _
    $region10: #{bottleneck_forward.5} parent=5 // pred_check_branch
      %193 = sbr.rel (%p190) target = $region12
    $region11: #{bottleneck_forward.5} parent=5 // pred_region
      %s194 = ssub.s32 %s13, 1
      // Predicated region
      $region13: #{bottleneck_forward.5} parent=11 // pred_check
        %p195 = pneg %p60
      $region14: #{bottleneck_forward.5} parent=11 // pred_check_branch
        %197 = sbr.rel (%p195) target = $region16
      $region15: #{bottleneck_forward.5} parent=11 // pred_region
        _
      $region16: #{bottleneck_forward.5} parent=11 // pred_fallthru
        _
      // Predicated region
      $region17: #{bottleneck_forward.5} parent=11 // pred_check
        %p198 = pneg %p81
      $region18: #{bottleneck_forward.5} parent=11 // pred_check_branch
        %200 = sbr.rel (%p198) target = $region20
      $region19: #{bottleneck_forward.5} parent=11 // pred_region
        _
      $region20: #{bottleneck_forward.5} parent=11 // pred_fallthru
        _
      // Predicated region
      $region21: #{bottleneck_forward.5} parent=11 // pred_check
        %p201 = pneg %p102
      $region22: #{bottleneck_forward.5} parent=11 // pred_check_branch
        %203 = sbr.rel (%p201) target = $region24
      $region23: #{bottleneck_forward.5} parent=11 // pred_region
        _
      $region24: #{bottleneck_forward.5} parent=11 // pred_fallthru
        _
    $region12: #{bottleneck_forward.5} parent=5 // pred_fallthru
      _
    %p204 = scmp.lt.s32.totalorder %s13, 2
    // Predicated region
    $region25: #{bottleneck_forward.5} parent=5 // pred_check
      %p205 = pneg %p204
    $region26: #{bottleneck_forward.5} parent=5 // pred_check_branch
      %207 = sbr.rel (%p205) target = $region28
    $region27: #{bottleneck_forward.5} parent=5 // pred_region
      // Predicated region
      $region29: #{bottleneck_forward.5} parent=27 // pred_check
        %p208 = pneg %p33
      $region30: #{bottleneck_forward.5} parent=27 // pred_check_branch
        %210 = sbr.rel (%p208) target = $region32
      $region31: #{bottleneck_forward.5} parent=27 // pred_region
        %p211 = scmp.lt.s32.totalorder %s13, 1
        %s212 = scalar_select %p211, %s13, 1
        %s213 = smul.addr %s212, 32
        %s214 = smul.addr %s213, 4
        %s215 = scalar_lea.vmem %s0, %s214
      $region32: #{bottleneck_forward.5} parent=27 // pred_fallthru
        _
    $region28: #{bottleneck_forward.5} parent=5 // pred_fallthru
      _
    %p216 = scmp.le.s32.totalorder 1, %s13
    %p217 = scmp.lt.s32.totalorder %s13, 3
    %p218 = pnand %p216, %p217
    %p219 = pneg %p218
    // Predicated region
    $region33: #{bottleneck_forward.5} parent=5 // pred_check
      _
    $region34: #{bottleneck_forward.5} parent=5 // pred_check_branch
      %221 = sbr.rel (%p218) target = $region36
    $region35: #{bottleneck_forward.5} parent=5 // pred_region
      %s222 = ssub.s32 %s13, 1
      %p223 = scmp.lt.s32.totalorder %s18, 1
      %s224 = scalar_select %p223, %s18, 1
      %s225 = smul.addr %s224, 32
      %s226 = smul.addr %s225, 4
      %s227 = scalar_lea.vmem %s0, %s226
      %p228 = pneg %p39
      %p229 = pneg %p36
      %p230 = pneg %p60
      %p231 = pneg %p57
      %p232 = pneg %p81
      %p233 = pneg %p78
      %p234 = pneg %p102
      %p235 = pneg %p99
      %p236 = pneg %p128
      %p237 = pneg %p125
      %p238 = scmp.lt.s32.totalorder %s18, 1
      %s239 = scalar_select %p238, %s18, 1
      %s240 = smul.addr %s239, 32
      %s241 = smul.addr %s240, 4
      %s242 = scalar_lea.vmem %s4, %s241
      %p243 = pneg %p154
      %p244 = pneg %p151
      %p245 = scmp.lt.s32.totalorder %s18, 1
      %s246 = scalar_select %p245, %s18, 1
      %s247 = scalar_lea.vmem %s5, %s246
      %p248 = pneg %p180
      %p249 = pneg %p177
      %p250 = scmp.lt.s32.totalorder %s18, 1
      %s251 = scalar_select %p250, %s18, 1
      %s252 = scalar_lea.vmem %s6, %s251
      %p253 = scmp.lt.s32.totalorder %s18, 1
      %s254 = scalar_select %p253, %s18, 1
      %s255 = smul.addr %s254, 32
      %s256 = smul.addr %s255, 4
      %s257 = scalar_lea.vmem %s0, %s256
      %p258 = scmp.lt.s32.totalorder %s18, 1
      %s259 = scalar_select %p258, %s18, 1
      %s260 = smul.addr %s259, 32
      %s261 = smul.addr %s260, 4
      %s262 = scalar_lea.vmem %s4, %s261
      %p263 = scmp.lt.s32.totalorder %s18, 1
      %s264 = scalar_select %p263, %s18, 1
      %s265 = scalar_lea.vmem %s5, %s264
      %p266 = scmp.lt.s32.totalorder %s18, 1
      %s267 = scalar_select %p266, %s18, 1
      %s268 = scalar_lea.vmem %s6, %s267
      %v270 = vld [vmem:[%s257] sm:$0xf]
      %v271 = vld [vmem:[%s257 + $0x4] sm:$0xf]
      %v272 = vld [vmem:[%s257 + $0x8] sm:$0xf]
      %v273 = vld [vmem:[%s257 + $0xc] sm:$0xf]
      %v274 = vld [vmem:[%s257 + $0x10] sm:$0xf]
      %v275 = vld [vmem:[%s257 + $0x14] sm:$0xf]
      %v276 = vld [vmem:[%s257 + $0x18] sm:$0xf]
      %v277 = vld [vmem:[%s257 + $0x1c] sm:$0xf]
      %v278 = vld [vmem:[%s257 + $0x20] sm:$0xf]
      %v279 = vld [vmem:[%s257 + $0x24] sm:$0xf]
      %v280 = vld [vmem:[%s257 + $0x28] sm:$0xf]
      %v281 = vld [vmem:[%s257 + $0x2c] sm:$0xf]
      %v282 = vld [vmem:[%s257 + $0x30] sm:$0xf]
      %v283 = vld [vmem:[%s257 + $0x34] sm:$0xf]
      %v284 = vld [vmem:[%s257 + $0x38] sm:$0xf]
      %v285 = vld [vmem:[%s257 + $0x3c] sm:$0xf]
      %v286 = vld [vmem:[%s257 + $0x40] sm:$0xf]
      %v287 = vld [vmem:[%s257 + $0x44] sm:$0xf]
      %v288 = vld [vmem:[%s257 + $0x48] sm:$0xf]
      %v289 = vld [vmem:[%s257 + $0x4c] sm:$0xf]
      %v290 = vld [vmem:[%s257 + $0x50] sm:$0xf]
      %v291 = vld [vmem:[%s257 + $0x54] sm:$0xf]
      %v292 = vld [vmem:[%s257 + $0x58] sm:$0xf]
      %v293 = vld [vmem:[%s257 + $0x5c] sm:$0xf]
      %v294 = vld [vmem:[%s257 + $0x60] sm:$0xf]
      %v295 = vld [vmem:[%s257 + $0x64] sm:$0xf]
      %v296 = vld [vmem:[%s257 + $0x68] sm:$0xf]
      %v297 = vld [vmem:[%s257 + $0x6c] sm:$0xf]
      %v298 = vld [vmem:[%s257 + $0x70] sm:$0xf]
      %v299 = vld [vmem:[%s257 + $0x74] sm:$0xf]
      %v300 = vld [vmem:[%s257 + $0x78] sm:$0xf]
      %v301 = vld [vmem:[%s257 + $0x7c] sm:$0xf]
      %v302 = vunpack.c.l.bf16 %v270
      %v303 = vunpack.c.l.bf16 %v271
      %v304 = vunpack.c.l.bf16 %v272
      %v305 = vunpack.c.l.bf16 %v273
      %v306 = vunpack.c.l.bf16 %v274
      %v307 = vunpack.c.l.bf16 %v275
      %v308 = vunpack.c.l.bf16 %v276
      %v309 = vunpack.c.l.bf16 %v277
      %v310 = vunpack.c.l.bf16 %v278
      %v311 = vunpack.c.l.bf16 %v279
      %v312 = vunpack.c.l.bf16 %v280
      %v313 = vunpack.c.l.bf16 %v281
      %v314 = vunpack.c.l.bf16 %v282
      %v315 = vunpack.c.l.bf16 %v283
      %v316 = vunpack.c.l.bf16 %v284
      %v317 = vunpack.c.l.bf16 %v285
      %v318 = vunpack.c.l.bf16 %v286
      %v319 = vunpack.c.l.bf16 %v287
      %v320 = vunpack.c.l.bf16 %v288
      %v321 = vunpack.c.l.bf16 %v289
      %v322 = vunpack.c.l.bf16 %v290
      %v323 = vunpack.c.l.bf16 %v291
      %v324 = vunpack.c.l.bf16 %v292
      %v325 = vunpack.c.l.bf16 %v293
      %v326 = vunpack.c.l.bf16 %v294
      %v327 = vunpack.c.l.bf16 %v295
      %v328 = vunpack.c.l.bf16 %v296
      %v329 = vunpack.c.l.bf16 %v297
      %v330 = vunpack.c.l.bf16 %v298
      %v331 = vunpack.c.l.bf16 %v299
      %v332 = vunpack.c.l.bf16 %v300
      %v333 = vunpack.c.l.bf16 %v301
      %v334 = vld [vmem:[%s1] sm:$0x1]
      %v336 = vperm.slane %v334, 0
      %v338 = vmul.f32 %v302, %v336
      %v339 = vmul.f32 %v303, %v336
      %v340 = vmul.f32 %v304, %v336
      %v341 = vmul.f32 %v305, %v336
      %v342 = vmul.f32 %v306, %v336
      %v343 = vmul.f32 %v307, %v336
      %v344 = vmul.f32 %v308, %v336
      %v345 = vmul.f32 %v309, %v336
      %v346 = vmul.f32 %v310, %v336
      %v347 = vmul.f32 %v311, %v336
      %v348 = vmul.f32 %v312, %v336
      %v349 = vmul.f32 %v313, %v336
      %v350 = vmul.f32 %v314, %v336
      %v351 = vmul.f32 %v315, %v336
      %v352 = vmul.f32 %v316, %v336
      %v353 = vmul.f32 %v317, %v336
      %v354 = vmul.f32 %v318, %v336
      %v355 = vmul.f32 %v319, %v336
      %v356 = vmul.f32 %v320, %v336
      %v357 = vmul.f32 %v321, %v336
      %v358 = vmul.f32 %v322, %v336
      %v359 = vmul.f32 %v323, %v336
      %v360 = vmul.f32 %v324, %v336
      %v361 = vmul.f32 %v325, %v336
      %v362 = vmul.f32 %v326, %v336
      %v363 = vmul.f32 %v327, %v336
      %v364 = vmul.f32 %v328, %v336
      %v365 = vmul.f32 %v329, %v336
      %v366 = vmul.f32 %v330, %v336
      %v367 = vmul.f32 %v331, %v336
      %v368 = vmul.f32 %v332, %v336
      %v369 = vmul.f32 %v333, %v336
      %v370 = vld [vmem:[%s2] sm:$0x1]
      %v372 = vperm.slane %v370, 0
      %v374 = vadd.f32 %v338, %v372
      %v375 = vadd.f32 %v339, %v372
      %v376 = vadd.f32 %v340, %v372
      %v377 = vadd.f32 %v341, %v372
      %v378 = vadd.f32 %v342, %v372
      %v379 = vadd.f32 %v343, %v372
      %v380 = vadd.f32 %v344, %v372
      %v381 = vadd.f32 %v345, %v372
      %v382 = vadd.f32 %v346, %v372
      %v383 = vadd.f32 %v347, %v372
      %v384 = vadd.f32 %v348, %v372
      %v385 = vadd.f32 %v349, %v372
      %v386 = vadd.f32 %v350, %v372
      %v387 = vadd.f32 %v351, %v372
      %v388 = vadd.f32 %v352, %v372
      %v389 = vadd.f32 %v353, %v372
      %v390 = vadd.f32 %v354, %v372
      %v391 = vadd.f32 %v355, %v372
      %v392 = vadd.f32 %v356, %v372
      %v393 = vadd.f32 %v357, %v372
      %v394 = vadd.f32 %v358, %v372
      %v395 = vadd.f32 %v359, %v372
      %v396 = vadd.f32 %v360, %v372
      %v397 = vadd.f32 %v361, %v372
      %v398 = vadd.f32 %v362, %v372
      %v399 = vadd.f32 %v363, %v372
      %v400 = vadd.f32 %v364, %v372
      %v401 = vadd.f32 %v365, %v372
      %v402 = vadd.f32 %v366, %v372
      %v403 = vadd.f32 %v367, %v372
      %v404 = vadd.f32 %v368, %v372
      %v405 = vadd.f32 %v369, %v372
      %v406 = vmax.f32 %v374, 0.0
      %v407 = vmax.f32 %v375, 0.0
      %v408 = vmax.f32 %v376, 0.0
      %v409 = vmax.f32 %v377, 0.0
      %v410 = vmax.f32 %v378, 0.0
      %v411 = vmax.f32 %v379, 0.0
      %v412 = vmax.f32 %v380, 0.0
      %v413 = vmax.f32 %v381, 0.0
      %v414 = vmax.f32 %v382, 0.0
      %v415 = vmax.f32 %v383, 0.0
      %v416 = vmax.f32 %v384, 0.0
      %v417 = vmax.f32 %v385, 0.0
      %v418 = vmax.f32 %v386, 0.0
      %v419 = vmax.f32 %v387, 0.0
      %v420 = vmax.f32 %v388, 0.0
      %v421 = vmax.f32 %v389, 0.0
      %v422 = vmax.f32 %v390, 0.0
      %v423 = vmax.f32 %v391, 0.0
      %v424 = vmax.f32 %v392, 0.0
      %v425 = vmax.f32 %v393, 0.0
      %v426 = vmax.f32 %v394, 0.0
      %v427 = vmax.f32 %v395, 0.0
      %v428 = vmax.f32 %v396, 0.0
      %v429 = vmax.f32 %v397, 0.0
      %v430 = vmax.f32 %v398, 0.0
      %v431 = vmax.f32 %v399, 0.0
      %v432 = vmax.f32 %v400, 0.0
      %v433 = vmax.f32 %v401, 0.0
      %v434 = vmax.f32 %v402, 0.0
      %v435 = vmax.f32 %v403, 0.0
      %v436 = vmax.f32 %v404, 0.0
      %v437 = vmax.f32 %v405, 0.0
      %v438 = vpack.c.bf16 %v406, %v406
      %v439 = vpack.c.bf16 %v407, %v407
      %v440 = vpack.c.bf16 %v408, %v408
      %v441 = vpack.c.bf16 %v409, %v409
      %v442 = vpack.c.bf16 %v410, %v410
      %v443 = vpack.c.bf16 %v411, %v411
      %v444 = vpack.c.bf16 %v412, %v412
      %v445 = vpack.c.bf16 %v413, %v413
      %v446 = vpack.c.bf16 %v414, %v414
      %v447 = vpack.c.bf16 %v415, %v415
      %v448 = vpack.c.bf16 %v416, %v416
      %v449 = vpack.c.bf16 %v417, %v417
      %v450 = vpack.c.bf16 %v418, %v418
      %v451 = vpack.c.bf16 %v419, %v419
      %v452 = vpack.c.bf16 %v420, %v420
      %v453 = vpack.c.bf16 %v421, %v421
      %v454 = vpack.c.bf16 %v422, %v422
      %v455 = vpack.c.bf16 %v423, %v423
      %v456 = vpack.c.bf16 %v424, %v424
      %v457 = vpack.c.bf16 %v425, %v425
      %v458 = vpack.c.bf16 %v426, %v426
      %v459 = vpack.c.bf16 %v427, %v427
      %v460 = vpack.c.bf16 %v428, %v428
      %v461 = vpack.c.bf16 %v429, %v429
      %v462 = vpack.c.bf16 %v430, %v430
      %v463 = vpack.c.bf16 %v431, %v431
      %v464 = vpack.c.bf16 %v432, %v432
      %v465 = vpack.c.bf16 %v433, %v433
      %v466 = vpack.c.bf16 %v434, %v434
      %v467 = vpack.c.bf16 %v435, %v435
      %v468 = vpack.c.bf16 %v436, %v436
      %v469 = vpack.c.bf16 %v437, %v437
      %v502 = vunpack.c.l.b16 %v438
      %v503 = vunpack.c.l.b16 %v439
      %v504 = vunpack.c.l.b16 %v440
      %v505 = vunpack.c.l.b16 %v441
      %v506 = vunpack.c.l.b16 %v442
      %v507 = vunpack.c.l.b16 %v443
      %v508 = vunpack.c.l.b16 %v444
      %v509 = vunpack.c.l.b16 %v445
      %v510 = vunpack.c.l.b16 %v446
      %v511 = vunpack.c.l.b16 %v447
      %v512 = vunpack.c.l.b16 %v448
      %v513 = vunpack.c.l.b16 %v449
      %v514 = vunpack.c.l.b16 %v450
      %v515 = vunpack.c.l.b16 %v451
      %v516 = vunpack.c.l.b16 %v452
      %v517 = vunpack.c.l.b16 %v453
      %v518 = vunpack.c.l.b16 %v454
      %v519 = vunpack.c.l.b16 %v455
      %v520 = vunpack.c.l.b16 %v456
      %v521 = vunpack.c.l.b16 %v457
      %v522 = vunpack.c.l.b16 %v458
      %v523 = vunpack.c.l.b16 %v459
      %v524 = vunpack.c.l.b16 %v460
      %v525 = vunpack.c.l.b16 %v461
      %v526 = vunpack.c.l.b16 %v462
      %v527 = vunpack.c.l.b16 %v463
      %v528 = vunpack.c.l.b16 %v464
      %v529 = vunpack.c.l.b16 %v465
      %v530 = vunpack.c.l.b16 %v466
      %v531 = vunpack.c.l.b16 %v467
      %v532 = vunpack.c.l.b16 %v468
      %v533 = vunpack.c.l.b16 %v469
      %v534 = vpack.c.b16 %v503, %v502
      %v535 = vpack.c.b16 %v505, %v504
      %v536 = vpack.c.b16 %v507, %v506
      %v537 = vpack.c.b16 %v509, %v508
      %v538 = vpack.c.b16 %v511, %v510
      %v539 = vpack.c.b16 %v513, %v512
      %v540 = vpack.c.b16 %v515, %v514
      %v541 = vpack.c.b16 %v517, %v516
      %v542 = vpack.c.b16 %v519, %v518
      %v543 = vpack.c.b16 %v521, %v520
      %v544 = vpack.c.b16 %v523, %v522
      %v545 = vpack.c.b16 %v525, %v524
      %v546 = vpack.c.b16 %v527, %v526
      %v547 = vpack.c.b16 %v529, %v528
      %v548 = vpack.c.b16 %v531, %v530
      %v549 = vpack.c.b16 %v533, %v532
      %v551 = vshrl.u32 0, 16
      %v553 = vrot.slane %v551, 7
      %v554 = vshll.u32 0, 16
      %v556 = vor.u32 %v553, %v554
      %v558 = vshrl.u32 %v534, 16
      %v560 = vrot.slane %v558, 7
      %v561 = vshll.u32 %v534, 16
      %v563 = vor.u32 %v560, %v561
      %v565 = vshrl.u32 %v535, 16
      %v567 = vrot.slane %v565, 7
      %v568 = vshll.u32 %v535, 16
      %v570 = vor.u32 %v567, %v568
      %v572 = vshrl.u32 %v536, 16
      %v574 = vrot.slane %v572, 7
      %v575 = vshll.u32 %v536, 16
      %v577 = vor.u32 %v574, %v575
      %v579 = vshrl.u32 %v537, 16
      %v581 = vrot.slane %v579, 7
      %v582 = vshll.u32 %v537, 16
      %v584 = vor.u32 %v581, %v582
      %v586 = vshrl.u32 %v538, 16
      %v588 = vrot.slane %v586, 7
      %v589 = vshll.u32 %v538, 16
      %v591 = vor.u32 %v588, %v589
      %v593 = vshrl.u32 %v539, 16
      %v595 = vrot.slane %v593, 7
      %v596 = vshll.u32 %v539, 16
      %v598 = vor.u32 %v595, %v596
      %v600 = vshrl.u32 %v540, 16
      %v602 = vrot.slane %v600, 7
      %v603 = vshll.u32 %v540, 16
      %v605 = vor.u32 %v602, %v603
      %v607 = vshrl.u32 %v541, 16
      %v609 = vrot.slane %v607, 7
      %v610 = vshll.u32 %v541, 16
      %v612 = vor.u32 %v609, %v610
      %v614 = vshrl.u32 %v542, 16
      %v616 = vrot.slane %v614, 7
      %v617 = vshll.u32 %v542, 16
      %v619 = vor.u32 %v616, %v617
      %v621 = vshrl.u32 %v543, 16
      %v623 = vrot.slane %v621, 7
      %v624 = vshll.u32 %v543, 16
      %v626 = vor.u32 %v623, %v624
      %v628 = vshrl.u32 %v544, 16
      %v630 = vrot.slane %v628, 7
      %v631 = vshll.u32 %v544, 16
      %v633 = vor.u32 %v630, %v631
      %v635 = vshrl.u32 %v545, 16
      %v637 = vrot.slane %v635, 7
      %v638 = vshll.u32 %v545, 16
      %v640 = vor.u32 %v637, %v638
      %v642 = vshrl.u32 %v546, 16
      %v644 = vrot.slane %v642, 7
      %v645 = vshll.u32 %v546, 16
      %v647 = vor.u32 %v644, %v645
      %v649 = vshrl.u32 %v547, 16
      %v651 = vrot.slane %v649, 7
      %v652 = vshll.u32 %v547, 16
      %v654 = vor.u32 %v651, %v652
      %v656 = vshrl.u32 %v548, 16
      %v658 = vrot.slane %v656, 7
      %v659 = vshll.u32 %v548, 16
      %v661 = vor.u32 %v658, %v659
      %v663 = vshrl.u32 %v549, 16
      %v665 = vrot.slane %v663, 7
      %v666 = vshll.u32 %v549, 16
      %v668 = vor.u32 %v665, %v666
      %vm703 = vcmask 1040384
      %vm704 = vsmask.f32 256
      %vm705 = vmand %vm703, %vm704
      %v706 = vsel %vm705, 0, %v556
      %v707 = vsel %vm705, 0, %v563
      %v708 = vsel %vm705, 0, %v570
      %v709 = vsel %vm705, 0, %v577
      %v710 = vsel %vm705, 0, %v584
      %v711 = vsel %vm705, 0, %v591
      %v712 = vsel %vm705, 0, %v598
      %v713 = vsel %vm705, 0, %v605
      %v714 = vsel %vm705, 0, %v612
      %v715 = vsel %vm705, 0, %v619
      %v716 = vsel %vm705, 0, %v626
      %v717 = vsel %vm705, 0, %v633
      %v718 = vsel %vm705, 0, %v640
      %v719 = vsel %vm705, 0, %v647
      %v720 = vsel %vm705, 0, %v654
      %v721 = vsel %vm705, 0, %v661
      %v722 = vsel %vm705, 0, %v668
      %v723 = vsel %vm705, %v553, 0
      %v724 = vsel %vm705, %v560, 0
      %v725 = vsel %vm705, %v567, 0
      %v726 = vsel %vm705, %v574, 0
      %v727 = vsel %vm705, %v581, 0
      %v728 = vsel %vm705, %v588, 0
      %v729 = vsel %vm705, %v595, 0
      %v730 = vsel %vm705, %v602, 0
      %v731 = vsel %vm705, %v609, 0
      %v732 = vsel %vm705, %v616, 0
      %v733 = vsel %vm705, %v623, 0
      %v734 = vsel %vm705, %v630, 0
      %v735 = vsel %vm705, %v637, 0
      %v736 = vsel %vm705, %v644, 0
      %v737 = vsel %vm705, %v651, 0
      %v738 = vsel %vm705, %v658, 0
      %v739 = vsel %vm705, %v665, 0
      %v740 = vld [vmem:[%s3] sm:$0x3]
      %vm741 = vsmask.f32 7424
      %v743 = vshrl.u32 %v706, 16
      %v745 = vshll.u32 %v706, 16
      %v747 = vrot.slane %v745, 1
      %v748 = vor.u32 %v743, %v747
      %v750 = vshll.u32 %v723, 16
      %v752 = vrot.slane %v750, 1
      %v753 = vsel %vm741, %v748, %v752
      %v755 = vshrl.u32 %v707, 16
      %v757 = vshll.u32 %v707, 16
      %v759 = vrot.slane %v757, 1
      %v760 = vor.u32 %v755, %v759
      %v762 = vshll.u32 %v724, 16
      %v764 = vrot.slane %v762, 1
      %v765 = vsel %vm741, %v760, %v764
      %v767 = vshrl.u32 %v708, 16
      %v769 = vshll.u32 %v708, 16
      %v771 = vrot.slane %v769, 1
      %v772 = vor.u32 %v767, %v771
      %v774 = vshll.u32 %v725, 16
      %v776 = vrot.slane %v774, 1
      %v777 = vsel %vm741, %v772, %v776
      %v779 = vshrl.u32 %v709, 16
      %v781 = vshll.u32 %v709, 16
      %v783 = vrot.slane %v781, 1
      %v784 = vor.u32 %v779, %v783
      %v786 = vshll.u32 %v726, 16
      %v788 = vrot.slane %v786, 1
      %v789 = vsel %vm741, %v784, %v788
      %v791 = vshrl.u32 %v710, 16
      %v793 = vshll.u32 %v710, 16
      %v795 = vrot.slane %v793, 1
      %v796 = vor.u32 %v791, %v795
      %v798 = vshll.u32 %v727, 16
      %v800 = vrot.slane %v798, 1
      %v801 = vsel %vm741, %v796, %v800
      %v803 = vshrl.u32 %v711, 16
      %v805 = vshll.u32 %v711, 16
      %v807 = vrot.slane %v805, 1
      %v808 = vor.u32 %v803, %v807
      %v810 = vshll.u32 %v728, 16
      %v812 = vrot.slane %v810, 1
      %v813 = vsel %vm741, %v808, %v812
      %v815 = vshrl.u32 %v712, 16
      %v817 = vshll.u32 %v712, 16
      %v819 = vrot.slane %v817, 1
      %v820 = vor.u32 %v815, %v819
      %v822 = vshll.u32 %v729, 16
      %v824 = vrot.slane %v822, 1
      %v825 = vsel %vm741, %v820, %v824
      %v827 = vshrl.u32 %v713, 16
      %v829 = vshll.u32 %v713, 16
      %v831 = vrot.slane %v829, 1
      %v832 = vor.u32 %v827, %v831
      %v834 = vshll.u32 %v730, 16
      %v836 = vrot.slane %v834, 1
      %v837 = vsel %vm741, %v832, %v836
      %v839 = vshrl.u32 %v714, 16
      %v841 = vshll.u32 %v714, 16
      %v843 = vrot.slane %v841, 1
      %v844 = vor.u32 %v839, %v843
      %v846 = vshll.u32 %v731, 16
      %v848 = vrot.slane %v846, 1
      %v849 = vsel %vm741, %v844, %v848
      %v851 = vshrl.u32 %v715, 16
      %v853 = vshll.u32 %v715, 16
      %v855 = vrot.slane %v853, 1
      %v856 = vor.u32 %v851, %v855
      %v858 = vshll.u32 %v732, 16
      %v860 = vrot.slane %v858, 1
      %v861 = vsel %vm741, %v856, %v860
      %v863 = vshrl.u32 %v716, 16
      %v865 = vshll.u32 %v716, 16
      %v867 = vrot.slane %v865, 1
      %v868 = vor.u32 %v863, %v867
      %v870 = vshll.u32 %v733, 16
      %v872 = vrot.slane %v870, 1
      %v873 = vsel %vm741, %v868, %v872
      %v875 = vshrl.u32 %v717, 16
      %v877 = vshll.u32 %v717, 16
      %v879 = vrot.slane %v877, 1
      %v880 = vor.u32 %v875, %v879
      %v882 = vshll.u32 %v734, 16
      %v884 = vrot.slane %v882, 1
      %v885 = vsel %vm741, %v880, %v884
      %v887 = vshrl.u32 %v718, 16
      %v889 = vshll.u32 %v718, 16
      %v891 = vrot.slane %v889, 1
      %v892 = vor.u32 %v887, %v891
      %v894 = vshll.u32 %v735, 16
      %v896 = vrot.slane %v894, 1
      %v897 = vsel %vm741, %v892, %v896
      %v899 = vshrl.u32 %v719, 16
      %v901 = vshll.u32 %v719, 16
      %v903 = vrot.slane %v901, 1
      %v904 = vor.u32 %v899, %v903
      %v906 = vshll.u32 %v736, 16
      %v908 = vrot.slane %v906, 1
      %v909 = vsel %vm741, %v904, %v908
      %v911 = vshrl.u32 %v720, 16
      %v913 = vshll.u32 %v720, 16
      %v915 = vrot.slane %v913, 1
      %v916 = vor.u32 %v911, %v915
      %v918 = vshll.u32 %v737, 16
      %v920 = vrot.slane %v918, 1
      %v921 = vsel %vm741, %v916, %v920
      %v923 = vshrl.u32 %v721, 16
      %v925 = vshll.u32 %v721, 16
      %v927 = vrot.slane %v925, 1
      %v928 = vor.u32 %v923, %v927
      %v930 = vshll.u32 %v738, 16
      %v932 = vrot.slane %v930, 1
      %v933 = vsel %vm741, %v928, %v932
      %s934 = scalar_lea.vmem %s3, 2
      %v935 = vld [vmem:[%s934] sm:$0x3]
      %vm936 = vcmask 31744
      %v938 = vsel %vm936, %v753, 0
      %v941 = vsel %vm936, %v765, 0
      %v944 = vsel %vm936, %v777, 0
      %v947 = vsel %vm936, %v789, 0
      %v950 = vsel %vm936, %v801, 0
      %v953 = vsel %vm936, %v813, 0
      %v956 = vsel %vm936, %v825, 0
      %v959 = vsel %vm936, %v837, 0
      %v962 = vsel %vm936, %v849, 0
      %v965 = vsel %vm936, %v861, 0
      %v968 = vsel %vm936, %v873, 0
      %v971 = vsel %vm936, %v885, 0
      %v974 = vsel %vm936, %v897, 0
      %v977 = vsel %vm936, %v909, 0
      %v980 = vsel %vm936, %v921, 0
      %v983 = vsel %vm936, %v933, 0
      %vm985 = vcmask 1041408
      %v987 = vsel %vm985, %v935, 0
      %989 = vmatpush.bf16.msra.mxu0 0
      %990 = vmatpush.bf16.msra.mxu0 0
      %991 = vmatpush.bf16.msra.mxu0 0
      %992 = vmatpush.bf16.msra.mxu0 0
      %993 = vmatpush.bf16.msra.mxu0 0
      %994 = vmatpush.bf16.msra.mxu0 0
      %995 = vmatpush.bf16.msra.mxu0 0
      %996 = vmatpush.bf16.msra.mxu0 %v987
      %997 = vmatmul.bf16.gmra.mxu0 %v938
      %v998 = vpop.f32.mrf.mxu0
      %v999 = vadd.f32 0.0, %v998
      %v1000 = vpop.f32.mrf.mxu0
      %v1001 = vadd.f32 0.0, %v1000
      %1002 = vmatmul.bf16.gmra.mxu0 %v941
      %v1003 = vpop.f32.mrf.mxu0
      %v1004 = vadd.f32 0.0, %v1003
      %v1005 = vpop.f32.mrf.mxu0
      %v1006 = vadd.f32 0.0, %v1005
      %1007 = vmatmul.bf16.gmra.mxu0 %v944
      %v1008 = vpop.f32.mrf.mxu0
      %v1009 = vadd.f32 0.0, %v1008
      %v1010 = vpop.f32.mrf.mxu0
      %v1011 = vadd.f32 0.0, %v1010
      %1012 = vmatmul.bf16.gmra.mxu0 %v947
      %v1013 = vpop.f32.mrf.mxu0
      %v1014 = vadd.f32 0.0, %v1013
      %v1015 = vpop.f32.mrf.mxu0
      %v1016 = vadd.f32 0.0, %v1015
      %1017 = vmatmul.bf16.gmra.mxu0 %v950
      %v1018 = vpop.f32.mrf.mxu0
      %v1019 = vadd.f32 0.0, %v1018
      %v1020 = vpop.f32.mrf.mxu0
      %v1021 = vadd.f32 0.0, %v1020
      %1022 = vmatmul.bf16.gmra.mxu0 %v953
      %v1023 = vpop.f32.mrf.mxu0
      %v1024 = vadd.f32 0.0, %v1023
      %v1025 = vpop.f32.mrf.mxu0
      %v1026 = vadd.f32 0.0, %v1025
      %1027 = vmatmul.bf16.gmra.mxu0 %v956
      %v1028 = vpop.f32.mrf.mxu0
      %v1029 = vadd.f32 0.0, %v1028
      %v1030 = vpop.f32.mrf.mxu0
      %v1031 = vadd.f32 0.0, %v1030
      %1032 = vmatmul.bf16.gmra.mxu0 %v959
      %v1033 = vpop.f32.mrf.mxu0
      %v1034 = vadd.f32 0.0, %v1033
      %v1035 = vpop.f32.mrf.mxu0
      %v1036 = vadd.f32 0.0, %v1035
      %1037 = vmatmul.bf16.gmra.mxu0 %v962
      %v1038 = vpop.f32.mrf.mxu0
      %v1039 = vadd.f32 0.0, %v1038
      %v1040 = vpop.f32.mrf.mxu0
      %v1041 = vadd.f32 0.0, %v1040
      %1042 = vmatmul.bf16.gmra.mxu0 %v965
      %v1043 = vpop.f32.mrf.mxu0
      %v1044 = vadd.f32 0.0, %v1043
      %v1045 = vpop.f32.mrf.mxu0
      %v1046 = vadd.f32 0.0, %v1045
      %1047 = vmatmul.bf16.gmra.mxu0 %v968
      %v1048 = vpop.f32.mrf.mxu0
      %v1049 = vadd.f32 0.0, %v1048
      %v1050 = vpop.f32.mrf.mxu0
      %v1051 = vadd.f32 0.0, %v1050
      %1052 = vmatmul.bf16.gmra.mxu0 %v971
      %v1053 = vpop.f32.mrf.mxu0
      %v1054 = vadd.f32 0.0, %v1053
      %v1055 = vpop.f32.mrf.mxu0
      %v1056 = vadd.f32 0.0, %v1055
      %1057 = vmatmul.bf16.gmra.mxu0 %v974
      %v1058 = vpop.f32.mrf.mxu0
      %v1059 = vadd.f32 0.0, %v1058
      %v1060 = vpop.f32.mrf.mxu0
      %v1061 = vadd.f32 0.0, %v1060
      %1062 = vmatmul.bf16.gmra.mxu0 %v977
      %v1063 = vpop.f32.mrf.mxu0
      %v1064 = vadd.f32 0.0, %v1063
      %v1065 = vpop.f32.mrf.mxu0
      %v1066 = vadd.f32 0.0, %v1065
      %1067 = vmatmul.bf16.gmra.mxu0 %v980
      %v1068 = vpop.f32.mrf.mxu0
      %v1069 = vadd.f32 0.0, %v1068
      %v1070 = vpop.f32.mrf.mxu0
      %v1071 = vadd.f32 0.0, %v1070
      %1072 = vmatmul.bf16.gmra.mxu0 %v983
      %v1073 = vpop.f32.mrf.mxu0
      %v1074 = vadd.f32 0.0, %v1073
      %v1075 = vpop.f32.mrf.mxu0
      %v1076 = vadd.f32 0.0, %v1075
      %1077 = vdwg.mxu0
      %v1078 = vsel %vm936, %v706, 0
      %v1080 = vsel %vm936, %v707, 0
      %v1082 = vsel %vm936, %v708, 0
      %v1084 = vsel %vm936, %v709, 0
      %v1086 = vsel %vm936, %v710, 0
      %v1088 = vsel %vm936, %v711, 0
      %v1090 = vsel %vm936, %v712, 0
      %v1092 = vsel %vm936, %v713, 0
      %v1094 = vsel %vm936, %v714, 0
      %v1096 = vsel %vm936, %v715, 0
      %v1098 = vsel %vm936, %v716, 0
      %v1100 = vsel %vm936, %v717, 0
      %v1102 = vsel %vm936, %v718, 0
      %v1104 = vsel %vm936, %v719, 0
      %v1106 = vsel %vm936, %v720, 0
      %v1108 = vsel %vm936, %v721, 0
      %v1111 = vsel %vm985, %v740, 0
      %1113 = vmatpush.bf16.msra.mxu0 0
      %1114 = vmatpush.bf16.msra.mxu0 0
      %1115 = vmatpush.bf16.msra.mxu0 0
      %1116 = vmatpush.bf16.msra.mxu0 0
      %1117 = vmatpush.bf16.msra.mxu0 0
      %1118 = vmatpush.bf16.msra.mxu0 0
      %1119 = vmatpush.bf16.msra.mxu0 0
      %1120 = vmatpush.bf16.msra.mxu0 %v1111
      %1121 = vmatmul.bf16.gmra.mxu0 %v1078
      %v1122 = vpop.f32.mrf.mxu0
      %v1123 = vadd.f32 %v999, %v1122
      %v1124 = vpop.f32.mrf.mxu0
      %v1125 = vadd.f32 %v1001, %v1124
      %1126 = vmatmul.bf16.gmra.mxu0 %v1080
      %v1127 = vpop.f32.mrf.mxu0
      %v1128 = vadd.f32 %v1004, %v1127
      %v1129 = vpop.f32.mrf.mxu0
      %v1130 = vadd.f32 %v1006, %v1129
      %1131 = vmatmul.bf16.gmra.mxu0 %v1082
      %v1132 = vpop.f32.mrf.mxu0
      %v1133 = vadd.f32 %v1009, %v1132
      %v1134 = vpop.f32.mrf.mxu0
      %v1135 = vadd.f32 %v1011, %v1134
      %1136 = vmatmul.bf16.gmra.mxu0 %v1084
      %v1137 = vpop.f32.mrf.mxu0
      %v1138 = vadd.f32 %v1014, %v1137
      %v1139 = vpop.f32.mrf.mxu0
      %v1140 = vadd.f32 %v1016, %v1139
      %1141 = vmatmul.bf16.gmra.mxu0 %v1086
      %v1142 = vpop.f32.mrf.mxu0
      %v1143 = vadd.f32 %v1019, %v1142
      %v1144 = vpop.f32.mrf.mxu0
      %v1145 = vadd.f32 %v1021, %v1144
      %1146 = vmatmul.bf16.gmra.mxu0 %v1088
      %v1147 = vpop.f32.mrf.mxu0
      %v1148 = vadd.f32 %v1024, %v1147
      %v1149 = vpop.f32.mrf.mxu0
      %v1150 = vadd.f32 %v1026, %v1149
      %1151 = vmatmul.bf16.gmra.mxu0 %v1090
      %v1152 = vpop.f32.mrf.mxu0
      %v1153 = vadd.f32 %v1029, %v1152
      %v1154 = vpop.f32.mrf.mxu0
      %v1155 = vadd.f32 %v1031, %v1154
      %1156 = vmatmul.bf16.gmra.mxu0 %v1092
      %v1157 = vpop.f32.mrf.mxu0
      %v1158 = vadd.f32 %v1034, %v1157
      %v1159 = vpop.f32.mrf.mxu0
      %v1160 = vadd.f32 %v1036, %v1159
      %1161 = vmatmul.bf16.gmra.mxu0 %v1094
      %v1162 = vpop.f32.mrf.mxu0
      %v1163 = vadd.f32 %v1039, %v1162
      %v1164 = vpop.f32.mrf.mxu0
      %v1165 = vadd.f32 %v1041, %v1164
      %1166 = vmatmul.bf16.gmra.mxu0 %v1096
      %v1167 = vpop.f32.mrf.mxu0
      %v1168 = vadd.f32 %v1044, %v1167
      %v1169 = vpop.f32.mrf.mxu0
      %v1170 = vadd.f32 %v1046, %v1169
      %1171 = vmatmul.bf16.gmra.mxu0 %v1098
      %v1172 = vpop.f32.mrf.mxu0
      %v1173 = vadd.f32 %v1049, %v1172
      %v1174 = vpop.f32.mrf.mxu0
      %v1175 = vadd.f32 %v1051, %v1174
      %1176 = vmatmul.bf16.gmra.mxu0 %v1100
      %v1177 = vpop.f32.mrf.mxu0
      %v1178 = vadd.f32 %v1054, %v1177
      %v1179 = vpop.f32.mrf.mxu0
      %v1180 = vadd.f32 %v1056, %v1179
      %1181 = vmatmul.bf16.gmra.mxu0 %v1102
      %v1182 = vpop.f32.mrf.mxu0
      %v1183 = vadd.f32 %v1059, %v1182
      %v1184 = vpop.f32.mrf.mxu0
      %v1185 = vadd.f32 %v1061, %v1184
      %1186 = vmatmul.bf16.gmra.mxu0 %v1104
      %v1187 = vpop.f32.mrf.mxu0
      %v1188 = vadd.f32 %v1064, %v1187
      %v1189 = vpop.f32.mrf.mxu0
      %v1190 = vadd.f32 %v1066, %v1189
      %1191 = vmatmul.bf16.gmra.mxu0 %v1106
      %v1192 = vpop.f32.mrf.mxu0
      %v1193 = vadd.f32 %v1069, %v1192
      %v1194 = vpop.f32.mrf.mxu0
      %v1195 = vadd.f32 %v1071, %v1194
      %1196 = vmatmul.bf16.gmra.mxu0 %v1108
      %v1197 = vpop.f32.mrf.mxu0
      %v1198 = vadd.f32 %v1074, %v1197
      %v1199 = vpop.f32.mrf.mxu0
      %v1200 = vadd.f32 %v1076, %v1199
      %1201 = vdwg.mxu0
      %vm1234 = vcmask 1046528
      %v1235 = vrot.slane %v706, 1
      %v1236 = vrot.slane %v723, 1
      %v1237 = vsel %vm1234, %v1235, %v1236
      %v1238 = vrot.slane %v707, 1
      %v1239 = vrot.slane %v724, 1
      %v1240 = vsel %vm1234, %v1238, %v1239
      %v1241 = vrot.slane %v708, 1
      %v1242 = vrot.slane %v725, 1
      %v1243 = vsel %vm1234, %v1241, %v1242
      %v1244 = vrot.slane %v709, 1
      %v1245 = vrot.slane %v726, 1
      %v1246 = vsel %vm1234, %v1244, %v1245
      %v1247 = vrot.slane %v710, 1
      %v1248 = vrot.slane %v727, 1
      %v1249 = vsel %vm1234, %v1247, %v1248
      %v1250 = vrot.slane %v711, 1
      %v1251 = vrot.slane %v728, 1
      %v1252 = vsel %vm1234, %v1250, %v1251
      %v1253 = vrot.slane %v712, 1
      %v1254 = vrot.slane %v729, 1
      %v1255 = vsel %vm1234, %v1253, %v1254
      %v1256 = vrot.slane %v713, 1
      %v1257 = vrot.slane %v730, 1
      %v1258 = vsel %vm1234, %v1256, %v1257
      %v1259 = vrot.slane %v714, 1
      %v1260 = vrot.slane %v731, 1
      %v1261 = vsel %vm1234, %v1259, %v1260
      %v1262 = vrot.slane %v715, 1
      %v1263 = vrot.slane %v732, 1
      %v1264 = vsel %vm1234, %v1262, %v1263
      %v1265 = vrot.slane %v716, 1
      %v1266 = vrot.slane %v733, 1
      %v1267 = vsel %vm1234, %v1265, %v1266
      %v1268 = vrot.slane %v717, 1
      %v1269 = vrot.slane %v734, 1
      %v1270 = vsel %vm1234, %v1268, %v1269
      %v1271 = vrot.slane %v718, 1
      %v1272 = vrot.slane %v735, 1
      %v1273 = vsel %vm1234, %v1271, %v1272
      %v1274 = vrot.slane %v719, 1
      %v1275 = vrot.slane %v736, 1
      %v1276 = vsel %vm1234, %v1274, %v1275
      %v1277 = vrot.slane %v720, 1
      %v1278 = vrot.slane %v737, 1
      %v1279 = vsel %vm1234, %v1277, %v1278
      %v1280 = vrot.slane %v721, 1
      %v1281 = vrot.slane %v738, 1
      %v1282 = vsel %vm1234, %v1280, %v1281
      %s1283 = scalar_lea.vmem %s3, 4
      %v1284 = vld [vmem:[%s1283] sm:$0x3]
      %v1286 = vsel %vm936, %v1237, 0
      %v1289 = vsel %vm936, %v1240, 0
      %v1292 = vsel %vm936, %v1243, 0
      %v1295 = vsel %vm936, %v1246, 0
      %v1298 = vsel %vm936, %v1249, 0
      %v1301 = vsel %vm936, %v1252, 0
      %v1304 = vsel %vm936, %v1255, 0
      %v1307 = vsel %vm936, %v1258, 0
      %v1310 = vsel %vm936, %v1261, 0
      %v1313 = vsel %vm936, %v1264, 0
      %v1316 = vsel %vm936, %v1267, 0
      %v1319 = vsel %vm936, %v1270, 0
      %v1322 = vsel %vm936, %v1273, 0
      %v1325 = vsel %vm936, %v1276, 0
      %v1328 = vsel %vm936, %v1279, 0
      %v1331 = vsel %vm936, %v1282, 0
      %v1334 = vsel %vm985, %v1284, 0
      %1336 = vmatpush.bf16.msra.mxu0 0
      %1337 = vmatpush.bf16.msra.mxu0 0
      %1338 = vmatpush.bf16.msra.mxu0 0
      %1339 = vmatpush.bf16.msra.mxu0 0
      %1340 = vmatpush.bf16.msra.mxu0 0
      %1341 = vmatpush.bf16.msra.mxu0 0
      %1342 = vmatpush.bf16.msra.mxu0 0
      %1343 = vmatpush.bf16.msra.mxu0 %v1334
      %1344 = vmatmul.bf16.gmra.mxu0 %v1286
      %v1345 = vpop.f32.mrf.mxu0
      %v1346 = vadd.f32 0.0, %v1345
      %v1347 = vpop.f32.mrf.mxu0
      %v1348 = vadd.f32 0.0, %v1347
      %1349 = vmatmul.bf16.gmra.mxu0 %v1289
      %v1350 = vpop.f32.mrf.mxu0
      %v1351 = vadd.f32 0.0, %v1350
      %v1352 = vpop.f32.mrf.mxu0
      %v1353 = vadd.f32 0.0, %v1352
      %1354 = vmatmul.bf16.gmra.mxu0 %v1292
      %v1355 = vpop.f32.mrf.mxu0
      %v1356 = vadd.f32 0.0, %v1355
      %v1357 = vpop.f32.mrf.mxu0
      %v1358 = vadd.f32 0.0, %v1357
      %1359 = vmatmul.bf16.gmra.mxu0 %v1295
      %v1360 = vpop.f32.mrf.mxu0
      %v1361 = vadd.f32 0.0, %v1360
      %v1362 = vpop.f32.mrf.mxu0
      %v1363 = vadd.f32 0.0, %v1362
      %1364 = vmatmul.bf16.gmra.mxu0 %v1298
      %v1365 = vpop.f32.mrf.mxu0
      %v1366 = vadd.f32 0.0, %v1365
      %v1367 = vpop.f32.mrf.mxu0
      %v1368 = vadd.f32 0.0, %v1367
      %1369 = vmatmul.bf16.gmra.mxu0 %v1301
      %v1370 = vpop.f32.mrf.mxu0
      %v1371 = vadd.f32 0.0, %v1370
      %v1372 = vpop.f32.mrf.mxu0
      %v1373 = vadd.f32 0.0, %v1372
      %1374 = vmatmul.bf16.gmra.mxu0 %v1304
      %v1375 = vpop.f32.mrf.mxu0
      %v1376 = vadd.f32 0.0, %v1375
      %v1377 = vpop.f32.mrf.mxu0
      %v1378 = vadd.f32 0.0, %v1377
      %1379 = vmatmul.bf16.gmra.mxu0 %v1307
      %v1380 = vpop.f32.mrf.mxu0
      %v1381 = vadd.f32 0.0, %v1380
      %v1382 = vpop.f32.mrf.mxu0
      %v1383 = vadd.f32 0.0, %v1382
      %1384 = vmatmul.bf16.gmra.mxu0 %v1310
      %v1385 = vpop.f32.mrf.mxu0
      %v1386 = vadd.f32 0.0, %v1385
      %v1387 = vpop.f32.mrf.mxu0
      %v1388 = vadd.f32 0.0, %v1387
      %1389 = vmatmul.bf16.gmra.mxu0 %v1313
      %v1390 = vpop.f32.mrf.mxu0
      %v1391 = vadd.f32 0.0, %v1390
      %v1392 = vpop.f32.mrf.mxu0
      %v1393 = vadd.f32 0.0, %v1392
      %1394 = vmatmul.bf16.gmra.mxu0 %v1316
      %v1395 = vpop.f32.mrf.mxu0
      %v1396 = vadd.f32 0.0, %v1395
      %v1397 = vpop.f32.mrf.mxu0
      %v1398 = vadd.f32 0.0, %v1397
      %1399 = vmatmul.bf16.gmra.mxu0 %v1319
      %v1400 = vpop.f32.mrf.mxu0
      %v1401 = vadd.f32 0.0, %v1400
      %v1402 = vpop.f32.mrf.mxu0
      %v1403 = vadd.f32 0.0, %v1402
      %1404 = vmatmul.bf16.gmra.mxu0 %v1322
      %v1405 = vpop.f32.mrf.mxu0
      %v1406 = vadd.f32 0.0, %v1405
      %v1407 = vpop.f32.mrf.mxu0
      %v1408 = vadd.f32 0.0, %v1407
      %1409 = vmatmul.bf16.gmra.mxu0 %v1325
      %v1410 = vpop.f32.mrf.mxu0
      %v1411 = vadd.f32 0.0, %v1410
      %v1412 = vpop.f32.mrf.mxu0
      %v1413 = vadd.f32 0.0, %v1412
      %1414 = vmatmul.bf16.gmra.mxu0 %v1328
      %v1415 = vpop.f32.mrf.mxu0
      %v1416 = vadd.f32 0.0, %v1415
      %v1417 = vpop.f32.mrf.mxu0
      %v1418 = vadd.f32 0.0, %v1417
      %1419 = vmatmul.bf16.gmra.mxu0 %v1331
      %v1420 = vpop.f32.mrf.mxu0
      %v1421 = vadd.f32 0.0, %v1420
      %v1422 = vpop.f32.mrf.mxu0
      %v1423 = vadd.f32 0.0, %v1422
      %1424 = vdwg.mxu0
      %v1425 = vadd.f32 %v1123, %v1346
      %v1426 = vadd.f32 %v1125, %v1348
      %v1427 = vadd.f32 %v1128, %v1351
      %v1428 = vadd.f32 %v1130, %v1353
      %v1429 = vadd.f32 %v1133, %v1356
      %v1430 = vadd.f32 %v1135, %v1358
      %v1431 = vadd.f32 %v1138, %v1361
      %v1432 = vadd.f32 %v1140, %v1363
      %v1433 = vadd.f32 %v1143, %v1366
      %v1434 = vadd.f32 %v1145, %v1368
      %v1435 = vadd.f32 %v1148, %v1371
      %v1436 = vadd.f32 %v1150, %v1373
      %v1437 = vadd.f32 %v1153, %v1376
      %v1438 = vadd.f32 %v1155, %v1378
      %v1439 = vadd.f32 %v1158, %v1381
      %v1440 = vadd.f32 %v1160, %v1383
      %v1441 = vadd.f32 %v1163, %v1386
      %v1442 = vadd.f32 %v1165, %v1388
      %v1443 = vadd.f32 %v1168, %v1391
      %v1444 = vadd.f32 %v1170, %v1393
      %v1445 = vadd.f32 %v1173, %v1396
      %v1446 = vadd.f32 %v1175, %v1398
      %v1447 = vadd.f32 %v1178, %v1401
      %v1448 = vadd.f32 %v1180, %v1403
      %v1449 = vadd.f32 %v1183, %v1406
      %v1450 = vadd.f32 %v1185, %v1408
      %v1451 = vadd.f32 %v1188, %v1411
      %v1452 = vadd.f32 %v1190, %v1413
      %v1453 = vadd.f32 %v1193, %v1416
      %v1454 = vadd.f32 %v1195, %v1418
      %v1455 = vadd.f32 %v1198, %v1421
      %v1456 = vadd.f32 %v1200, %v1423
      %s1457 = scalar_lea.vmem %s3, 6
      %v1458 = vld [vmem:[%s1457] sm:$0x3]
      %v1460 = vsel %vm936, %v722, 0
      %v1463 = vsel %vm985, %v1458, 0
      %1465 = vmatpush.bf16.msra.mxu0 0
      %1466 = vmatpush.bf16.msra.mxu0 0
      %1467 = vmatpush.bf16.msra.mxu0 0
      %1468 = vmatpush.bf16.msra.mxu0 0
      %1469 = vmatpush.bf16.msra.mxu0 0
      %1470 = vmatpush.bf16.msra.mxu0 0
      %1471 = vmatpush.bf16.msra.mxu0 0
      %1472 = vmatpush.bf16.msra.mxu0 %v1463
      %1473 = vmatmul.bf16.gmra.mxu0 %v1080
      %v1474 = vpop.f32.mrf.mxu0
      %v1475 = vadd.f32 0.0, %v1474
      %v1476 = vpop.f32.mrf.mxu0
      %v1477 = vadd.f32 0.0, %v1476
      %1478 = vmatmul.bf16.gmra.mxu0 %v1082
      %v1479 = vpop.f32.mrf.mxu0
      %v1480 = vadd.f32 0.0, %v1479
      %v1481 = vpop.f32.mrf.mxu0
      %v1482 = vadd.f32 0.0, %v1481
      %1483 = vmatmul.bf16.gmra.mxu0 %v1084
      %v1484 = vpop.f32.mrf.mxu0
      %v1485 = vadd.f32 0.0, %v1484
      %v1486 = vpop.f32.mrf.mxu0
      %v1487 = vadd.f32 0.0, %v1486
      %1488 = vmatmul.bf16.gmra.mxu0 %v1086
      %v1489 = vpop.f32.mrf.mxu0
      %v1490 = vadd.f32 0.0, %v1489
      %v1491 = vpop.f32.mrf.mxu0
      %v1492 = vadd.f32 0.0, %v1491
      %1493 = vmatmul.bf16.gmra.mxu0 %v1088
      %v1494 = vpop.f32.mrf.mxu0
      %v1495 = vadd.f32 0.0, %v1494
      %v1496 = vpop.f32.mrf.mxu0
      %v1497 = vadd.f32 0.0, %v1496
      %1498 = vmatmul.bf16.gmra.mxu0 %v1090
      %v1499 = vpop.f32.mrf.mxu0
      %v1500 = vadd.f32 0.0, %v1499
      %v1501 = vpop.f32.mrf.mxu0
      %v1502 = vadd.f32 0.0, %v1501
      %1503 = vmatmul.bf16.gmra.mxu0 %v1092
      %v1504 = vpop.f32.mrf.mxu0
      %v1505 = vadd.f32 0.0, %v1504
      %v1506 = vpop.f32.mrf.mxu0
      %v1507 = vadd.f32 0.0, %v1506
      %1508 = vmatmul.bf16.gmra.mxu0 %v1094
      %v1509 = vpop.f32.mrf.mxu0
      %v1510 = vadd.f32 0.0, %v1509
      %v1511 = vpop.f32.mrf.mxu0
      %v1512 = vadd.f32 0.0, %v1511
      %1513 = vmatmul.bf16.gmra.mxu0 %v1096
      %v1514 = vpop.f32.mrf.mxu0
      %v1515 = vadd.f32 0.0, %v1514
      %v1516 = vpop.f32.mrf.mxu0
      %v1517 = vadd.f32 0.0, %v1516
      %1518 = vmatmul.bf16.gmra.mxu0 %v1098
      %v1519 = vpop.f32.mrf.mxu0
      %v1520 = vadd.f32 0.0, %v1519
      %v1521 = vpop.f32.mrf.mxu0
      %v1522 = vadd.f32 0.0, %v1521
      %1523 = vmatmul.bf16.gmra.mxu0 %v1100
      %v1524 = vpop.f32.mrf.mxu0
      %v1525 = vadd.f32 0.0, %v1524
      %v1526 = vpop.f32.mrf.mxu0
      %v1527 = vadd.f32 0.0, %v1526
      %1528 = vmatmul.bf16.gmra.mxu0 %v1102
      %v1529 = vpop.f32.mrf.mxu0
      %v1530 = vadd.f32 0.0, %v1529
      %v1531 = vpop.f32.mrf.mxu0
      %v1532 = vadd.f32 0.0, %v1531
      %1533 = vmatmul.bf16.gmra.mxu0 %v1104
      %v1534 = vpop.f32.mrf.mxu0
      %v1535 = vadd.f32 0.0, %v1534
      %v1536 = vpop.f32.mrf.mxu0
      %v1537 = vadd.f32 0.0, %v1536
      %1538 = vmatmul.bf16.gmra.mxu0 %v1106
      %v1539 = vpop.f32.mrf.mxu0
      %v1540 = vadd.f32 0.0, %v1539
      %v1541 = vpop.f32.mrf.mxu0
      %v1542 = vadd.f32 0.0, %v1541
      %1543 = vmatmul.bf16.gmra.mxu0 %v1108
      %v1544 = vpop.f32.mrf.mxu0
      %v1545 = vadd.f32 0.0, %v1544
      %v1546 = vpop.f32.mrf.mxu0
      %v1547 = vadd.f32 0.0, %v1546
      %1548 = vmatmul.bf16.gmra.mxu0 %v1460
      %v1549 = vpop.f32.mrf.mxu0
      %v1550 = vadd.f32 0.0, %v1549
      %v1551 = vpop.f32.mrf.mxu0
      %v1552 = vadd.f32 0.0, %v1551
      %1553 = vdwg.mxu0
      %v1554 = vadd.f32 %v1425, %v1475
      %v1555 = vadd.f32 %v1426, %v1477
      %v1556 = vadd.f32 %v1427, %v1480
      %v1557 = vadd.f32 %v1428, %v1482
      %v1558 = vadd.f32 %v1429, %v1485
      %v1559 = vadd.f32 %v1430, %v1487
      %v1560 = vadd.f32 %v1431, %v1490
      %v1561 = vadd.f32 %v1432, %v1492
      %v1562 = vadd.f32 %v1433, %v1495
      %v1563 = vadd.f32 %v1434, %v1497
      %v1564 = vadd.f32 %v1435, %v1500
      %v1565 = vadd.f32 %v1436, %v1502
      %v1566 = vadd.f32 %v1437, %v1505
      %v1567 = vadd.f32 %v1438, %v1507
      %v1568 = vadd.f32 %v1439, %v1510
      %v1569 = vadd.f32 %v1440, %v1512
      %v1570 = vadd.f32 %v1441, %v1515
      %v1571 = vadd.f32 %v1442, %v1517
      %v1572 = vadd.f32 %v1443, %v1520
      %v1573 = vadd.f32 %v1444, %v1522
      %v1574 = vadd.f32 %v1445, %v1525
      %v1575 = vadd.f32 %v1446, %v1527
      %v1576 = vadd.f32 %v1447, %v1530
      %v1577 = vadd.f32 %v1448, %v1532
      %v1578 = vadd.f32 %v1449, %v1535
      %v1579 = vadd.f32 %v1450, %v1537
      %v1580 = vadd.f32 %v1451, %v1540
      %v1581 = vadd.f32 %v1452, %v1542
      %v1582 = vadd.f32 %v1453, %v1545
      %v1583 = vadd.f32 %v1454, %v1547
      %v1584 = vadd.f32 %v1455, %v1550
      %v1585 = vadd.f32 %v1456, %v1552
      %v1586 = vshrl.u32 %v722, 16
      %v1588 = vshll.u32 %v722, 16
      %v1590 = vrot.slane %v1588, 1
      %v1591 = vor.u32 %v1586, %v1590
      %v1593 = vshll.u32 %v739, 16
      %v1595 = vrot.slane %v1593, 1
      %v1596 = vsel %vm741, %v1591, %v1595
      %s1597 = scalar_lea.vmem %s3, 8
      %v1598 = vld [vmem:[%s1597] sm:$0x3]
      %v1600 = vsel %vm936, %v1596, 0
      %v1603 = vsel %vm985, %v1598, 0
      %1605 = vmatpush.bf16.msra.mxu0 0
      %1606 = vmatpush.bf16.msra.mxu0 0
      %1607 = vmatpush.bf16.msra.mxu0 0
      %1608 = vmatpush.bf16.msra.mxu0 0
      %1609 = vmatpush.bf16.msra.mxu0 0
      %1610 = vmatpush.bf16.msra.mxu0 0
      %1611 = vmatpush.bf16.msra.mxu0 0
      %1612 = vmatpush.bf16.msra.mxu0 %v1603
      %1613 = vmatmul.bf16.gmra.mxu0 %v941
      %v1614 = vpop.f32.mrf.mxu0
      %v1615 = vadd.f32 0.0, %v1614
      %v1616 = vpop.f32.mrf.mxu0
      %v1617 = vadd.f32 0.0, %v1616
      %1618 = vmatmul.bf16.gmra.mxu0 %v944
      %v1619 = vpop.f32.mrf.mxu0
      %v1620 = vadd.f32 0.0, %v1619
      %v1621 = vpop.f32.mrf.mxu0
      %v1622 = vadd.f32 0.0, %v1621
      %1623 = vmatmul.bf16.gmra.mxu0 %v947
      %v1624 = vpop.f32.mrf.mxu0
      %v1625 = vadd.f32 0.0, %v1624
      %v1626 = vpop.f32.mrf.mxu0
      %v1627 = vadd.f32 0.0, %v1626
      %1628 = vmatmul.bf16.gmra.mxu0 %v950
      %v1629 = vpop.f32.mrf.mxu0
      %v1630 = vadd.f32 0.0, %v1629
      %v1631 = vpop.f32.mrf.mxu0
      %v1632 = vadd.f32 0.0, %v1631
      %1633 = vmatmul.bf16.gmra.mxu0 %v953
      %v1634 = vpop.f32.mrf.mxu0
      %v1635 = vadd.f32 0.0, %v1634
      %v1636 = vpop.f32.mrf.mxu0
      %v1637 = vadd.f32 0.0, %v1636
      %1638 = vmatmul.bf16.gmra.mxu0 %v956
      %v1639 = vpop.f32.mrf.mxu0
      %v1640 = vadd.f32 0.0, %v1639
      %v1641 = vpop.f32.mrf.mxu0
      %v1642 = vadd.f32 0.0, %v1641
      %1643 = vmatmul.bf16.gmra.mxu0 %v959
      %v1644 = vpop.f32.mrf.mxu0
      %v1645 = vadd.f32 0.0, %v1644
      %v1646 = vpop.f32.mrf.mxu0
      %v1647 = vadd.f32 0.0, %v1646
      %1648 = vmatmul.bf16.gmra.mxu0 %v962
      %v1649 = vpop.f32.mrf.mxu0
      %v1650 = vadd.f32 0.0, %v1649
      %v1651 = vpop.f32.mrf.mxu0
      %v1652 = vadd.f32 0.0, %v1651
      %1653 = vmatmul.bf16.gmra.mxu0 %v965
      %v1654 = vpop.f32.mrf.mxu0
      %v1655 = vadd.f32 0.0, %v1654
      %v1656 = vpop.f32.mrf.mxu0
      %v1657 = vadd.f32 0.0, %v1656
      %1658 = vmatmul.bf16.gmra.mxu0 %v968
      %v1659 = vpop.f32.mrf.mxu0
      %v1660 = vadd.f32 0.0, %v1659
      %v1661 = vpop.f32.mrf.mxu0
      %v1662 = vadd.f32 0.0, %v1661
      %1663 = vmatmul.bf16.gmra.mxu0 %v971
      %v1664 = vpop.f32.mrf.mxu0
      %v1665 = vadd.f32 0.0, %v1664
      %v1666 = vpop.f32.mrf.mxu0
      %v1667 = vadd.f32 0.0, %v1666
      %1668 = vmatmul.bf16.gmra.mxu0 %v974
      %v1669 = vpop.f32.mrf.mxu0
      %v1670 = vadd.f32 0.0, %v1669
      %v1671 = vpop.f32.mrf.mxu0
      %v1672 = vadd.f32 0.0, %v1671
      %1673 = vmatmul.bf16.gmra.mxu0 %v977
      %v1674 = vpop.f32.mrf.mxu0
      %v1675 = vadd.f32 0.0, %v1674
      %v1676 = vpop.f32.mrf.mxu0
      %v1677 = vadd.f32 0.0, %v1676
      %1678 = vmatmul.bf16.gmra.mxu0 %v980
      %v1679 = vpop.f32.mrf.mxu0
      %v1680 = vadd.f32 0.0, %v1679
      %v1681 = vpop.f32.mrf.mxu0
      %v1682 = vadd.f32 0.0, %v1681
      %1683 = vmatmul.bf16.gmra.mxu0 %v983
      %v1684 = vpop.f32.mrf.mxu0
      %v1685 = vadd.f32 0.0, %v1684
      %v1686 = vpop.f32.mrf.mxu0
      %v1687 = vadd.f32 0.0, %v1686
      %1688 = vmatmul.bf16.gmra.mxu0 %v1600
      %v1689 = vpop.f32.mrf.mxu0
      %v1690 = vadd.f32 0.0, %v1689
      %v1691 = vpop.f32.mrf.mxu0
      %v1692 = vadd.f32 0.0, %v1691
      %1693 = vdwg.mxu0
      %v1694 = vadd.f32 %v1554, %v1615
      %v1695 = vadd.f32 %v1555, %v1617
      %v1696 = vadd.f32 %v1556, %v1620
      %v1697 = vadd.f32 %v1557, %v1622
      %v1698 = vadd.f32 %v1558, %v1625
      %v1699 = vadd.f32 %v1559, %v1627
      %v1700 = vadd.f32 %v1560, %v1630
      %v1701 = vadd.f32 %v1561, %v1632
      %v1702 = vadd.f32 %v1562, %v1635
      %v1703 = vadd.f32 %v1563, %v1637
      %v1704 = vadd.f32 %v1564, %v1640
      %v1705 = vadd.f32 %v1565, %v1642
      %v1706 = vadd.f32 %v1566, %v1645
      %v1707 = vadd.f32 %v1567, %v1647
      %v1708 = vadd.f32 %v1568, %v1650
      %v1709 = vadd.f32 %v1569, %v1652
      %v1710 = vadd.f32 %v1570, %v1655
      %v1711 = vadd.f32 %v1571, %v1657
      %v1712 = vadd.f32 %v1572, %v1660
      %v1713 = vadd.f32 %v1573, %v1662
      %v1714 = vadd.f32 %v1574, %v1665
      %v1715 = vadd.f32 %v1575, %v1667
      %v1716 = vadd.f32 %v1576, %v1670
      %v1717 = vadd.f32 %v1577, %v1672
      %v1718 = vadd.f32 %v1578, %v1675
      %v1719 = vadd.f32 %v1579, %v1677
      %v1720 = vadd.f32 %v1580, %v1680
      %v1721 = vadd.f32 %v1581, %v1682
      %v1722 = vadd.f32 %v1582, %v1685
      %v1723 = vadd.f32 %v1583, %v1687
      %v1724 = vadd.f32 %v1584, %v1690
      %v1725 = vadd.f32 %v1585, %v1692
      %v1728 = vrot.slane %v722, 1
      %v1729 = vrot.slane %v739, 1
      %v1730 = vsel %vm1234, %v1728, %v1729
      %s1731 = scalar_lea.vmem %s3, 10
      %v1732 = vld [vmem:[%s1731] sm:$0x3]
      %v1734 = vsel %vm936, %v1730, 0
      %v1737 = vsel %vm985, %v1732, 0
      %1739 = vmatpush.bf16.msra.mxu0 0
      %1740 = vmatpush.bf16.msra.mxu0 0
      %1741 = vmatpush.bf16.msra.mxu0 0
      %1742 = vmatpush.bf16.msra.mxu0 0
      %1743 = vmatpush.bf16.msra.mxu0 0
      %1744 = vmatpush.bf16.msra.mxu0 0
      %1745 = vmatpush.bf16.msra.mxu0 0
      %1746 = vmatpush.bf16.msra.mxu0 %v1737
      %1747 = vmatmul.bf16.gmra.mxu0 %v1289
      %v1748 = vpop.f32.mrf.mxu0
      %v1749 = vadd.f32 0.0, %v1748
      %v1750 = vpop.f32.mrf.mxu0
      %v1751 = vadd.f32 0.0, %v1750
      %1752 = vmatmul.bf16.gmra.mxu0 %v1292
      %v1753 = vpop.f32.mrf.mxu0
      %v1754 = vadd.f32 0.0, %v1753
      %v1755 = vpop.f32.mrf.mxu0
      %v1756 = vadd.f32 0.0, %v1755
      %1757 = vmatmul.bf16.gmra.mxu0 %v1295
      %v1758 = vpop.f32.mrf.mxu0
      %v1759 = vadd.f32 0.0, %v1758
      %v1760 = vpop.f32.mrf.mxu0
      %v1761 = vadd.f32 0.0, %v1760
      %1762 = vmatmul.bf16.gmra.mxu0 %v1298
      %v1763 = vpop.f32.mrf.mxu0
      %v1764 = vadd.f32 0.0, %v1763
      %v1765 = vpop.f32.mrf.mxu0
      %v1766 = vadd.f32 0.0, %v1765
      %1767 = vmatmul.bf16.gmra.mxu0 %v1301
      %v1768 = vpop.f32.mrf.mxu0
      %v1769 = vadd.f32 0.0, %v1768
      %v1770 = vpop.f32.mrf.mxu0
      %v1771 = vadd.f32 0.0, %v1770
      %1772 = vmatmul.bf16.gmra.mxu0 %v1304
      %v1773 = vpop.f32.mrf.mxu0
      %v1774 = vadd.f32 0.0, %v1773
      %v1775 = vpop.f32.mrf.mxu0
      %v1776 = vadd.f32 0.0, %v1775
      %1777 = vmatmul.bf16.gmra.mxu0 %v1307
      %v1778 = vpop.f32.mrf.mxu0
      %v1779 = vadd.f32 0.0, %v1778
      %v1780 = vpop.f32.mrf.mxu0
      %v1781 = vadd.f32 0.0, %v1780
      %1782 = vmatmul.bf16.gmra.mxu0 %v1310
      %v1783 = vpop.f32.mrf.mxu0
      %v1784 = vadd.f32 0.0, %v1783
      %v1785 = vpop.f32.mrf.mxu0
      %v1786 = vadd.f32 0.0, %v1785
      %1787 = vmatmul.bf16.gmra.mxu0 %v1313
      %v1788 = vpop.f32.mrf.mxu0
      %v1789 = vadd.f32 0.0, %v1788
      %v1790 = vpop.f32.mrf.mxu0
      %v1791 = vadd.f32 0.0, %v1790
      %1792 = vmatmul.bf16.gmra.mxu0 %v1316
      %v1793 = vpop.f32.mrf.mxu0
      %v1794 = vadd.f32 0.0, %v1793
      %v1795 = vpop.f32.mrf.mxu0
      %v1796 = vadd.f32 0.0, %v1795
      %1797 = vmatmul.bf16.gmra.mxu0 %v1319
      %v1798 = vpop.f32.mrf.mxu0
      %v1799 = vadd.f32 0.0, %v1798
      %v1800 = vpop.f32.mrf.mxu0
      %v1801 = vadd.f32 0.0, %v1800
      %1802 = vmatmul.bf16.gmra.mxu0 %v1322
      %v1803 = vpop.f32.mrf.mxu0
      %v1804 = vadd.f32 0.0, %v1803
      %v1805 = vpop.f32.mrf.mxu0
      %v1806 = vadd.f32 0.0, %v1805
      %1807 = vmatmul.bf16.gmra.mxu0 %v1325
      %v1808 = vpop.f32.mrf.mxu0
      %v1809 = vadd.f32 0.0, %v1808
      %v1810 = vpop.f32.mrf.mxu0
      %v1811 = vadd.f32 0.0, %v1810
      %1812 = vmatmul.bf16.gmra.mxu0 %v1328
      %v1813 = vpop.f32.mrf.mxu0
      %v1814 = vadd.f32 0.0, %v1813
      %v1815 = vpop.f32.mrf.mxu0
      %v1816 = vadd.f32 0.0, %v1815
      %1817 = vmatmul.bf16.gmra.mxu0 %v1331
      %v1818 = vpop.f32.mrf.mxu0
      %v1819 = vadd.f32 0.0, %v1818
      %v1820 = vpop.f32.mrf.mxu0
      %v1821 = vadd.f32 0.0, %v1820
      %1822 = vmatmul.bf16.gmra.mxu0 %v1734
      %v1823 = vpop.f32.mrf.mxu0
      %v1824 = vadd.f32 0.0, %v1823
      %v1825 = vpop.f32.mrf.mxu0
      %v1826 = vadd.f32 0.0, %v1825
      %1827 = vdwg.mxu0
      %v1828 = vadd.f32 %v1694, %v1749
      %v1829 = vadd.f32 %v1695, %v1751
      %v1830 = vadd.f32 %v1696, %v1754
      %v1831 = vadd.f32 %v1697, %v1756
      %v1832 = vadd.f32 %v1698, %v1759
      %v1833 = vadd.f32 %v1699, %v1761
      %v1834 = vadd.f32 %v1700, %v1764
      %v1835 = vadd.f32 %v1701, %v1766
      %v1836 = vadd.f32 %v1702, %v1769
      %v1837 = vadd.f32 %v1703, %v1771
      %v1838 = vadd.f32 %v1704, %v1774
      %v1839 = vadd.f32 %v1705, %v1776
      %v1840 = vadd.f32 %v1706, %v1779
      %v1841 = vadd.f32 %v1707, %v1781
      %v1842 = vadd.f32 %v1708, %v1784
      %v1843 = vadd.f32 %v1709, %v1786
      %v1844 = vadd.f32 %v1710, %v1789
      %v1845 = vadd.f32 %v1711, %v1791
      %v1846 = vadd.f32 %v1712, %v1794
      %v1847 = vadd.f32 %v1713, %v1796
      %v1848 = vadd.f32 %v1714, %v1799
      %v1849 = vadd.f32 %v1715, %v1801
      %v1850 = vadd.f32 %v1716, %v1804
      %v1851 = vadd.f32 %v1717, %v1806
      %v1852 = vadd.f32 %v1718, %v1809
      %v1853 = vadd.f32 %v1719, %v1811
      %v1854 = vadd.f32 %v1720, %v1814
      %v1855 = vadd.f32 %v1721, %v1816
      %v1856 = vadd.f32 %v1722, %v1819
      %v1857 = vadd.f32 %v1723, %v1821
      %v1858 = vadd.f32 %v1724, %v1824
      %v1859 = vadd.f32 %v1725, %v1826
      %s1860 = scalar_lea.vmem %s3, 12
      %v1861 = vld [vmem:[%s1860] sm:$0x3]
      %v1863 = vsel %vm985, %v1861, 0
      %1865 = vmatpush.bf16.msra.mxu0 0
      %1866 = vmatpush.bf16.msra.mxu0 0
      %1867 = vmatpush.bf16.msra.mxu0 0
      %1868 = vmatpush.bf16.msra.mxu0 0
      %1869 = vmatpush.bf16.msra.mxu0 0
      %1870 = vmatpush.bf16.msra.mxu0 0
      %1871 = vmatpush.bf16.msra.mxu0 0
      %1872 = vmatpush.bf16.msra.mxu0 %v1863
      %1873 = vmatmul.bf16.gmra.mxu0 %v1082
      %v1874 = vpop.f32.mrf.mxu0
      %v1875 = vadd.f32 0.0, %v1874
      %v1876 = vpop.f32.mrf.mxu0
      %v1877 = vadd.f32 0.0, %v1876
      %1878 = vmatmul.bf16.gmra.mxu0 %v1084
      %v1879 = vpop.f32.mrf.mxu0
      %v1880 = vadd.f32 0.0, %v1879
      %v1881 = vpop.f32.mrf.mxu0
      %v1882 = vadd.f32 0.0, %v1881
      %1883 = vmatmul.bf16.gmra.mxu0 %v1086
      %v1884 = vpop.f32.mrf.mxu0
      %v1885 = vadd.f32 0.0, %v1884
      %v1886 = vpop.f32.mrf.mxu0
      %v1887 = vadd.f32 0.0, %v1886
      %1888 = vmatmul.bf16.gmra.mxu0 %v1088
      %v1889 = vpop.f32.mrf.mxu0
      %v1890 = vadd.f32 0.0, %v1889
      %v1891 = vpop.f32.mrf.mxu0
      %v1892 = vadd.f32 0.0, %v1891
      %1893 = vmatmul.bf16.gmra.mxu0 %v1090
      %v1894 = vpop.f32.mrf.mxu0
      %v1895 = vadd.f32 0.0, %v1894
      %v1896 = vpop.f32.mrf.mxu0
      %v1897 = vadd.f32 0.0, %v1896
      %1898 = vmatmul.bf16.gmra.mxu0 %v1092
      %v1899 = vpop.f32.mrf.mxu0
      %v1900 = vadd.f32 0.0, %v1899
      %v1901 = vpop.f32.mrf.mxu0
      %v1902 = vadd.f32 0.0, %v1901
      %1903 = vmatmul.bf16.gmra.mxu0 %v1094
      %v1904 = vpop.f32.mrf.mxu0
      %v1905 = vadd.f32 0.0, %v1904
      %v1906 = vpop.f32.mrf.mxu0
      %v1907 = vadd.f32 0.0, %v1906
      %1908 = vmatmul.bf16.gmra.mxu0 %v1096
      %v1909 = vpop.f32.mrf.mxu0
      %v1910 = vadd.f32 0.0, %v1909
      %v1911 = vpop.f32.mrf.mxu0
      %v1912 = vadd.f32 0.0, %v1911
      %1913 = vmatmul.bf16.gmra.mxu0 %v1098
      %v1914 = vpop.f32.mrf.mxu0
      %v1915 = vadd.f32 0.0, %v1914
      %v1916 = vpop.f32.mrf.mxu0
      %v1917 = vadd.f32 0.0, %v1916
      %1918 = vmatmul.bf16.gmra.mxu0 %v1100
      %v1919 = vpop.f32.mrf.mxu0
      %v1920 = vadd.f32 0.0, %v1919
      %v1921 = vpop.f32.mrf.mxu0
      %v1922 = vadd.f32 0.0, %v1921
      %1923 = vmatmul.bf16.gmra.mxu0 %v1102
      %v1924 = vpop.f32.mrf.mxu0
      %v1925 = vadd.f32 0.0, %v1924
      %v1926 = vpop.f32.mrf.mxu0
      %v1927 = vadd.f32 0.0, %v1926
      %1928 = vmatmul.bf16.gmra.mxu0 %v1104
      %v1929 = vpop.f32.mrf.mxu0
      %v1930 = vadd.f32 0.0, %v1929
      %v1931 = vpop.f32.mrf.mxu0
      %v1932 = vadd.f32 0.0, %v1931
      %1933 = vmatmul.bf16.gmra.mxu0 %v1106
      %v1934 = vpop.f32.mrf.mxu0
      %v1935 = vadd.f32 0.0, %v1934
      %v1936 = vpop.f32.mrf.mxu0
      %v1937 = vadd.f32 0.0, %v1936
      %1938 = vmatmul.bf16.gmra.mxu0 %v1108
      %v1939 = vpop.f32.mrf.mxu0
      %v1940 = vadd.f32 0.0, %v1939
      %v1941 = vpop.f32.mrf.mxu0
      %v1942 = vadd.f32 0.0, %v1941
      %1943 = vmatmul.bf16.gmra.mxu0 %v1460
      %v1944 = vpop.f32.mrf.mxu0
      %v1945 = vadd.f32 0.0, %v1944
      %v1946 = vpop.f32.mrf.mxu0
      %v1947 = vadd.f32 0.0, %v1946
      %1948 = vmatmul.bf16.gmra.mxu0 %v1078
      %v1949 = vpop.f32.mrf.mxu0
      %v1950 = vadd.f32 0.0, %v1949
      %v1951 = vpop.f32.mrf.mxu0
      %v1952 = vadd.f32 0.0, %v1951
      %1953 = vdwg.mxu0
      %v1954 = vadd.f32 %v1828, %v1875
      %v1955 = vadd.f32 %v1829, %v1877
      %v1956 = vadd.f32 %v1830, %v1880
      %v1957 = vadd.f32 %v1831, %v1882
      %v1958 = vadd.f32 %v1832, %v1885
      %v1959 = vadd.f32 %v1833, %v1887
      %v1960 = vadd.f32 %v1834, %v1890
      %v1961 = vadd.f32 %v1835, %v1892
      %v1962 = vadd.f32 %v1836, %v1895
      %v1963 = vadd.f32 %v1837, %v1897
      %v1964 = vadd.f32 %v1838, %v1900
      %v1965 = vadd.f32 %v1839, %v1902
      %v1966 = vadd.f32 %v1840, %v1905
      %v1967 = vadd.f32 %v1841, %v1907
      %v1968 = vadd.f32 %v1842, %v1910
      %v1969 = vadd.f32 %v1843, %v1912
      %v1970 = vadd.f32 %v1844, %v1915
      %v1971 = vadd.f32 %v1845, %v1917
      %v1972 = vadd.f32 %v1846, %v1920
      %v1973 = vadd.f32 %v1847, %v1922
      %v1974 = vadd.f32 %v1848, %v1925
      %v1975 = vadd.f32 %v1849, %v1927
      %v1976 = vadd.f32 %v1850, %v1930
      %v1977 = vadd.f32 %v1851, %v1932
      %v1978 = vadd.f32 %v1852, %v1935
      %v1979 = vadd.f32 %v1853, %v1937
      %v1980 = vadd.f32 %v1854, %v1940
      %v1981 = vadd.f32 %v1855, %v1942
      %v1982 = vadd.f32 %v1856, %v1945
      %v1983 = vadd.f32 %v1857, %v1947
      %v1984 = vadd.f32 %v1858, %v1950
      %v1985 = vadd.f32 %v1859, %v1952
      %s1986 = scalar_lea.vmem %s3, 14
      %v1987 = vld [vmem:[%s1986] sm:$0x3]
      %v1989 = vsel %vm985, %v1987, 0
      %1991 = vmatpush.bf16.msra.mxu0 0
      %1992 = vmatpush.bf16.msra.mxu0 0
      %1993 = vmatpush.bf16.msra.mxu0 0
      %1994 = vmatpush.bf16.msra.mxu0 0
      %1995 = vmatpush.bf16.msra.mxu0 0
      %1996 = vmatpush.bf16.msra.mxu0 0
      %1997 = vmatpush.bf16.msra.mxu0 0
      %1998 = vmatpush.bf16.msra.mxu0 %v1989
      %1999 = vmatmul.bf16.gmra.mxu0 %v944
      %v2000 = vpop.f32.mrf.mxu0
      %v2001 = vadd.f32 0.0, %v2000
      %v2002 = vpop.f32.mrf.mxu0
      %v2003 = vadd.f32 0.0, %v2002
      %2004 = vmatmul.bf16.gmra.mxu0 %v947
      %v2005 = vpop.f32.mrf.mxu0
      %v2006 = vadd.f32 0.0, %v2005
      %v2007 = vpop.f32.mrf.mxu0
      %v2008 = vadd.f32 0.0, %v2007
      %2009 = vmatmul.bf16.gmra.mxu0 %v950
      %v2010 = vpop.f32.mrf.mxu0
      %v2011 = vadd.f32 0.0, %v2010
      %v2012 = vpop.f32.mrf.mxu0
      %v2013 = vadd.f32 0.0, %v2012
      %2014 = vmatmul.bf16.gmra.mxu0 %v953
      %v2015 = vpop.f32.mrf.mxu0
      %v2016 = vadd.f32 0.0, %v2015
      %v2017 = vpop.f32.mrf.mxu0
      %v2018 = vadd.f32 0.0, %v2017
      %2019 = vmatmul.bf16.gmra.mxu0 %v956
      %v2020 = vpop.f32.mrf.mxu0
      %v2021 = vadd.f32 0.0, %v2020
      %v2022 = vpop.f32.mrf.mxu0
      %v2023 = vadd.f32 0.0, %v2022
      %2024 = vmatmul.bf16.gmra.mxu0 %v959
      %v2025 = vpop.f32.mrf.mxu0
      %v2026 = vadd.f32 0.0, %v2025
      %v2027 = vpop.f32.mrf.mxu0
      %v2028 = vadd.f32 0.0, %v2027
      %2029 = vmatmul.bf16.gmra.mxu0 %v962
      %v2030 = vpop.f32.mrf.mxu0
      %v2031 = vadd.f32 0.0, %v2030
      %v2032 = vpop.f32.mrf.mxu0
      %v2033 = vadd.f32 0.0, %v2032
      %2034 = vmatmul.bf16.gmra.mxu0 %v965
      %v2035 = vpop.f32.mrf.mxu0
      %v2036 = vadd.f32 0.0, %v2035
      %v2037 = vpop.f32.mrf.mxu0
      %v2038 = vadd.f32 0.0, %v2037
      %2039 = vmatmul.bf16.gmra.mxu0 %v968
      %v2040 = vpop.f32.mrf.mxu0
      %v2041 = vadd.f32 0.0, %v2040
      %v2042 = vpop.f32.mrf.mxu0
      %v2043 = vadd.f32 0.0, %v2042
      %2044 = vmatmul.bf16.gmra.mxu0 %v971
      %v2045 = vpop.f32.mrf.mxu0
      %v2046 = vadd.f32 0.0, %v2045
      %v2047 = vpop.f32.mrf.mxu0
      %v2048 = vadd.f32 0.0, %v2047
      %2049 = vmatmul.bf16.gmra.mxu0 %v974
      %v2050 = vpop.f32.mrf.mxu0
      %v2051 = vadd.f32 0.0, %v2050
      %v2052 = vpop.f32.mrf.mxu0
      %v2053 = vadd.f32 0.0, %v2052
      %2054 = vmatmul.bf16.gmra.mxu0 %v977
      %v2055 = vpop.f32.mrf.mxu0
      %v2056 = vadd.f32 0.0, %v2055
      %v2057 = vpop.f32.mrf.mxu0
      %v2058 = vadd.f32 0.0, %v2057
      %2059 = vmatmul.bf16.gmra.mxu0 %v980
      %v2060 = vpop.f32.mrf.mxu0
      %v2061 = vadd.f32 0.0, %v2060
      %v2062 = vpop.f32.mrf.mxu0
      %v2063 = vadd.f32 0.0, %v2062
      %2064 = vmatmul.bf16.gmra.mxu0 %v983
      %v2065 = vpop.f32.mrf.mxu0
      %v2066 = vadd.f32 0.0, %v2065
      %v2067 = vpop.f32.mrf.mxu0
      %v2068 = vadd.f32 0.0, %v2067
      %2069 = vmatmul.bf16.gmra.mxu0 %v1600
      %v2070 = vpop.f32.mrf.mxu0
      %v2071 = vadd.f32 0.0, %v2070
      %v2072 = vpop.f32.mrf.mxu0
      %v2073 = vadd.f32 0.0, %v2072
      %2074 = vmatmul.bf16.gmra.mxu0 %v938
      %v2075 = vpop.f32.mrf.mxu0
      %v2076 = vadd.f32 0.0, %v2075
      %v2077 = vpop.f32.mrf.mxu0
      %v2078 = vadd.f32 0.0, %v2077
      %2079 = vdwg.mxu0
      %v2080 = vadd.f32 %v1954, %v2001
      %v2081 = vadd.f32 %v1955, %v2003
      %v2082 = vadd.f32 %v1956, %v2006
      %v2083 = vadd.f32 %v1957, %v2008
      %v2084 = vadd.f32 %v1958, %v2011
      %v2085 = vadd.f32 %v1959, %v2013
      %v2086 = vadd.f32 %v1960, %v2016
      %v2087 = vadd.f32 %v1961, %v2018
      %v2088 = vadd.f32 %v1962, %v2021
      %v2089 = vadd.f32 %v1963, %v2023
      %v2090 = vadd.f32 %v1964, %v2026
      %v2091 = vadd.f32 %v1965, %v2028
      %v2092 = vadd.f32 %v1966, %v2031
      %v2093 = vadd.f32 %v1967, %v2033
      %v2094 = vadd.f32 %v1968, %v2036
      %v2095 = vadd.f32 %v1969, %v2038
      %v2096 = vadd.f32 %v1970, %v2041
      %v2097 = vadd.f32 %v1971, %v2043
      %v2098 = vadd.f32 %v1972, %v2046
      %v2099 = vadd.f32 %v1973, %v2048
      %v2100 = vadd.f32 %v1974, %v2051
      %v2101 = vadd.f32 %v1975, %v2053
      %v2102 = vadd.f32 %v1976, %v2056
      %v2103 = vadd.f32 %v1977, %v2058
      %v2104 = vadd.f32 %v1978, %v2061
      %v2105 = vadd.f32 %v1979, %v2063
      %v2106 = vadd.f32 %v1980, %v2066
      %v2107 = vadd.f32 %v1981, %v2068
      %v2108 = vadd.f32 %v1982, %v2071
      %v2109 = vadd.f32 %v1983, %v2073
      %v2110 = vadd.f32 %v1984, %v2076
      %v2111 = vadd.f32 %v1985, %v2078
      %s2112 = scalar_lea.vmem %s3, 16
      %v2113 = vld [vmem:[%s2112] sm:$0x3]
      %v2115 = vsel %vm985, %v2113, 0
      %2117 = vmatpush.bf16.msra.mxu0 0
      %2118 = vmatpush.bf16.msra.mxu0 0
      %2119 = vmatpush.bf16.msra.mxu0 0
      %2120 = vmatpush.bf16.msra.mxu0 0
      %2121 = vmatpush.bf16.msra.mxu0 0
      %2122 = vmatpush.bf16.msra.mxu0 0
      %2123 = vmatpush.bf16.msra.mxu0 0
      %2124 = vmatpush.bf16.msra.mxu0 %v2115
      %2125 = vmatmul.bf16.gmra.mxu0 %v1292
      %v2126 = vpop.f32.mrf.mxu0
      %v2127 = vadd.f32 0.0, %v2126
      %v2128 = vpop.f32.mrf.mxu0
      %v2129 = vadd.f32 0.0, %v2128
      %2130 = vmatmul.bf16.gmra.mxu0 %v1295
      %v2131 = vpop.f32.mrf.mxu0
      %v2132 = vadd.f32 0.0, %v2131
      %v2133 = vpop.f32.mrf.mxu0
      %v2134 = vadd.f32 0.0, %v2133
      %2135 = vmatmul.bf16.gmra.mxu0 %v1298
      %v2136 = vpop.f32.mrf.mxu0
      %v2137 = vadd.f32 0.0, %v2136
      %v2138 = vpop.f32.mrf.mxu0
      %v2139 = vadd.f32 0.0, %v2138
      %2140 = vmatmul.bf16.gmra.mxu0 %v1301
      %v2141 = vpop.f32.mrf.mxu0
      %v2142 = vadd.f32 0.0, %v2141
      %v2143 = vpop.f32.mrf.mxu0
      %v2144 = vadd.f32 0.0, %v2143
      %2145 = vmatmul.bf16.gmra.mxu0 %v1304
      %v2146 = vpop.f32.mrf.mxu0
      %v2147 = vadd.f32 0.0, %v2146
      %v2148 = vpop.f32.mrf.mxu0
      %v2149 = vadd.f32 0.0, %v2148
      %2150 = vmatmul.bf16.gmra.mxu0 %v1307
      %v2151 = vpop.f32.mrf.mxu0
      %v2152 = vadd.f32 0.0, %v2151
      %v2153 = vpop.f32.mrf.mxu0
      %v2154 = vadd.f32 0.0, %v2153
      %2155 = vmatmul.bf16.gmra.mxu0 %v1310
      %v2156 = vpop.f32.mrf.mxu0
      %v2157 = vadd.f32 0.0, %v2156
      %v2158 = vpop.f32.mrf.mxu0
      %v2159 = vadd.f32 0.0, %v2158
      %2160 = vmatmul.bf16.gmra.mxu0 %v1313
      %v2161 = vpop.f32.mrf.mxu0
      %v2162 = vadd.f32 0.0, %v2161
      %v2163 = vpop.f32.mrf.mxu0
      %v2164 = vadd.f32 0.0, %v2163
      %2165 = vmatmul.bf16.gmra.mxu0 %v1316
      %v2166 = vpop.f32.mrf.mxu0
      %v2167 = vadd.f32 0.0, %v2166
      %v2168 = vpop.f32.mrf.mxu0
      %v2169 = vadd.f32 0.0, %v2168
      %2170 = vmatmul.bf16.gmra.mxu0 %v1319
      %v2171 = vpop.f32.mrf.mxu0
      %v2172 = vadd.f32 0.0, %v2171
      %v2173 = vpop.f32.mrf.mxu0
      %v2174 = vadd.f32 0.0, %v2173
      %2175 = vmatmul.bf16.gmra.mxu0 %v1322
      %v2176 = vpop.f32.mrf.mxu0
      %v2177 = vadd.f32 0.0, %v2176
      %v2178 = vpop.f32.mrf.mxu0
      %v2179 = vadd.f32 0.0, %v2178
      %2180 = vmatmul.bf16.gmra.mxu0 %v1325
      %v2181 = vpop.f32.mrf.mxu0
      %v2182 = vadd.f32 0.0, %v2181
      %v2183 = vpop.f32.mrf.mxu0
      %v2184 = vadd.f32 0.0, %v2183
      %2185 = vmatmul.bf16.gmra.mxu0 %v1328
      %v2186 = vpop.f32.mrf.mxu0
      %v2187 = vadd.f32 0.0, %v2186
      %v2188 = vpop.f32.mrf.mxu0
      %v2189 = vadd.f32 0.0, %v2188
      %2190 = vmatmul.bf16.gmra.mxu0 %v1331
      %v2191 = vpop.f32.mrf.mxu0
      %v2192 = vadd.f32 0.0, %v2191
      %v2193 = vpop.f32.mrf.mxu0
      %v2194 = vadd.f32 0.0, %v2193
      %2195 = vmatmul.bf16.gmra.mxu0 %v1734
      %v2196 = vpop.f32.mrf.mxu0
      %v2197 = vadd.f32 0.0, %v2196
      %v2198 = vpop.f32.mrf.mxu0
      %v2199 = vadd.f32 0.0, %v2198
      %2200 = vmatmul.bf16.gmra.mxu0 %v1286
      %v2201 = vpop.f32.mrf.mxu0
      %v2202 = vadd.f32 0.0, %v2201
      %v2203 = vpop.f32.mrf.mxu0
      %v2204 = vadd.f32 0.0, %v2203
      %2205 = vdwg.mxu0
      %v2206 = vadd.f32 %v2080, %v2127
      %v2207 = vadd.f32 %v2081, %v2129
      %v2208 = vadd.f32 %v2082, %v2132
      %v2209 = vadd.f32 %v2083, %v2134
      %v2210 = vadd.f32 %v2084, %v2137
      %v2211 = vadd.f32 %v2085, %v2139
      %v2212 = vadd.f32 %v2086, %v2142
      %v2213 = vadd.f32 %v2087, %v2144
      %v2214 = vadd.f32 %v2088, %v2147
      %v2215 = vadd.f32 %v2089, %v2149
      %v2216 = vadd.f32 %v2090, %v2152
      %v2217 = vadd.f32 %v2091, %v2154
      %v2218 = vadd.f32 %v2092, %v2157
      %v2219 = vadd.f32 %v2093, %v2159
      %v2220 = vadd.f32 %v2094, %v2162
      %v2221 = vadd.f32 %v2095, %v2164
      %v2222 = vadd.f32 %v2096, %v2167
      %v2223 = vadd.f32 %v2097, %v2169
      %v2224 = vadd.f32 %v2098, %v2172
      %v2225 = vadd.f32 %v2099, %v2174
      %v2226 = vadd.f32 %v2100, %v2177
      %v2227 = vadd.f32 %v2101, %v2179
      %v2228 = vadd.f32 %v2102, %v2182
      %v2229 = vadd.f32 %v2103, %v2184
      %v2230 = vadd.f32 %v2104, %v2187
      %v2231 = vadd.f32 %v2105, %v2189
      %v2232 = vadd.f32 %v2106, %v2192
      %v2233 = vadd.f32 %v2107, %v2194
      %v2234 = vadd.f32 %v2108, %v2197
      %v2235 = vadd.f32 %v2109, %v2199
      %v2236 = vadd.f32 %v2110, %v2202
      %v2237 = vadd.f32 %v2111, %v2204
      %v2238 = vpack.c.bf16 %v2206, %v2206
      %v2239 = vpack.c.bf16 %v2207, %v2207
      %v2240 = vpack.c.bf16 %v2208, %v2208
      %v2241 = vpack.c.bf16 %v2209, %v2209
      %v2242 = vpack.c.bf16 %v2210, %v2210
      %v2243 = vpack.c.bf16 %v2211, %v2211
      %v2244 = vpack.c.bf16 %v2212, %v2212
      %v2245 = vpack.c.bf16 %v2213, %v2213
      %v2246 = vpack.c.bf16 %v2214, %v2214
      %v2247 = vpack.c.bf16 %v2215, %v2215
      %v2248 = vpack.c.bf16 %v2216, %v2216
      %v2249 = vpack.c.bf16 %v2217, %v2217
      %v2250 = vpack.c.bf16 %v2218, %v2218
      %v2251 = vpack.c.bf16 %v2219, %v2219
      %v2252 = vpack.c.bf16 %v2220, %v2220
      %v2253 = vpack.c.bf16 %v2221, %v2221
      %v2254 = vpack.c.bf16 %v2222, %v2222
      %v2255 = vpack.c.bf16 %v2223, %v2223
      %v2256 = vpack.c.bf16 %v2224, %v2224
      %v2257 = vpack.c.bf16 %v2225, %v2225
      %v2258 = vpack.c.bf16 %v2226, %v2226
      %v2259 = vpack.c.bf16 %v2227, %v2227
      %v2260 = vpack.c.bf16 %v2228, %v2228
      %v2261 = vpack.c.bf16 %v2229, %v2229
      %v2262 = vpack.c.bf16 %v2230, %v2230
      %v2263 = vpack.c.bf16 %v2231, %v2231
      %v2264 = vpack.c.bf16 %v2232, %v2232
      %v2265 = vpack.c.bf16 %v2233, %v2233
      %v2266 = vpack.c.bf16 %v2234, %v2234
      %v2267 = vpack.c.bf16 %v2235, %v2235
      %v2268 = vpack.c.bf16 %v2236, %v2236
      %v2269 = vpack.c.bf16 %v2237, %v2237
      %vm2270 = vcmask 27648
      %2271 = vst.msk [vmem:[%s262] sm:$0xf] %vm2270, %v2238
      %2272 = vst.msk [vmem:[%s262 + $0x4] sm:$0xf] %vm2270, %v2239
      %2273 = vst.msk [vmem:[%s262 + $0x8] sm:$0xf] %vm2270, %v2240
      %2274 = vst.msk [vmem:[%s262 + $0xc] sm:$0xf] %vm2270, %v2241
      %2275 = vst.msk [vmem:[%s262 + $0x10] sm:$0xf] %vm2270, %v2242
      %2276 = vst.msk [vmem:[%s262 + $0x14] sm:$0xf] %vm2270, %v2243
      %2277 = vst.msk [vmem:[%s262 + $0x18] sm:$0xf] %vm2270, %v2244
      %2278 = vst.msk [vmem:[%s262 + $0x1c] sm:$0xf] %vm2270, %v2245
      %2279 = vst.msk [vmem:[%s262 + $0x20] sm:$0xf] %vm2270, %v2246
      %2280 = vst.msk [vmem:[%s262 + $0x24] sm:$0xf] %vm2270, %v2247
      %2281 = vst.msk [vmem:[%s262 + $0x28] sm:$0xf] %vm2270, %v2248
      %2282 = vst.msk [vmem:[%s262 + $0x2c] sm:$0xf] %vm2270, %v2249
      %2283 = vst.msk [vmem:[%s262 + $0x30] sm:$0xf] %vm2270, %v2250
      %2284 = vst.msk [vmem:[%s262 + $0x34] sm:$0xf] %vm2270, %v2251
      %2285 = vst.msk [vmem:[%s262 + $0x38] sm:$0xf] %vm2270, %v2252
      %2286 = vst.msk [vmem:[%s262 + $0x3c] sm:$0xf] %vm2270, %v2253
      %2287 = vst.msk [vmem:[%s262 + $0x40] sm:$0xf] %vm2270, %v2254
      %2288 = vst.msk [vmem:[%s262 + $0x44] sm:$0xf] %vm2270, %v2255
      %2289 = vst.msk [vmem:[%s262 + $0x48] sm:$0xf] %vm2270, %v2256
      %2290 = vst.msk [vmem:[%s262 + $0x4c] sm:$0xf] %vm2270, %v2257
      %2291 = vst.msk [vmem:[%s262 + $0x50] sm:$0xf] %vm2270, %v2258
      %2292 = vst.msk [vmem:[%s262 + $0x54] sm:$0xf] %vm2270, %v2259
      %2293 = vst.msk [vmem:[%s262 + $0x58] sm:$0xf] %vm2270, %v2260
      %2294 = vst.msk [vmem:[%s262 + $0x5c] sm:$0xf] %vm2270, %v2261
      %2295 = vst.msk [vmem:[%s262 + $0x60] sm:$0xf] %vm2270, %v2262
      %2296 = vst.msk [vmem:[%s262 + $0x64] sm:$0xf] %vm2270, %v2263
      %2297 = vst.msk [vmem:[%s262 + $0x68] sm:$0xf] %vm2270, %v2264
      %2298 = vst.msk [vmem:[%s262 + $0x6c] sm:$0xf] %vm2270, %v2265
      %2299 = vst.msk [vmem:[%s262 + $0x70] sm:$0xf] %vm2270, %v2266
      %2300 = vst.msk [vmem:[%s262 + $0x74] sm:$0xf] %vm2270, %v2267
      %2301 = vst.msk [vmem:[%s262 + $0x78] sm:$0xf] %vm2270, %v2268
      %2302 = vst.msk [vmem:[%s262 + $0x7c] sm:$0xf] %vm2270, %v2269
      %v2303 = vsel %vm936, %v2206, 0.0
      %v2304 = vsel %vm936, %v2207, 0.0
      %v2305 = vadd.f32 %v2303, %v2304
      %v2306 = vsel %vm936, %v2208, 0.0
      %v2307 = vadd.f32 %v2305, %v2306
      %v2308 = vsel %vm936, %v2209, 0.0
      %v2309 = vadd.f32 %v2307, %v2308
      %v2310 = vsel %vm936, %v2210, 0.0
      %v2311 = vadd.f32 %v2309, %v2310
      %v2312 = vsel %vm936, %v2211, 0.0
      %v2313 = vadd.f32 %v2311, %v2312
      %v2314 = vsel %vm936, %v2212, 0.0
      %v2315 = vadd.f32 %v2313, %v2314
      %v2316 = vsel %vm936, %v2213, 0.0
      %v2317 = vadd.f32 %v2315, %v2316
      %v2318 = vsel %vm936, %v2214, 0.0
      %v2319 = vadd.f32 %v2317, %v2318
      %v2320 = vsel %vm936, %v2215, 0.0
      %v2321 = vadd.f32 %v2319, %v2320
      %v2322 = vsel %vm936, %v2216, 0.0
      %v2323 = vadd.f32 %v2321, %v2322
      %v2324 = vsel %vm936, %v2217, 0.0
      %v2325 = vadd.f32 %v2323, %v2324
      %v2326 = vsel %vm936, %v2218, 0.0
      %v2327 = vadd.f32 %v2325, %v2326
      %v2328 = vsel %vm936, %v2219, 0.0
      %v2329 = vadd.f32 %v2327, %v2328
      %v2330 = vsel %vm936, %v2220, 0.0
      %v2331 = vadd.f32 %v2329, %v2330
      %v2332 = vsel %vm936, %v2221, 0.0
      %v2333 = vadd.f32 %v2331, %v2332
      %v2334 = vsel %vm936, %v2222, 0.0
      %v2335 = vadd.f32 %v2333, %v2334
      %v2336 = vsel %vm936, %v2223, 0.0
      %v2337 = vadd.f32 %v2335, %v2336
      %v2338 = vsel %vm936, %v2224, 0.0
      %v2339 = vadd.f32 %v2337, %v2338
      %v2340 = vsel %vm936, %v2225, 0.0
      %v2341 = vadd.f32 %v2339, %v2340
      %v2342 = vsel %vm936, %v2226, 0.0
      %v2343 = vadd.f32 %v2341, %v2342
      %v2344 = vsel %vm936, %v2227, 0.0
      %v2345 = vadd.f32 %v2343, %v2344
      %v2346 = vsel %vm936, %v2228, 0.0
      %v2347 = vadd.f32 %v2345, %v2346
      %v2348 = vsel %vm936, %v2229, 0.0
      %v2349 = vadd.f32 %v2347, %v2348
      %v2350 = vsel %vm936, %v2230, 0.0
      %v2351 = vadd.f32 %v2349, %v2350
      %v2352 = vsel %vm936, %v2231, 0.0
      %v2353 = vadd.f32 %v2351, %v2352
      %v2354 = vsel %vm936, %v2232, 0.0
      %v2355 = vadd.f32 %v2353, %v2354
      %v2356 = vsel %vm936, %v2233, 0.0
      %v2357 = vadd.f32 %v2355, %v2356
      %v2358 = vsel %vm936, %v2234, 0.0
      %v2359 = vadd.f32 %v2357, %v2358
      %v2360 = vsel %vm936, %v2235, 0.0
      %v2361 = vadd.f32 %v2359, %v2360
      %v2362 = vsel %vm936, %v2236, 0.0
      %v2363 = vadd.f32 %v2361, %v2362
      %v2364 = vsel %vm936, %v2237, 0.0
      %v2365 = vadd.f32 %v2363, %v2364
      %v2366 = vrot.slane %v2365, 4
      %v2367 = vadd.f32 %v2365, %v2366
      %v2368 = vrot.slane %v2367, 2
      %v2369 = vadd.f32 %v2367, %v2368
      %v2370 = vrot.slane %v2369, 1
      %v2371 = vadd.f32 %v2369, %v2370
      %vm2372 = vcmask 24576
      %2373 = vst.msk [vmem:[%s265] sm:$0x1] %vm2372, %v2371
      %v2374 = vmul.f32 %v2206, %v2206
      %v2375 = vmul.f32 %v2207, %v2207
      %v2376 = vmul.f32 %v2208, %v2208
      %v2377 = vmul.f32 %v2209, %v2209
      %v2378 = vmul.f32 %v2210, %v2210
      %v2379 = vmul.f32 %v2211, %v2211
      %v2380 = vmul.f32 %v2212, %v2212
      %v2381 = vmul.f32 %v2213, %v2213
      %v2382 = vmul.f32 %v2214, %v2214
      %v2383 = vmul.f32 %v2215, %v2215
      %v2384 = vmul.f32 %v2216, %v2216
      %v2385 = vmul.f32 %v2217, %v2217
      %v2386 = vmul.f32 %v2218, %v2218
      %v2387 = vmul.f32 %v2219, %v2219
      %v2388 = vmul.f32 %v2220, %v2220
      %v2389 = vmul.f32 %v2221, %v2221
      %v2390 = vmul.f32 %v2222, %v2222
      %v2391 = vmul.f32 %v2223, %v2223
      %v2392 = vmul.f32 %v2224, %v2224
      %v2393 = vmul.f32 %v2225, %v2225
      %v2394 = vmul.f32 %v2226, %v2226
      %v2395 = vmul.f32 %v2227, %v2227
      %v2396 = vmul.f32 %v2228, %v2228
      %v2397 = vmul.f32 %v2229, %v2229
      %v2398 = vmul.f32 %v2230, %v2230
      %v2399 = vmul.f32 %v2231, %v2231
      %v2400 = vmul.f32 %v2232, %v2232
      %v2401 = vmul.f32 %v2233, %v2233
      %v2402 = vmul.f32 %v2234, %v2234
      %v2403 = vmul.f32 %v2235, %v2235
      %v2404 = vmul.f32 %v2236, %v2236
      %v2405 = vmul.f32 %v2237, %v2237
      %v2406 = vsel %vm936, %v2374, 0.0
      %v2407 = vsel %vm936, %v2375, 0.0
      %v2408 = vadd.f32 %v2406, %v2407
      %v2409 = vsel %vm936, %v2376, 0.0
      %v2410 = vadd.f32 %v2408, %v2409
      %v2411 = vsel %vm936, %v2377, 0.0
      %v2412 = vadd.f32 %v2410, %v2411
      %v2413 = vsel %vm936, %v2378, 0.0
      %v2414 = vadd.f32 %v2412, %v2413
      %v2415 = vsel %vm936, %v2379, 0.0
      %v2416 = vadd.f32 %v2414, %v2415
      %v2417 = vsel %vm936, %v2380, 0.0
      %v2418 = vadd.f32 %v2416, %v2417
      %v2419 = vsel %vm936, %v2381, 0.0
      %v2420 = vadd.f32 %v2418, %v2419
      %v2421 = vsel %vm936, %v2382, 0.0
      %v2422 = vadd.f32 %v2420, %v2421
      %v2423 = vsel %vm936, %v2383, 0.0
      %v2424 = vadd.f32 %v2422, %v2423
      %v2425 = vsel %vm936, %v2384, 0.0
      %v2426 = vadd.f32 %v2424, %v2425
      %v2427 = vsel %vm936, %v2385, 0.0
      %v2428 = vadd.f32 %v2426, %v2427
      %v2429 = vsel %vm936, %v2386, 0.0
      %v2430 = vadd.f32 %v2428, %v2429
      %v2431 = vsel %vm936, %v2387, 0.0
      %v2432 = vadd.f32 %v2430, %v2431
      %v2433 = vsel %vm936, %v2388, 0.0
      %v2434 = vadd.f32 %v2432, %v2433
      %v2435 = vsel %vm936, %v2389, 0.0
      %v2436 = vadd.f32 %v2434, %v2435
      %v2437 = vsel %vm936, %v2390, 0.0
      %v2438 = vadd.f32 %v2436, %v2437
      %v2439 = vsel %vm936, %v2391, 0.0
      %v2440 = vadd.f32 %v2438, %v2439
      %v2441 = vsel %vm936, %v2392, 0.0
      %v2442 = vadd.f32 %v2440, %v2441
      %v2443 = vsel %vm936, %v2393, 0.0
      %v2444 = vadd.f32 %v2442, %v2443
      %v2445 = vsel %vm936, %v2394, 0.0
      %v2446 = vadd.f32 %v2444, %v2445
      %v2447 = vsel %vm936, %v2395, 0.0
      %v2448 = vadd.f32 %v2446, %v2447
      %v2449 = vsel %vm936, %v2396, 0.0
      %v2450 = vadd.f32 %v2448, %v2449
      %v2451 = vsel %vm936, %v2397, 0.0
      %v2452 = vadd.f32 %v2450, %v2451
      %v2453 = vsel %vm936, %v2398, 0.0
      %v2454 = vadd.f32 %v2452, %v2453
      %v2455 = vsel %vm936, %v2399, 0.0
      %v2456 = vadd.f32 %v2454, %v2455
      %v2457 = vsel %vm936, %v2400, 0.0
      %v2458 = vadd.f32 %v2456, %v2457
      %v2459 = vsel %vm936, %v2401, 0.0
      %v2460 = vadd.f32 %v2458, %v2459
      %v2461 = vsel %vm936, %v2402, 0.0
      %v2462 = vadd.f32 %v2460, %v2461
      %v2463 = vsel %vm936, %v2403, 0.0
      %v2464 = vadd.f32 %v2462, %v2463
      %v2465 = vsel %vm936, %v2404, 0.0
      %v2466 = vadd.f32 %v2464, %v2465
      %v2467 = vsel %vm936, %v2405, 0.0
      %v2468 = vadd.f32 %v2466, %v2467
      %v2469 = vrot.slane %v2468, 4
      %v2470 = vadd.f32 %v2468, %v2469
      %v2471 = vrot.slane %v2470, 2
      %v2472 = vadd.f32 %v2470, %v2471
      %v2473 = vrot.slane %v2472, 1
      %v2474 = vadd.f32 %v2472, %v2473
      %2475 = vst.msk [vmem:[%s268] sm:$0x1] %vm2372, %v2474
      %p2476 = scmp.lt.s32.totalorder %s18, 1
      %s2477 = scalar_select %p2476, %s18, 1
      %s2478 = smul.addr %s2477, 32
      %s2479 = smul.addr %s2478, 4
      %s2480 = scalar_lea.vmem %s4, %s2479
      %p2481 = scmp.lt.s32.totalorder %s18, 1
      %s2482 = scalar_select %p2481, %s18, 1
      %s2483 = scalar_lea.vmem %s5, %s2482
      %p2484 = scmp.lt.s32.totalorder %s18, 1
      %s2485 = scalar_select %p2484, %s18, 1
      %s2486 = scalar_lea.vmem %s6, %s2485
      // Predicated region
      $region37: #{bottleneck_forward.5} parent=35 // pred_check
        %p2487 = pneg %p125
      $region38: #{bottleneck_forward.5} parent=35 // pred_check_branch
        %2489 = sbr.rel (%p2487) target = $region40
      $region39: #{bottleneck_forward.5} parent=35 // pred_region
        _
      $region40: #{bottleneck_forward.5} parent=35 // pred_fallthru
        _
      // Predicated region
      $region41: #{bottleneck_forward.5} parent=35 // pred_check
        %p2490 = pneg %p151
      $region42: #{bottleneck_forward.5} parent=35 // pred_check_branch
        %2492 = sbr.rel (%p2490) target = $region44
      $region43: #{bottleneck_forward.5} parent=35 // pred_region
        _
      $region44: #{bottleneck_forward.5} parent=35 // pred_fallthru
        _
      // Predicated region
      $region45: #{bottleneck_forward.5} parent=35 // pred_check
        %p2493 = pneg %p177
      $region46: #{bottleneck_forward.5} parent=35 // pred_check_branch
        %2495 = sbr.rel (%p2493) target = $region48
      $region47: #{bottleneck_forward.5} parent=35 // pred_region
        _
      $region48: #{bottleneck_forward.5} parent=35 // pred_fallthru
        _
    $region36: #{bottleneck_forward.5} parent=5 // pred_fallthru
      _
    %p2496 = scmp.le.s32.totalorder 2, %s13
    // Predicated region
    $region49: #{bottleneck_forward.5} parent=5 // pred_check
      %p2497 = pneg %p2496
    $region50: #{bottleneck_forward.5} parent=5 // pred_check_branch
      %2499 = sbr.rel (%p2497) target = $region52
    $region51: #{bottleneck_forward.5} parent=5 // pred_region
      %s2500 = ssub.s32 %s13, 2
      // Predicated region
      $region53: #{bottleneck_forward.5} parent=51 // pred_check
        %p2501 = pneg %p131
      $region54: #{bottleneck_forward.5} parent=51 // pred_check_branch
        %2503 = sbr.rel (%p2501) target = $region56
      $region55: #{bottleneck_forward.5} parent=51 // pred_region
        %p2504 = scmp.lt.s32.totalorder %s19, 1
        %s2505 = scalar_select %p2504, %s19, 1
        %s2506 = smul.addr %s2505, 32
        %s2507 = smul.addr %s2506, 4
        %s2508 = scalar_lea.vmem %s4, %s2507
      $region56: #{bottleneck_forward.5} parent=51 // pred_fallthru
        _
      // Predicated region
      $region57: #{bottleneck_forward.5} parent=51 // pred_check
        %p2509 = pneg %p157
      $region58: #{bottleneck_forward.5} parent=51 // pred_check_branch
        %2511 = sbr.rel (%p2509) target = $region60
      $region59: #{bottleneck_forward.5} parent=51 // pred_region
        %p2512 = scmp.lt.s32.totalorder %s19, 1
        %s2513 = scalar_select %p2512, %s19, 1
        %s2514 = scalar_lea.vmem %s5, %s2513
      $region60: #{bottleneck_forward.5} parent=51 // pred_fallthru
        _
      // Predicated region
      $region61: #{bottleneck_forward.5} parent=51 // pred_check
        %p2515 = pneg %p183
      $region62: #{bottleneck_forward.5} parent=51 // pred_check_branch
        %2517 = sbr.rel (%p2515) target = $region64
      $region63: #{bottleneck_forward.5} parent=51 // pred_region
        %p2518 = scmp.lt.s32.totalorder %s19, 1
        %s2519 = scalar_select %p2518, %s19, 1
        %s2520 = scalar_lea.vmem %s6, %s2519
      $region64: #{bottleneck_forward.5} parent=51 // pred_fallthru
        _
    $region52: #{bottleneck_forward.5} parent=5 // pred_fallthru
      _
  $region6: #{bottleneck_forward.5} parent=0 // loop_footer
    %s17 = sadd.s32 1, %s13
  $region7: #{bottleneck_forward.5} parent=0 // loop_footer_branch
    %12 = sbr.rel target = $region3
  $region8: #{bottleneck_forward.5} parent=0 // loop_exit
    _

// kernel: bottleneck_forward.7
$region0: #{bottleneck_forward.7}
  #allocation0 [shape = 'u32[]', space=smem, size = 0x4, offset = 0x4, fixed_abs, tag = 'smem constant byte address 0x4 - core index']
  #allocation1 [shape = 'u32[72,128]{1,0:T(1,128)}', space=vmem, size = 0x9000, scoped, tag = 'internal scratch']
  %s0 = inlined_call_operand.vmem [shape: bf16[512,4], index: 0, kind: input, shape index: {}]
  %s1 = inlined_call_operand.vmem [shape: bf16[4,16], index: 1, kind: input, shape index: {}]
  %s2 = inlined_call_operand.vmem [shape: f32[1,16], index: 2, kind: input, shape index: {}]
  %s3 = inlined_call_operand.vmem [shape: bf16[512,16], index: 3, kind: input, shape index: {}]
  %s4 = inlined_call_operand.vmem [shape: f32[1,16], index: 4, kind: input, shape index: {}]
  %s5 = inlined_call_operand.vmem [shape: f32[1,16], index: 5, kind: input, shape index: {}]
  %s6 = inlined_call_operand.vmem [shape: f32[512,16], index: 6, kind: output, shape index: {}]
  %s7 = sld [smem:[#allocation0]]
  $region34: #{bottleneck_forward.7} parent=0
    _
  %s9 = ssub.s32 1, %s7
  %s10 = scalar_select 0, %s9, %s7
  // Predicated region
  $region2: #{bottleneck_forward.7} parent=0 // pred_check
    _
  $region3: #{bottleneck_forward.7} parent=0 // pred_check_branch
    %12 = sbr.rel (0) target = $region5
  $region4: #{bottleneck_forward.7} parent=0 // pred_region
    _
  $region5: #{bottleneck_forward.7} parent=0 // pred_fallthru
    _
  // Predicated region
  $region6: #{bottleneck_forward.7} parent=0 // pred_check
    _
  $region7: #{bottleneck_forward.7} parent=0 // pred_check_branch
    %14 = sbr.rel (0) target = $region9
  $region8: #{bottleneck_forward.7} parent=0 // pred_region
    _
  $region9: #{bottleneck_forward.7} parent=0 // pred_fallthru
    _
  // Predicated region
  $region10: #{bottleneck_forward.7} parent=0 // pred_check
    _
  $region11: #{bottleneck_forward.7} parent=0 // pred_check_branch
    %16 = sbr.rel (0) target = $region13
  $region12: #{bottleneck_forward.7} parent=0 // pred_region
    _
  $region13: #{bottleneck_forward.7} parent=0 // pred_fallthru
    _
  // Predicated region
  $region14: #{bottleneck_forward.7} parent=0 // pred_check
    _
  $region15: #{bottleneck_forward.7} parent=0 // pred_check_branch
    %18 = sbr.rel (0) target = $region17
  $region16: #{bottleneck_forward.7} parent=0 // pred_region
    _
  $region17: #{bottleneck_forward.7} parent=0 // pred_fallthru
    _
  // Predicated region
  $region18: #{bottleneck_forward.7} parent=0 // pred_check
    _
  $region19: #{bottleneck_forward.7} parent=0 // pred_check_branch
    %20 = sbr.rel (0) target = $region21
  $region20: #{bottleneck_forward.7} parent=0 // pred_region
    _
  $region21: #{bottleneck_forward.7} parent=0 // pred_fallthru
    _
  // Predicated region
  $region22: #{bottleneck_forward.7} parent=0 // pred_check
    _
  $region23: #{bottleneck_forward.7} parent=0 // pred_check_branch
    %22 = sbr.rel (0) target = $region25
  $region24: #{bottleneck_forward.7} parent=0 // pred_region
    _
  $region25: #{bottleneck_forward.7} parent=0 // pred_fallthru
    _
  %v24 = vld [vmem:[%s0] sm:$0xf]
  %v25 = vld [vmem:[%s0 + $0x4] sm:$0xf]
  %v26 = vld [vmem:[%s0 + $0x8] sm:$0xf]
  %v27 = vld [vmem:[%s0 + $0xc] sm:$0xf]
  %v28 = vld [vmem:[%s0 + $0x10] sm:$0xf]
  %v29 = vld [vmem:[%s0 + $0x14] sm:$0xf]
  %v30 = vld [vmem:[%s0 + $0x18] sm:$0xf]
  %v31 = vld [vmem:[%s0 + $0x1c] sm:$0xf]
  %v32 = vld [vmem:[%s0 + $0x20] sm:$0xf]
  %v33 = vld [vmem:[%s0 + $0x24] sm:$0xf]
  %v34 = vld [vmem:[%s0 + $0x28] sm:$0xf]
  %v35 = vld [vmem:[%s0 + $0x2c] sm:$0xf]
  %v36 = vld [vmem:[%s0 + $0x30] sm:$0xf]
  %v37 = vld [vmem:[%s0 + $0x34] sm:$0xf]
  %v38 = vld [vmem:[%s0 + $0x38] sm:$0xf]
  %v39 = vld [vmem:[%s0 + $0x3c] sm:$0xf]
  %v40 = vld [vmem:[%s0 + $0x40] sm:$0xf]
  %v41 = vld [vmem:[%s0 + $0x44] sm:$0xf]
  %v42 = vld [vmem:[%s0 + $0x48] sm:$0xf]
  %v43 = vld [vmem:[%s0 + $0x4c] sm:$0xf]
  %v44 = vld [vmem:[%s0 + $0x50] sm:$0xf]
  %v45 = vld [vmem:[%s0 + $0x54] sm:$0xf]
  %v46 = vld [vmem:[%s0 + $0x58] sm:$0xf]
  %v47 = vld [vmem:[%s0 + $0x5c] sm:$0xf]
  %v48 = vld [vmem:[%s0 + $0x60] sm:$0xf]
  %v49 = vld [vmem:[%s0 + $0x64] sm:$0xf]
  %v50 = vld [vmem:[%s0 + $0x68] sm:$0xf]
  %v51 = vld [vmem:[%s0 + $0x6c] sm:$0xf]
  %v52 = vld [vmem:[%s0 + $0x70] sm:$0xf]
  %v53 = vld [vmem:[%s0 + $0x74] sm:$0xf]
  %v54 = vld [vmem:[%s0 + $0x78] sm:$0xf]
  %v55 = vld [vmem:[%s0 + $0x7c] sm:$0xf]
  %v56 = vld [vmem:[%s0 + $0x80] sm:$0xf]
  %v57 = vld [vmem:[%s0 + $0x84] sm:$0xf]
  %v58 = vld [vmem:[%s0 + $0x88] sm:$0xf]
  %v59 = vld [vmem:[%s0 + $0x8c] sm:$0xf]
  %v60 = vld [vmem:[%s0 + $0x90] sm:$0xf]
  %v61 = vld [vmem:[%s0 + $0x94] sm:$0xf]
  %v62 = vld [vmem:[%s0 + $0x98] sm:$0xf]
  %v63 = vld [vmem:[%s0 + $0x9c] sm:$0xf]
  %v64 = vld [vmem:[%s0 + $0xa0] sm:$0xf]
  %v65 = vld [vmem:[%s0 + $0xa4] sm:$0xf]
  %v66 = vld [vmem:[%s0 + $0xa8] sm:$0xf]
  %v67 = vld [vmem:[%s0 + $0xac] sm:$0xf]
  %v68 = vld [vmem:[%s0 + $0xb0] sm:$0xf]
  %v69 = vld [vmem:[%s0 + $0xb4] sm:$0xf]
  %v70 = vld [vmem:[%s0 + $0xb8] sm:$0xf]
  %v71 = vld [vmem:[%s0 + $0xbc] sm:$0xf]
  %v72 = vld [vmem:[%s0 + $0xc0] sm:$0xf]
  %v73 = vld [vmem:[%s0 + $0xc4] sm:$0xf]
  %v74 = vld [vmem:[%s0 + $0xc8] sm:$0xf]
  %v75 = vld [vmem:[%s0 + $0xcc] sm:$0xf]
  %v76 = vld [vmem:[%s0 + $0xd0] sm:$0xf]
  %v77 = vld [vmem:[%s0 + $0xd4] sm:$0xf]
  %v78 = vld [vmem:[%s0 + $0xd8] sm:$0xf]
  %v79 = vld [vmem:[%s0 + $0xdc] sm:$0xf]
  %v80 = vld [vmem:[%s0 + $0xe0] sm:$0xf]
  %v81 = vld [vmem:[%s0 + $0xe4] sm:$0xf]
  %v82 = vld [vmem:[%s0 + $0xe8] sm:$0xf]
  %v83 = vld [vmem:[%s0 + $0xec] sm:$0xf]
  %v84 = vld [vmem:[%s0 + $0xf0] sm:$0xf]
  %v85 = vld [vmem:[%s0 + $0xf4] sm:$0xf]
  %v86 = vld [vmem:[%s0 + $0xf8] sm:$0xf]
  %v87 = vld [vmem:[%s0 + $0xfc] sm:$0xf]
  %v88 = vld [vmem:[%s1] sm:$0x3]
  %v89 = vld [vmem:[%s2] sm:$0x1]
  %v91 = vperm.slane %v89, 0
  %v157 = vunpack.c.l.b16 %v24
  %v158 = vunpack.c.l.b16 %v25
  %v159 = vunpack.c.l.b16 %v26
  %v160 = vunpack.c.l.b16 %v27
  %v161 = vunpack.c.l.b16 %v28
  %v162 = vunpack.c.l.b16 %v29
  %v163 = vunpack.c.l.b16 %v30
  %v164 = vunpack.c.l.b16 %v31
  %v165 = vunpack.c.l.b16 %v32
  %v166 = vunpack.c.l.b16 %v33
  %v167 = vunpack.c.l.b16 %v34
  %v168 = vunpack.c.l.b16 %v35
  %v169 = vunpack.c.l.b16 %v36
  %v170 = vunpack.c.l.b16 %v37
  %v171 = vunpack.c.l.b16 %v38
  %v172 = vunpack.c.l.b16 %v39
  %v173 = vunpack.c.l.b16 %v40
  %v174 = vunpack.c.l.b16 %v41
  %v175 = vunpack.c.l.b16 %v42
  %v176 = vunpack.c.l.b16 %v43
  %v177 = vunpack.c.l.b16 %v44
  %v178 = vunpack.c.l.b16 %v45
  %v179 = vunpack.c.l.b16 %v46
  %v180 = vunpack.c.l.b16 %v47
  %v181 = vunpack.c.l.b16 %v48
  %v182 = vunpack.c.l.b16 %v49
  %v183 = vunpack.c.l.b16 %v50
  %v184 = vunpack.c.l.b16 %v51
  %v185 = vunpack.c.l.b16 %v52
  %v186 = vunpack.c.l.b16 %v53
  %v187 = vunpack.c.l.b16 %v54
  %v188 = vunpack.c.l.b16 %v55
  %v189 = vunpack.c.l.b16 %v56
  %v190 = vunpack.c.l.b16 %v57
  %v191 = vunpack.c.l.b16 %v58
  %v192 = vunpack.c.l.b16 %v59
  %v193 = vunpack.c.l.b16 %v60
  %v194 = vunpack.c.l.b16 %v61
  %v195 = vunpack.c.l.b16 %v62
  %v196 = vunpack.c.l.b16 %v63
  %v197 = vunpack.c.l.b16 %v64
  %v198 = vunpack.c.l.b16 %v65
  %v199 = vunpack.c.l.b16 %v66
  %v200 = vunpack.c.l.b16 %v67
  %v201 = vunpack.c.l.b16 %v68
  %v202 = vunpack.c.l.b16 %v69
  %v203 = vunpack.c.l.b16 %v70
  %v204 = vunpack.c.l.b16 %v71
  %v205 = vunpack.c.l.b16 %v72
  %v206 = vunpack.c.l.b16 %v73
  %v207 = vunpack.c.l.b16 %v74
  %v208 = vunpack.c.l.b16 %v75
  %v209 = vunpack.c.l.b16 %v76
  %v210 = vunpack.c.l.b16 %v77
  %v211 = vunpack.c.l.b16 %v78
  %v212 = vunpack.c.l.b16 %v79
  %v213 = vunpack.c.l.b16 %v80
  %v214 = vunpack.c.l.b16 %v81
  %v215 = vunpack.c.l.b16 %v82
  %v216 = vunpack.c.l.b16 %v83
  %v217 = vunpack.c.l.b16 %v84
  %v218 = vunpack.c.l.b16 %v85
  %v219 = vunpack.c.l.b16 %v86
  %v220 = vunpack.c.l.b16 %v87
  %v221 = vpack.c.b16 %v158, %v157
  %v222 = vpack.c.b16 %v160, %v159
  %v223 = vpack.c.b16 %v162, %v161
  %v224 = vpack.c.b16 %v164, %v163
  %v225 = vpack.c.b16 %v166, %v165
  %v226 = vpack.c.b16 %v168, %v167
  %v227 = vpack.c.b16 %v170, %v169
  %v228 = vpack.c.b16 %v172, %v171
  %v229 = vpack.c.b16 %v174, %v173
  %v230 = vpack.c.b16 %v176, %v175
  %v231 = vpack.c.b16 %v178, %v177
  %v232 = vpack.c.b16 %v180, %v179
  %v233 = vpack.c.b16 %v182, %v181
  %v234 = vpack.c.b16 %v184, %v183
  %v235 = vpack.c.b16 %v186, %v185
  %v236 = vpack.c.b16 %v188, %v187
  %v237 = vpack.c.b16 %v190, %v189
  %v238 = vpack.c.b16 %v192, %v191
  %v239 = vpack.c.b16 %v194, %v193
  %v240 = vpack.c.b16 %v196, %v195
  %v241 = vpack.c.b16 %v198, %v197
  %v242 = vpack.c.b16 %v200, %v199
  %v243 = vpack.c.b16 %v202, %v201
  %v244 = vpack.c.b16 %v204, %v203
  %v245 = vpack.c.b16 %v206, %v205
  %v246 = vpack.c.b16 %v208, %v207
  %v247 = vpack.c.b16 %v210, %v209
  %v248 = vpack.c.b16 %v212, %v211
  %v249 = vpack.c.b16 %v214, %v213
  %v250 = vpack.c.b16 %v216, %v215
  %v251 = vpack.c.b16 %v218, %v217
  %v252 = vpack.c.b16 %v220, %v219
  %vm253 = vcmask 31744
  %v255 = vsel %vm253, %v221, 0
  %v258 = vsel %vm253, %v222, 0
  %v261 = vsel %vm253, %v223, 0
  %v264 = vsel %vm253, %v224, 0
  %v267 = vsel %vm253, %v225, 0
  %v270 = vsel %vm253, %v226, 0
  %v273 = vsel %vm253, %v227, 0
  %v276 = vsel %vm253, %v228, 0
  %v279 = vsel %vm253, %v229, 0
  %v282 = vsel %vm253, %v230, 0
  %v285 = vsel %vm253, %v231, 0
  %v288 = vsel %vm253, %v232, 0
  %v291 = vsel %vm253, %v233, 0
  %v294 = vsel %vm253, %v234, 0
  %v297 = vsel %vm253, %v235, 0
  %v300 = vsel %vm253, %v236, 0
  %v303 = vsel %vm253, %v237, 0
  %v306 = vsel %vm253, %v238, 0
  %v309 = vsel %vm253, %v239, 0
  %v312 = vsel %vm253, %v240, 0
  %v315 = vsel %vm253, %v241, 0
  %v318 = vsel %vm253, %v242, 0
  %v321 = vsel %vm253, %v243, 0
  %v324 = vsel %vm253, %v244, 0
  %v327 = vsel %vm253, %v245, 0
  %v330 = vsel %vm253, %v246, 0
  %v333 = vsel %vm253, %v247, 0
  %v336 = vsel %vm253, %v248, 0
  %v339 = vsel %vm253, %v249, 0
  %v342 = vsel %vm253, %v250, 0
  %v345 = vsel %vm253, %v251, 0
  %v348 = vsel %vm253, %v252, 0
  %vm350 = vcmask 1041408
  %v352 = vsel %vm350, %v88, 0
  %354 = vmatpush.bf16.msra.mxu0 0
  %355 = vmatpush.bf16.msra.mxu0 0
  %356 = vmatpush.bf16.msra.mxu0 0
  %357 = vmatpush.bf16.msra.mxu0 0
  %358 = vmatpush.bf16.msra.mxu0 0
  %359 = vmatpush.bf16.msra.mxu0 0
  %360 = vmatpush.bf16.msra.mxu0 0
  %361 = vmatpush.bf16.msra.mxu0 %v352
  %362 = vmatmul.bf16.gmra.mxu0 %v255
  %v363 = vpop.f32.mrf.mxu0
  %v364 = vadd.f32 %v91, %v363
  %v365 = vpop.f32.mrf.mxu0
  %v366 = vadd.f32 %v91, %v365
  %367 = vmatmul.bf16.gmra.mxu0 %v258
  %v368 = vpop.f32.mrf.mxu0
  %v369 = vadd.f32 %v91, %v368
  %v370 = vpop.f32.mrf.mxu0
  %v371 = vadd.f32 %v91, %v370
  %372 = vmatmul.bf16.gmra.mxu0 %v261
  %v373 = vpop.f32.mrf.mxu0
  %v374 = vadd.f32 %v91, %v373
  %v375 = vpop.f32.mrf.mxu0
  %v376 = vadd.f32 %v91, %v375
  %377 = vmatmul.bf16.gmra.mxu0 %v264
  %v378 = vpop.f32.mrf.mxu0
  %v379 = vadd.f32 %v91, %v378
  %v380 = vpop.f32.mrf.mxu0
  %v381 = vadd.f32 %v91, %v380
  %382 = vmatmul.bf16.gmra.mxu0 %v267
  %v383 = vpop.f32.mrf.mxu0
  %v384 = vadd.f32 %v91, %v383
  %v385 = vpop.f32.mrf.mxu0
  %v386 = vadd.f32 %v91, %v385
  %387 = vmatmul.bf16.gmra.mxu0 %v270
  %v388 = vpop.f32.mrf.mxu0
  %v389 = vadd.f32 %v91, %v388
  %v390 = vpop.f32.mrf.mxu0
  %v391 = vadd.f32 %v91, %v390
  %392 = vmatmul.bf16.gmra.mxu0 %v273
  %v393 = vpop.f32.mrf.mxu0
  %v394 = vadd.f32 %v91, %v393
  %v395 = vpop.f32.mrf.mxu0
  %v396 = vadd.f32 %v91, %v395
  %397 = vmatmul.bf16.gmra.mxu0 %v276
  %v398 = vpop.f32.mrf.mxu0
  %v399 = vadd.f32 %v91, %v398
  %v400 = vpop.f32.mrf.mxu0
  %v401 = vadd.f32 %v91, %v400
  %402 = vmatmul.bf16.gmra.mxu0 %v279
  %v403 = vpop.f32.mrf.mxu0
  %v404 = vadd.f32 %v91, %v403
  %v405 = vpop.f32.mrf.mxu0
  %v406 = vadd.f32 %v91, %v405
  %407 = vmatmul.bf16.gmra.mxu0 %v282
  %v408 = vpop.f32.mrf.mxu0
  %v409 = vadd.f32 %v91, %v408
  %v410 = vpop.f32.mrf.mxu0
  %v411 = vadd.f32 %v91, %v410
  %412 = vmatmul.bf16.gmra.mxu0 %v285
  %v413 = vpop.f32.mrf.mxu0
  %v414 = vadd.f32 %v91, %v413
  %v415 = vpop.f32.mrf.mxu0
  %v416 = vadd.f32 %v91, %v415
  %417 = vmatmul.bf16.gmra.mxu0 %v288
  %v418 = vpop.f32.mrf.mxu0
  %v419 = vadd.f32 %v91, %v418
  %v420 = vpop.f32.mrf.mxu0
  %v421 = vadd.f32 %v91, %v420
  %422 = vmatmul.bf16.gmra.mxu0 %v291
  %v423 = vpop.f32.mrf.mxu0
  %v424 = vadd.f32 %v91, %v423
  %v425 = vpop.f32.mrf.mxu0
  %v426 = vadd.f32 %v91, %v425
  %427 = vmatmul.bf16.gmra.mxu0 %v294
  %v428 = vpop.f32.mrf.mxu0
  %v429 = vadd.f32 %v91, %v428
  %v430 = vpop.f32.mrf.mxu0
  %v431 = vadd.f32 %v91, %v430
  %432 = vmatmul.bf16.gmra.mxu0 %v297
  %v433 = vpop.f32.mrf.mxu0
  %v434 = vadd.f32 %v91, %v433
  %v435 = vpop.f32.mrf.mxu0
  %v436 = vadd.f32 %v91, %v435
  %437 = vmatmul.bf16.gmra.mxu0 %v300
  %v438 = vpop.f32.mrf.mxu0
  %v439 = vadd.f32 %v91, %v438
  %v440 = vpop.f32.mrf.mxu0
  %v441 = vadd.f32 %v91, %v440
  %442 = vmatmul.bf16.gmra.mxu0 %v303
  %v443 = vpop.f32.mrf.mxu0
  %v444 = vadd.f32 %v91, %v443
  %v445 = vpop.f32.mrf.mxu0
  %v446 = vadd.f32 %v91, %v445
  %447 = vmatmul.bf16.gmra.mxu0 %v306
  %v448 = vpop.f32.mrf.mxu0
  %v449 = vadd.f32 %v91, %v448
  %v450 = vpop.f32.mrf.mxu0
  %v451 = vadd.f32 %v91, %v450
  %452 = vmatmul.bf16.gmra.mxu0 %v309
  %v453 = vpop.f32.mrf.mxu0
  %v454 = vadd.f32 %v91, %v453
  %v455 = vpop.f32.mrf.mxu0
  %v456 = vadd.f32 %v91, %v455
  %457 = vmatmul.bf16.gmra.mxu0 %v312
  %v458 = vpop.f32.mrf.mxu0
  %v459 = vadd.f32 %v91, %v458
  %v460 = vpop.f32.mrf.mxu0
  %v461 = vadd.f32 %v91, %v460
  %462 = vmatmul.bf16.gmra.mxu0 %v315
  %v463 = vpop.f32.mrf.mxu0
  %v464 = vadd.f32 %v91, %v463
  %v465 = vpop.f32.mrf.mxu0
  %v466 = vadd.f32 %v91, %v465
  %467 = vmatmul.bf16.gmra.mxu0 %v318
  %v468 = vpop.f32.mrf.mxu0
  %v469 = vadd.f32 %v91, %v468
  %v470 = vpop.f32.mrf.mxu0
  %v471 = vadd.f32 %v91, %v470
  %472 = vmatmul.bf16.gmra.mxu0 %v321
  %v473 = vpop.f32.mrf.mxu0
  %v474 = vadd.f32 %v91, %v473
  %v475 = vpop.f32.mrf.mxu0
  %v476 = vadd.f32 %v91, %v475
  %477 = vmatmul.bf16.gmra.mxu0 %v324
  %v478 = vpop.f32.mrf.mxu0
  %v479 = vadd.f32 %v91, %v478
  %v480 = vpop.f32.mrf.mxu0
  %v481 = vadd.f32 %v91, %v480
  %482 = vmatmul.bf16.gmra.mxu0 %v327
  %v483 = vpop.f32.mrf.mxu0
  %v484 = vadd.f32 %v91, %v483
  %v485 = vpop.f32.mrf.mxu0
  %v486 = vadd.f32 %v91, %v485
  %487 = vmatmul.bf16.gmra.mxu0 %v330
  %v488 = vpop.f32.mrf.mxu0
  %v489 = vadd.f32 %v91, %v488
  %v490 = vpop.f32.mrf.mxu0
  %v491 = vadd.f32 %v91, %v490
  %492 = vmatmul.bf16.gmra.mxu0 %v333
  %v493 = vpop.f32.mrf.mxu0
  %v494 = vadd.f32 %v91, %v493
  %v495 = vpop.f32.mrf.mxu0
  %v496 = vadd.f32 %v91, %v495
  %497 = vmatmul.bf16.gmra.mxu0 %v336
  %v498 = vpop.f32.mrf.mxu0
  %v499 = vadd.f32 %v91, %v498
  %v500 = vpop.f32.mrf.mxu0
  %v501 = vadd.f32 %v91, %v500
  %502 = vmatmul.bf16.gmra.mxu0 %v339
  %v503 = vpop.f32.mrf.mxu0
  %v504 = vadd.f32 %v91, %v503
  %v505 = vpop.f32.mrf.mxu0
  %v506 = vadd.f32 %v91, %v505
  %507 = vmatmul.bf16.gmra.mxu0 %v342
  %v508 = vpop.f32.mrf.mxu0
  %v509 = vadd.f32 %v91, %v508
  %v510 = vpop.f32.mrf.mxu0
  %v511 = vadd.f32 %v91, %v510
  %512 = vmatmul.bf16.gmra.mxu0 %v345
  %v513 = vpop.f32.mrf.mxu0
  %v514 = vadd.f32 %v91, %v513
  %v515 = vpop.f32.mrf.mxu0
  %v516 = vadd.f32 %v91, %v515
  %517 = vmatmul.bf16.gmra.mxu0 %v348
  %v518 = vpop.f32.mrf.mxu0
  %v519 = vadd.f32 %v91, %v518
  %v520 = vpop.f32.mrf.mxu0
  %v521 = vadd.f32 %v91, %v520
  %522 = vdwg.mxu0
  %v523 = vld [vmem:[%s3] sm:$0xf]
  %v524 = vld [vmem:[%s3 + $0x4] sm:$0xf]
  %v525 = vld [vmem:[%s3 + $0x8] sm:$0xf]
  %v526 = vld [vmem:[%s3 + $0xc] sm:$0xf]
  %v527 = vld [vmem:[%s3 + $0x10] sm:$0xf]
  %v528 = vld [vmem:[%s3 + $0x14] sm:$0xf]
  %v529 = vld [vmem:[%s3 + $0x18] sm:$0xf]
  %v530 = vld [vmem:[%s3 + $0x1c] sm:$0xf]
  %v531 = vld [vmem:[%s3 + $0x20] sm:$0xf]
  %v532 = vld [vmem:[%s3 + $0x24] sm:$0xf]
  %v533 = vld [vmem:[%s3 + $0x28] sm:$0xf]
  %v534 = vld [vmem:[%s3 + $0x2c] sm:$0xf]
  %v535 = vld [vmem:[%s3 + $0x30] sm:$0xf]
  %v536 = vld [vmem:[%s3 + $0x34] sm:$0xf]
  %v537 = vld [vmem:[%s3 + $0x38] sm:$0xf]
  %v538 = vld [vmem:[%s3 + $0x3c] sm:$0xf]
  %v539 = vld [vmem:[%s3 + $0x40] sm:$0xf]
  %v540 = vld [vmem:[%s3 + $0x44] sm:$0xf]
  %v541 = vld [vmem:[%s3 + $0x48] sm:$0xf]
  %v542 = vld [vmem:[%s3 + $0x4c] sm:$0xf]
  %v543 = vld [vmem:[%s3 + $0x50] sm:$0xf]
  %v544 = vld [vmem:[%s3 + $0x54] sm:$0xf]
  %v545 = vld [vmem:[%s3 + $0x58] sm:$0xf]
  %v546 = vld [vmem:[%s3 + $0x5c] sm:$0xf]
  %v547 = vld [vmem:[%s3 + $0x60] sm:$0xf]
  %v548 = vld [vmem:[%s3 + $0x64] sm:$0xf]
  %v549 = vld [vmem:[%s3 + $0x68] sm:$0xf]
  %v550 = vld [vmem:[%s3 + $0x6c] sm:$0xf]
  %v551 = vld [vmem:[%s3 + $0x70] sm:$0xf]
  %v552 = vld [vmem:[%s3 + $0x74] sm:$0xf]
  %v553 = vld [vmem:[%s3 + $0x78] sm:$0xf]
  %v554 = vld [vmem:[%s3 + $0x7c] sm:$0xf]
  %v555 = vld [vmem:[%s3 + $0x80] sm:$0xf]
  %v556 = vld [vmem:[%s3 + $0x84] sm:$0xf]
  %v557 = vld [vmem:[%s3 + $0x88] sm:$0xf]
  %v558 = vld [vmem:[%s3 + $0x8c] sm:$0xf]
  %v559 = vld [vmem:[%s3 + $0x90] sm:$0xf]
  %v560 = vld [vmem:[%s3 + $0x94] sm:$0xf]
  %v561 = vld [vmem:[%s3 + $0x98] sm:$0xf]
  %v562 = vld [vmem:[%s3 + $0x9c] sm:$0xf]
  %v563 = vld [vmem:[%s3 + $0xa0] sm:$0xf]
  %v564 = vld [vmem:[%s3 + $0xa4] sm:$0xf]
  %v565 = vld [vmem:[%s3 + $0xa8] sm:$0xf]
  %v566 = vld [vmem:[%s3 + $0xac] sm:$0xf]
  %v567 = vld [vmem:[%s3 + $0xb0] sm:$0xf]
  %v568 = vld [vmem:[%s3 + $0xb4] sm:$0xf]
  %v569 = vld [vmem:[%s3 + $0xb8] sm:$0xf]
  %v570 = vld [vmem:[%s3 + $0xbc] sm:$0xf]
  %v571 = vld [vmem:[%s3 + $0xc0] sm:$0xf]
  %v572 = vld [vmem:[%s3 + $0xc4] sm:$0xf]
  %v573 = vld [vmem:[%s3 + $0xc8] sm:$0xf]
  %v574 = vld [vmem:[%s3 + $0xcc] sm:$0xf]
  %v575 = vld [vmem:[%s3 + $0xd0] sm:$0xf]
  %v576 = vld [vmem:[%s3 + $0xd4] sm:$0xf]
  %v577 = vld [vmem:[%s3 + $0xd8] sm:$0xf]
  %v578 = vld [vmem:[%s3 + $0xdc] sm:$0xf]
  %v579 = vld [vmem:[%s3 + $0xe0] sm:$0xf]
  %v580 = vld [vmem:[%s3 + $0xe4] sm:$0xf]
  %v581 = vld [vmem:[%s3 + $0xe8] sm:$0xf]
  %v582 = vld [vmem:[%s3 + $0xec] sm:$0xf]
  %v583 = vld [vmem:[%s3 + $0xf0] sm:$0xf]
  %v584 = vld [vmem:[%s3 + $0xf4] sm:$0xf]
  %v585 = vld [vmem:[%s3 + $0xf8] sm:$0xf]
  %v586 = vld [vmem:[%s3 + $0xfc] sm:$0xf]
  %v587 = vunpack.c.l.bf16 %v523
  %v588 = vunpack.c.l.bf16 %v524
  %v589 = vunpack.c.l.bf16 %v525
  %v590 = vunpack.c.l.bf16 %v526
  %v591 = vunpack.c.l.bf16 %v527
  %v592 = vunpack.c.l.bf16 %v528
  %v593 = vunpack.c.l.bf16 %v529
  %v594 = vunpack.c.l.bf16 %v530
  %v595 = vunpack.c.l.bf16 %v531
  %v596 = vunpack.c.l.bf16 %v532
  %v597 = vunpack.c.l.bf16 %v533
  %v598 = vunpack.c.l.bf16 %v534
  %v599 = vunpack.c.l.bf16 %v535
  %v600 = vunpack.c.l.bf16 %v536
  %v601 = vunpack.c.l.bf16 %v537
  %v602 = vunpack.c.l.bf16 %v538
  %v603 = vunpack.c.l.bf16 %v539
  %v604 = vunpack.c.l.bf16 %v540
  %v605 = vunpack.c.l.bf16 %v541
  %v606 = vunpack.c.l.bf16 %v542
  %v607 = vunpack.c.l.bf16 %v543
  %v608 = vunpack.c.l.bf16 %v544
  %v609 = vunpack.c.l.bf16 %v545
  %v610 = vunpack.c.l.bf16 %v546
  %v611 = vunpack.c.l.bf16 %v547
  %v612 = vunpack.c.l.bf16 %v548
  %v613 = vunpack.c.l.bf16 %v549
  %v614 = vunpack.c.l.bf16 %v550
  %v615 = vunpack.c.l.bf16 %v551
  %v616 = vunpack.c.l.bf16 %v552
  %v617 = vunpack.c.l.bf16 %v553
  %v618 = vunpack.c.l.bf16 %v554
  %v619 = vunpack.c.l.bf16 %v555
  %v620 = vunpack.c.l.bf16 %v556
  %v621 = vunpack.c.l.bf16 %v557
  %v622 = vunpack.c.l.bf16 %v558
  %v623 = vunpack.c.l.bf16 %v559
  %v624 = vunpack.c.l.bf16 %v560
  %v625 = vunpack.c.l.bf16 %v561
  %v626 = vunpack.c.l.bf16 %v562
  %v627 = vunpack.c.l.bf16 %v563
  %v628 = vunpack.c.l.bf16 %v564
  %v629 = vunpack.c.l.bf16 %v565
  %v630 = vunpack.c.l.bf16 %v566
  %v631 = vunpack.c.l.bf16 %v567
  %v632 = vunpack.c.l.bf16 %v568
  %v633 = vunpack.c.l.bf16 %v569
  %v634 = vunpack.c.l.bf16 %v570
  %v635 = vunpack.c.l.bf16 %v571
  %v636 = vunpack.c.l.bf16 %v572
  %v637 = vunpack.c.l.bf16 %v573
  %v638 = vunpack.c.l.bf16 %v574
  %v639 = vunpack.c.l.bf16 %v575
  %v640 = vunpack.c.l.bf16 %v576
  %v641 = vunpack.c.l.bf16 %v577
  %v642 = vunpack.c.l.bf16 %v578
  %v643 = vunpack.c.l.bf16 %v579
  %v644 = vunpack.c.l.bf16 %v580
  %v645 = vunpack.c.l.bf16 %v581
  %v646 = vunpack.c.l.bf16 %v582
  %v647 = vunpack.c.l.bf16 %v583
  %v648 = vunpack.c.l.bf16 %v584
  %v649 = vunpack.c.l.bf16 %v585
  %v650 = vunpack.c.l.bf16 %v586
  %v651 = vld [vmem:[%s4] sm:$0x1]
  %v653 = vperm.slane %v651, 0
  %v655 = vmul.f32 %v587, %v653
  %v656 = vmul.f32 %v588, %v653
  %v657 = vmul.f32 %v589, %v653
  %v658 = vmul.f32 %v590, %v653
  %v659 = vmul.f32 %v591, %v653
  %v660 = vmul.f32 %v592, %v653
  %v661 = vmul.f32 %v593, %v653
  %v662 = vmul.f32 %v594, %v653
  %v663 = vmul.f32 %v595, %v653
  %v664 = vmul.f32 %v596, %v653
  %v665 = vmul.f32 %v597, %v653
  %v666 = vmul.f32 %v598, %v653
  %v667 = vmul.f32 %v599, %v653
  %v668 = vmul.f32 %v600, %v653
  %v669 = vmul.f32 %v601, %v653
  %v670 = vmul.f32 %v602, %v653
  %v671 = vmul.f32 %v603, %v653
  %v672 = vmul.f32 %v604, %v653
  %v673 = vmul.f32 %v605, %v653
  %v674 = vmul.f32 %v606, %v653
  %v675 = vmul.f32 %v607, %v653
  %v676 = vmul.f32 %v608, %v653
  %v677 = vmul.f32 %v609, %v653
  %v678 = vmul.f32 %v610, %v653
  %v679 = vmul.f32 %v611, %v653
  %v680 = vmul.f32 %v612, %v653
  %v681 = vmul.f32 %v613, %v653
  %v682 = vmul.f32 %v614, %v653
  %v683 = vmul.f32 %v615, %v653
  %v684 = vmul.f32 %v616, %v653
  %v685 = vmul.f32 %v617, %v653
  %v686 = vmul.f32 %v618, %v653
  %v687 = vmul.f32 %v619, %v653
  %v688 = vmul.f32 %v620, %v653
  %v689 = vmul.f32 %v621, %v653
  %v690 = vmul.f32 %v622, %v653
  %v691 = vmul.f32 %v623, %v653
  %v692 = vmul.f32 %v624, %v653
  %v693 = vmul.f32 %v625, %v653
  %v694 = vmul.f32 %v626, %v653
  %v695 = vmul.f32 %v627, %v653
  %v696 = vmul.f32 %v628, %v653
  %v697 = vmul.f32 %v629, %v653
  %v698 = vmul.f32 %v630, %v653
  %v699 = vmul.f32 %v631, %v653
  %v700 = vmul.f32 %v632, %v653
  %v701 = vmul.f32 %v633, %v653
  %v702 = vmul.f32 %v634, %v653
  %v703 = vmul.f32 %v635, %v653
  %v704 = vmul.f32 %v636, %v653
  %v705 = vmul.f32 %v637, %v653
  %v706 = vmul.f32 %v638, %v653
  %v707 = vmul.f32 %v639, %v653
  %v708 = vmul.f32 %v640, %v653
  %v709 = vmul.f32 %v641, %v653
  %v710 = vmul.f32 %v642, %v653
  %v711 = vmul.f32 %v643, %v653
  %v712 = vmul.f32 %v644, %v653
  %v713 = vmul.f32 %v645, %v653
  %v714 = vmul.f32 %v646, %v653
  %v715 = vmul.f32 %v647, %v653
  %v716 = vmul.f32 %v648, %v653
  %v717 = vmul.f32 %v649, %v653
  %v718 = vmul.f32 %v650, %v653
  %v719 = vadd.f32 %v364, %v655
  %v720 = vadd.f32 %v366, %v656
  %v721 = vadd.f32 %v369, %v657
  %v722 = vadd.f32 %v371, %v658
  %v723 = vadd.f32 %v374, %v659
  %v724 = vadd.f32 %v376, %v660
  %v725 = vadd.f32 %v379, %v661
  %v726 = vadd.f32 %v381, %v662
  %v727 = vadd.f32 %v384, %v663
  %v728 = vadd.f32 %v386, %v664
  %v729 = vadd.f32 %v389, %v665
  %v730 = vadd.f32 %v391, %v666
  %v731 = vadd.f32 %v394, %v667
  %v732 = vadd.f32 %v396, %v668
  %v733 = vadd.f32 %v399, %v669
  %v734 = vadd.f32 %v401, %v670
  %v735 = vadd.f32 %v404, %v671
  %v736 = vadd.f32 %v406, %v672
  %v737 = vadd.f32 %v409, %v673
  %v738 = vadd.f32 %v411, %v674
  %v739 = vadd.f32 %v414, %v675
  %v740 = vadd.f32 %v416, %v676
  %v741 = vadd.f32 %v419, %v677
  %v742 = vadd.f32 %v421, %v678
  %v743 = vadd.f32 %v424, %v679
  %v744 = vadd.f32 %v426, %v680
  %v745 = vadd.f32 %v429, %v681
  %v746 = vadd.f32 %v431, %v682
  %v747 = vadd.f32 %v434, %v683
  %v748 = vadd.f32 %v436, %v684
  %v749 = vadd.f32 %v439, %v685
  %v750 = vadd.f32 %v441, %v686
  %v751 = vadd.f32 %v444, %v687
  %v752 = vadd.f32 %v446, %v688
  %v753 = vadd.f32 %v449, %v689
  %v754 = vadd.f32 %v451, %v690
  %v755 = vadd.f32 %v454, %v691
  %v756 = vadd.f32 %v456, %v692
  %v757 = vadd.f32 %v459, %v693
  %v758 = vadd.f32 %v461, %v694
  %v759 = vadd.f32 %v464, %v695
  %v760 = vadd.f32 %v466, %v696
  %v761 = vadd.f32 %v469, %v697
  %v762 = vadd.f32 %v471, %v698
  %v763 = vadd.f32 %v474, %v699
  %v764 = vadd.f32 %v476, %v700
  %v765 = vadd.f32 %v479, %v701
  %v766 = vadd.f32 %v481, %v702
  %v767 = vadd.f32 %v484, %v703
  %v768 = vadd.f32 %v486, %v704
  %v769 = vadd.f32 %v489, %v705
  %v770 = vadd.f32 %v491, %v706
  %v771 = vadd.f32 %v494, %v707
  %v772 = vadd.f32 %v496, %v708
  %v773 = vadd.f32 %v499, %v709
  %v774 = vadd.f32 %v501, %v710
  %v775 = vadd.f32 %v504, %v711
  %v776 = vadd.f32 %v506, %v712
  %v777 = vadd.f32 %v509, %v713
  %v778 = vadd.f32 %v511, %v714
  %v779 = vadd.f32 %v514, %v715
  %v780 = vadd.f32 %v516, %v716
  %v781 = vadd.f32 %v519, %v717
  %v782 = vadd.f32 %v521, %v718
  %v783 = vld [vmem:[%s5] sm:$0x1]
  %v785 = vperm.slane %v783, 0
  %v787 = vadd.f32 %v719, %v785
  %v788 = vadd.f32 %v720, %v785
  %v789 = vadd.f32 %v721, %v785
  %v790 = vadd.f32 %v722, %v785
  %v791 = vadd.f32 %v723, %v785
  %v792 = vadd.f32 %v724, %v785
  %v793 = vadd.f32 %v725, %v785
  %v794 = vadd.f32 %v726, %v785
  %v795 = vadd.f32 %v727, %v785
  %v796 = vadd.f32 %v728, %v785
  %v797 = vadd.f32 %v729, %v785
  %v798 = vadd.f32 %v730, %v785
  %v799 = vadd.f32 %v731, %v785
  %v800 = vadd.f32 %v732, %v785
  %v801 = vadd.f32 %v733, %v785
  %v802 = vadd.f32 %v734, %v785
  %v803 = vadd.f32 %v735, %v785
  %v804 = vadd.f32 %v736, %v785
  %v805 = vadd.f32 %v737, %v785
  %v806 = vadd.f32 %v738, %v785
  %v807 = vadd.f32 %v739, %v785
  %v808 = vadd.f32 %v740, %v785
  %v809 = vadd.f32 %v741, %v785
  %v810 = vadd.f32 %v742, %v785
  %v811 = vadd.f32 %v743, %v785
  %v812 = vadd.f32 %v744, %v785
  %v813 = vadd.f32 %v745, %v785
  %v814 = vadd.f32 %v746, %v785
  %v815 = vadd.f32 %v747, %v785
  %v816 = vadd.f32 %v748, %v785
  %v817 = vadd.f32 %v749, %v785
  %v818 = vadd.f32 %v750, %v785
  %v819 = vadd.f32 %v751, %v785
  %v820 = vadd.f32 %v752, %v785
  %v821 = vadd.f32 %v753, %v785
  %v822 = vadd.f32 %v754, %v785
  %v823 = vadd.f32 %v755, %v785
  %v824 = vadd.f32 %v756, %v785
  %v825 = vadd.f32 %v757, %v785
  %v826 = vadd.f32 %v758, %v785
  %v827 = vadd.f32 %v759, %v785
  %v828 = vadd.f32 %v760, %v785
  %v829 = vadd.f32 %v761, %v785
  %v830 = vadd.f32 %v762, %v785
  %v831 = vadd.f32 %v763, %v785
  %v832 = vadd.f32 %v764, %v785
  %v833 = vadd.f32 %v765, %v785
  %v834 = vadd.f32 %v766, %v785
  %v835 = vadd.f32 %v767, %v785
  %v836 = vadd.f32 %v768, %v785
  %v837 = vadd.f32 %v769, %v785
  %v838 = vadd.f32 %v770, %v785
  %v839 = vadd.f32 %v771, %v785
  %v840 = vadd.f32 %v772, %v785
  %v841 = vadd.f32 %v773, %v785
  %v842 = vadd.f32 %v774, %v785
  %v843 = vadd.f32 %v775, %v785
  %v844 = vadd.f32 %v776, %v785
  %v845 = vadd.f32 %v777, %v785
  %v846 = vadd.f32 %v778, %v785
  %v847 = vadd.f32 %v779, %v785
  %v848 = vadd.f32 %v780, %v785
  %v849 = vadd.f32 %v781, %v785
  %v850 = vadd.f32 %v782, %v785
  %v851 = vmax.f32 %v787, 0.0
  %v852 = vmax.f32 %v788, 0.0
  %v853 = vmax.f32 %v789, 0.0
  %v854 = vmax.f32 %v790, 0.0
  %v855 = vmax.f32 %v791, 0.0
  %v856 = vmax.f32 %v792, 0.0
  %v857 = vmax.f32 %v793, 0.0
  %v858 = vmax.f32 %v794, 0.0
  %v859 = vmax.f32 %v795, 0.0
  %v860 = vmax.f32 %v796, 0.0
  %v861 = vmax.f32 %v797, 0.0
  %v862 = vmax.f32 %v798, 0.0
  %v863 = vmax.f32 %v799, 0.0
  %v864 = vmax.f32 %v800, 0.0
  %v865 = vmax.f32 %v801, 0.0
  %v866 = vmax.f32 %v802, 0.0
  %v867 = vmax.f32 %v803, 0.0
  %v868 = vmax.f32 %v804, 0.0
  %v869 = vmax.f32 %v805, 0.0
  %v870 = vmax.f32 %v806, 0.0
  %v871 = vmax.f32 %v807, 0.0
  %v872 = vmax.f32 %v808, 0.0
  %v873 = vmax.f32 %v809, 0.0
  %v874 = vmax.f32 %v810, 0.0
  %v875 = vmax.f32 %v811, 0.0
  %v876 = vmax.f32 %v812, 0.0
  %v877 = vmax.f32 %v813, 0.0
  %v878 = vmax.f32 %v814, 0.0
  %v879 = vmax.f32 %v815, 0.0
  %v880 = vmax.f32 %v816, 0.0
  %v881 = vmax.f32 %v817, 0.0
  %v882 = vmax.f32 %v818, 0.0
  %v883 = vmax.f32 %v819, 0.0
  %v884 = vmax.f32 %v820, 0.0
  %v885 = vmax.f32 %v821, 0.0
  %v886 = vmax.f32 %v822, 0.0
  %v887 = vmax.f32 %v823, 0.0
  %v888 = vmax.f32 %v824, 0.0
  %v889 = vmax.f32 %v825, 0.0
  %v890 = vmax.f32 %v826, 0.0
  %v891 = vmax.f32 %v827, 0.0
  %v892 = vmax.f32 %v828, 0.0
  %v893 = vmax.f32 %v829, 0.0
  %v894 = vmax.f32 %v830, 0.0
  %v895 = vmax.f32 %v831, 0.0
  %v896 = vmax.f32 %v832, 0.0
  %v897 = vmax.f32 %v833, 0.0
  %v898 = vmax.f32 %v834, 0.0
  %v899 = vmax.f32 %v835, 0.0
  %v900 = vmax.f32 %v836, 0.0
  %v901 = vmax.f32 %v837, 0.0
  %v902 = vmax.f32 %v838, 0.0
  %v903 = vmax.f32 %v839, 0.0
  %v904 = vmax.f32 %v840, 0.0
  %v905 = vmax.f32 %v841, 0.0
  %v906 = vmax.f32 %v842, 0.0
  %v907 = vmax.f32 %v843, 0.0
  %v908 = vmax.f32 %v844, 0.0
  %v909 = vmax.f32 %v845, 0.0
  %v910 = vmax.f32 %v846, 0.0
  %v911 = vmax.f32 %v847, 0.0
  %v912 = vmax.f32 %v848, 0.0
  %v913 = vmax.f32 %v849, 0.0
  %v914 = vmax.f32 %v850, 0.0
  %vm915 = vcmask 130048
  %916 = vst.msk [vmem:[%s6] sm:$0xff] %vm915, %v851
  %917 = vst.msk [vmem:[%s6 + $0x8] sm:$0xff] %vm915, %v852
  %918 = vst.msk [vmem:[%s6 + $0x10] sm:$0xff] %vm915, %v853
  %919 = vst.msk [vmem:[%s6 + $0x18] sm:$0xff] %vm915, %v854
  %920 = vst.msk [vmem:[%s6 + $0x20] sm:$0xff] %vm915, %v855
  %921 = vst.msk [vmem:[%s6 + $0x28] sm:$0xff] %vm915, %v856
  %922 = vst.msk [vmem:[%s6 + $0x30] sm:$0xff] %vm915, %v857
  %923 = vst.msk [vmem:[%s6 + $0x38] sm:$0xff] %vm915, %v858
  %924 = vst.msk [vmem:[%s6 + $0x40] sm:$0xff] %vm915, %v859
  %925 = vst.msk [vmem:[%s6 + $0x48] sm:$0xff] %vm915, %v860
  %926 = vst.msk [vmem:[%s6 + $0x50] sm:$0xff] %vm915, %v861
  %927 = vst.msk [vmem:[%s6 + $0x58] sm:$0xff] %vm915, %v862
  %928 = vst.msk [vmem:[%s6 + $0x60] sm:$0xff] %vm915, %v863
  %929 = vst.msk [vmem:[%s6 + $0x68] sm:$0xff] %vm915, %v864
  %930 = vst.msk [vmem:[%s6 + $0x70] sm:$0xff] %vm915, %v865
  %931 = vst.msk [vmem:[%s6 + $0x78] sm:$0xff] %vm915, %v866
  %932 = vst.msk [vmem:[%s6 + $0x80] sm:$0xff] %vm915, %v867
  %933 = vst.msk [vmem:[%s6 + $0x88] sm:$0xff] %vm915, %v868
  %934 = vst.msk [vmem:[%s6 + $0x90] sm:$0xff] %vm915, %v869
  %935 = vst.msk [vmem:[%s6 + $0x98] sm:$0xff] %vm915, %v870
  %936 = vst.msk [vmem:[%s6 + $0xa0] sm:$0xff] %vm915, %v871
  %937 = vst.msk [vmem:[%s6 + $0xa8] sm:$0xff] %vm915, %v872
  %938 = vst.msk [vmem:[%s6 + $0xb0] sm:$0xff] %vm915, %v873
  %939 = vst.msk [vmem:[%s6 + $0xb8] sm:$0xff] %vm915, %v874
  %940 = vst.msk [vmem:[%s6 + $0xc0] sm:$0xff] %vm915, %v875
  %941 = vst.msk [vmem:[%s6 + $0xc8] sm:$0xff] %vm915, %v876
  %942 = vst.msk [vmem:[%s6 + $0xd0] sm:$0xff] %vm915, %v877
  %943 = vst.msk [vmem:[%s6 + $0xd8] sm:$0xff] %vm915, %v878
  %944 = vst.msk [vmem:[%s6 + $0xe0] sm:$0xff] %vm915, %v879
  %945 = vst.msk [vmem:[%s6 + $0xe8] sm:$0xff] %vm915, %v880
  %946 = vst.msk [vmem:[%s6 + $0xf0] sm:$0xff] %vm915, %v881
  %947 = vst.msk [vmem:[%s6 + $0xf8] sm:$0xff] %vm915, %v882
  %948 = vst.msk [vmem:[%s6 + $0x100] sm:$0xff] %vm915, %v883
  %949 = vst.msk [vmem:[%s6 + $0x108] sm:$0xff] %vm915, %v884
  %950 = vst.msk [vmem:[%s6 + $0x110] sm:$0xff] %vm915, %v885
  %951 = vst.msk [vmem:[%s6 + $0x118] sm:$0xff] %vm915, %v886
  %952 = vst.msk [vmem:[%s6 + $0x120] sm:$0xff] %vm915, %v887
  %953 = vst.msk [vmem:[%s6 + $0x128] sm:$0xff] %vm915, %v888
  %954 = vst.msk [vmem:[%s6 + $0x130] sm:$0xff] %vm915, %v889
  %955 = vst.msk [vmem:[%s6 + $0x138] sm:$0xff] %vm915, %v890
  %956 = vst.msk [vmem:[%s6 + $0x140] sm:$0xff] %vm915, %v891
  %957 = vst.msk [vmem:[%s6 + $0x148] sm:$0xff] %vm915, %v892
  %958 = vst.msk [vmem:[%s6 + $0x150] sm:$0xff] %vm915, %v893
  %959 = vst.msk [vmem:[%s6 + $0x158] sm:$0xff] %vm915, %v894
  %960 = vst.msk [vmem:[%s6 + $0x160] sm:$0xff] %vm915, %v895
  %961 = vst.msk [vmem:[%s6 + $0x168] sm:$0xff] %vm915, %v896
  %962 = vst.msk [vmem:[%s6 + $0x170] sm:$0xff] %vm915, %v897
  %963 = vst.msk [vmem:[%s6 + $0x178] sm:$0xff] %vm915, %v898
  %964 = vst.msk [vmem:[%s6 + $0x180] sm:$0xff] %vm915, %v899
  %965 = vst.msk [vmem:[%s6 + $0x188] sm:$0xff] %vm915, %v900
  %966 = vst.msk [vmem:[%s6 + $0x190] sm:$0xff] %vm915, %v901
  %967 = vst.msk [vmem:[%s6 + $0x198] sm:$0xff] %vm915, %v902
  %968 = vst.msk [vmem:[%s6 + $0x1a0] sm:$0xff] %vm915, %v903
  %969 = vst.msk [vmem:[%s6 + $0x1a8] sm:$0xff] %vm915, %v904
  %970 = vst.msk [vmem:[%s6 + $0x1b0] sm:$0xff] %vm915, %v905
  %971 = vst.msk [vmem:[%s6 + $0x1b8] sm:$0xff] %vm915, %v906
  %972 = vst.msk [vmem:[%s6 + $0x1c0] sm:$0xff] %vm915, %v907
  %973 = vst.msk [vmem:[%s6 + $0x1c8] sm:$0xff] %vm915, %v908
  %974 = vst.msk [vmem:[%s6 + $0x1d0] sm:$0xff] %vm915, %v909
  %975 = vst.msk [vmem:[%s6 + $0x1d8] sm:$0xff] %vm915, %v910
  %976 = vst.msk [vmem:[%s6 + $0x1e0] sm:$0xff] %vm915, %v911
  %977 = vst.msk [vmem:[%s6 + $0x1e8] sm:$0xff] %vm915, %v912
  %978 = vst.msk [vmem:[%s6 + $0x1f0] sm:$0xff] %vm915, %v913
  %979 = vst.msk [vmem:[%s6 + $0x1f8] sm:$0xff] %vm915, %v914
  // Predicated region
  $region26: #{bottleneck_forward.7} parent=0 // pred_check
    _
  $region27: #{bottleneck_forward.7} parent=0 // pred_check_branch
    %981 = sbr.rel (0) target = $region29
  $region28: #{bottleneck_forward.7} parent=0 // pred_region
    _
  $region29: #{bottleneck_forward.7} parent=0 // pred_fallthru
    _
  // Predicated region
  $region30: #{bottleneck_forward.7} parent=0 // pred_check
    _
  $region31: #{bottleneck_forward.7} parent=0 // pred_check_branch
    %983 = sbr.rel (0) target = $region33
  $region32: #{bottleneck_forward.7} parent=0 // pred_region
    _
  $region33: #{bottleneck_forward.7} parent=0 // pred_fallthru
    _

</llo_original>
